<compile_context>
chip_gen: v7x
topology: tpu7x:2x2x1
jax: 0.10.0
libtpu: 0.0.40
codegen_flags: <defaults>
</compile_context>

<pallas_src>
import functools

import jax
import jax.numpy as jnp
from jax.experimental import pallas as pl
from jax.experimental.pallas import tpu as pltpu


_VMEM = pl.BlockSpec(memory_space=pltpu.MemorySpace.VMEM)


# ---------------------------------------------------------------------------
# The single fused Pallas kernel
# ---------------------------------------------------------------------------

def _fused_vae_kernel(
    # data
    meg_ref, vid_ref, beh_ref, eps_ref,
    # MEG encoder: Linear(in,H) ReLU, then Linear(H,24) pre-split into
    # shared (H,16) and specific (H,8) columns
    me1w, me1b, me2sw, me2sb, me2pw, me2pb,
    # Video encoder
    ve1w, ve1b, ve2sw, ve2sb, ve2pw, ve2pb,
    # Behavioral encoder
    be1w, be1b, be2sw, be2sb, be2pw, be2pb,
    # shared encoder: Linear(3S,2S) pre-split by modality rows, ReLU, Linear(2S,S)
    s1mw, s1vw, s1bw, s1b, s2w, s2b,
    # modality-specific encoders: Linear(P,P) ReLU (dropout = identity)
    msw, msb, vsw, vsb, bsw, bsb,
    # fc_mu pre-split over combined = [shared | meg_sp | vid_sp | beh_sp]
    mu_sw, mu_mw, mu_vw, mu_bw, mu_b,
    # fc_logvar pre-split the same way
    lv_sw, lv_mw, lv_vw, lv_bw, lv_b,
    # decoders: Linear(L,H) ReLU Linear(H,out)
    md1w, md1b, md2w, md2b,
    vd1w, vd1b, vd2w, vd2b,
    bd1w, bd1b, bd2w, bd2b,
    # outputs
    meg_out, vid_out, beh_out, mu_out, logvar_out, z_out,
):
    def dot(x, w_ref):
        return jnp.dot(x, w_ref[...], preferred_element_type=jnp.float32)

    def relu(x):
        return jnp.maximum(x, 0.0)

    # --- modality encoders: flatten -> Linear -> ReLU -> Linear (split heads) ---
    meg_h = relu(dot(meg_ref[...], me1w) + me1b[...])
    meg_sh = dot(meg_h, me2sw) + me2sb[...]          # shared part of meg features
    meg_sp = dot(meg_h, me2pw) + me2pb[...]          # specific part

    vid_h = relu(dot(vid_ref[...], ve1w) + ve1b[...])
    vid_sh = dot(vid_h, ve2sw) + ve2sb[...]
    vid_sp = dot(vid_h, ve2pw) + ve2pb[...]

    beh_h = relu(dot(beh_ref[...], be1w) + be1b[...])
    beh_sh = dot(beh_h, be2sw) + be2sb[...]
    beh_sp = dot(beh_h, be2pw) + be2pb[...]

    # --- shared encoder: concat([meg_sh, vid_sh, beh_sh]) @ W1 done as a sum
    #     of per-modality partial matmuls (weights pre-split by rows) ---
    sh_h = relu(dot(meg_sh, s1mw) + dot(vid_sh, s1vw) + dot(beh_sh, s1bw)
                + s1b[...])
    shared_latent = dot(sh_h, s2w) + s2b[...]

    # --- modality-specific encoders (ReLU, dropout = identity / eval mode) ---
    meg_spec = relu(dot(meg_sp, msw) + msb[...])
    vid_spec = relu(dot(vid_sp, vsw) + vsb[...])
    beh_spec = relu(dot(beh_sp, bsw) + bsb[...])

    # --- heads on combined = [shared | meg_spec | vid_spec | beh_spec],
    #     again as partial-sum matmuls (no in-kernel concat) ---
    mu = (dot(shared_latent, mu_sw) + dot(meg_spec, mu_mw)
          + dot(vid_spec, mu_vw) + dot(beh_spec, mu_bw) + mu_b[...])
    logvar = (dot(shared_latent, lv_sw) + dot(meg_spec, lv_mw)
              + dot(vid_spec, lv_vw) + dot(beh_spec, lv_bw) + lv_b[...])

    # --- reparameterize: z = mu + eps * exp(0.5 * logvar)  (exp on EUP) ---
    z = mu + eps_ref[...] * jnp.exp(0.5 * logvar)

    mu_out[...] = mu
    logvar_out[...] = logvar
    z_out[...] = z

    # --- decoders: Linear -> ReLU -> Linear, all on in-VMEM z ---
    meg_out[...] = dot(relu(dot(z, md1w) + md1b[...]), md2w) + md2b[...]
    vid_out[...] = dot(relu(dot(z, vd1w) + vd1b[...]), vd2w) + vd2b[...]
    beh_out[...] = dot(relu(dot(z, bd1w) + bd1b[...]), bd2w) + bd2b[...]


# ---------------------------------------------------------------------------
# Parameter construction (deterministic, synthetic) and kernel-layout prep
# ---------------------------------------------------------------------------

def _dense_params(key, fan_in, fan_out):
    kw, kb = jax.random.split(key)
    scale = 1.0 / jnp.sqrt(jnp.float32(fan_in))
    w = jax.random.uniform(kw, (fan_in, fan_out), jnp.float32, -scale, scale)
    b = jax.random.uniform(kb, (fan_out,), jnp.float32, -scale, scale)
    return {"w": w, "b": b}


def init_params(key, meg_flat, video_flat, behavioral_dim,
                latent_dim, shared_dim, spec_dim, enc_hidden=64, dec_hidden=64):
    out_dim = shared_dim + spec_dim
    keys = jax.random.split(key, 20)
    p = {}
    # encoders (flatten -> Linear -> ReLU -> Linear)
    p["meg_enc1"] = _dense_params(keys[0], meg_flat, enc_hidden)
    p["meg_enc2"] = _dense_params(keys[1], enc_hidden, out_dim)
    p["vid_enc1"] = _dense_params(keys[2], video_flat, enc_hidden)
    p["vid_enc2"] = _dense_params(keys[3], enc_hidden, out_dim)
    p["beh_enc1"] = _dense_params(keys[4], behavioral_dim, enc_hidden)
    p["beh_enc2"] = _dense_params(keys[5], enc_hidden, out_dim)
    # shared encoder: Linear(3S, 2S) ReLU Dropout Linear(2S, S)
    p["shared1"] = _dense_params(keys[6], shared_dim * 3, shared_dim * 2)
    p["shared2"] = _dense_params(keys[7], shared_dim * 2, shared_dim)
    # modality-specific encoders: Linear(P, P) ReLU Dropout
    p["meg_spec"] = _dense_params(keys[8], spec_dim, spec_dim)
    p["vid_spec"] = _dense_params(keys[9], spec_dim, spec_dim)
    p["beh_spec"] = _dense_params(keys[10], spec_dim, spec_dim)
    # heads
    comb = shared_dim + spec_dim * 3
    p["fc_mu"] = _dense_params(keys[11], comb, latent_dim)
    p["fc_logvar"] = _dense_params(keys[12], comb, latent_dim)
    # decoders (Linear -> ReLU -> Linear -> reshape)
    p["meg_dec1"] = _dense_params(keys[13], latent_dim, dec_hidden)
    p["meg_dec2"] = _dense_params(keys[14], dec_hidden, meg_flat)
    p["vid_dec1"] = _dense_params(keys[15], latent_dim, dec_hidden)
    p["vid_dec2"] = _dense_params(keys[16], dec_hidden, video_flat)
    p["beh_dec1"] = _dense_params(keys[17], latent_dim, dec_hidden)
    p["beh_dec2"] = _dense_params(keys[18], dec_hidden, behavioral_dim)
    return p


def prepare_params(p, shared_dim, spec_dim):
    """Pre-split weights so the kernel never slices/concats along the lane dim.

    Done once on tiny host-side arrays; zero runtime cost.
    """
    S, P = shared_dim, spec_dim

    def b2(x):
        return x.reshape(1, -1)

    flat = []
    # modality encoders: enc1 + enc2 split into shared / specific columns
    for name in ("meg", "vid", "beh"):
        e1, e2 = p[f"{name}_enc1"], p[f"{name}_enc2"]
        flat += [e1["w"], b2(e1["b"]),
                 e2["w"][:, :S], b2(e2["b"][:S]),
                 e2["w"][:, S:S + P], b2(e2["b"][S:S + P])]
    # shared encoder: first layer split by modality rows
    s1, s2 = p["shared1"], p["shared2"]
    flat += [s1["w"][0:S], s1["w"][S:2 * S], s1["w"][2 * S:3 * S], b2(s1["b"]),
             s2["w"], b2(s2["b"])]
    # modality-specific encoders
    for name in ("meg", "vid", "beh"):
        sp = p[f"{name}_spec"]
        flat += [sp["w"], b2(sp["b"])]
    # fc_mu / fc_logvar split over combined = [shared(S) | meg(P) | vid(P) | beh(P)]
    for head in ("fc_mu", "fc_logvar"):
        w, b = p[head]["w"], p[head]["b"]
        flat += [w[0:S], w[S:S + P], w[S + P:S + 2 * P], w[S + 2 * P:S + 3 * P],
                 b2(b)]
    # decoders
    for name in ("meg", "vid", "beh"):
        d1, d2 = p[f"{name}_dec1"], p[f"{name}_dec2"]
        flat += [d1["w"], b2(d1["b"]), d2["w"], b2(d2["b"])]
    return tuple(flat)


# ---------------------------------------------------------------------------
# Forward pass wrapper (one pallas_call, everything resident in VMEM)
# ---------------------------------------------------------------------------

def multimodal_vae_forward(flat_params, meg, video, behavioral, eps):
    B = meg.shape[0]
    meg_shape, video_shape = meg.shape, video.shape
    meg_flat = meg.reshape(B, -1)
    video_flat = video.reshape(B, -1)
    meg_f, vid_f = meg_flat.shape[1], video_flat.shape[1]
    beh_d, lat_d = behavioral.shape[1], eps.shape[1]

    out_shape = (
        jax.ShapeDtypeStruct((B, meg_f), jnp.float32),   # meg reconstruction (flat)
        jax.ShapeDtypeStruct((B, vid_f), jnp.float32),   # video reconstruction (flat)
        jax.ShapeDtypeStruct((B, beh_d), jnp.float32),   # behavioral reconstruction
        jax.ShapeDtypeStruct((B, lat_d), jnp.float32),   # mu
        jax.ShapeDtypeStruct((B, lat_d), jnp.float32),   # logvar
        jax.ShapeDtypeStruct((B, lat_d), jnp.float32),   # z
    )
    n_inputs = 4 + len(flat_params)

    meg_rec, vid_rec, beh_rec, mu, logvar, z = pl.pallas_call(
        _fused_vae_kernel,
        out_shape=out_shape,
        in_specs=[_VMEM] * n_inputs,
        out_specs=tuple([_VMEM] * len(out_shape)),
    )(meg_flat, video_flat, behavioral, eps, *flat_params)

    return {
        "reconstructions": {
            "meg": meg_rec.reshape(meg_shape),
            "video": vid_rec.reshape(video_shape),
            "behavioral": beh_rec,
        },
        "mu": mu,
        "logvar": logvar,
        "z": z,
    }


# ---------------------------------------------------------------------------
# Pure-JAX reference (for correctness check)
# ---------------------------------------------------------------------------

def reference_forward(p, meg, video, behavioral, eps, shared_dim, spec_dim):
    B = meg.shape[0]
    hp = jax.lax.Precision.HIGHEST

    def lin(x, d):
        return jnp.dot(x, d["w"], precision=hp) + d["b"]

    def mlp(x, d1, d2):
        return lin(jnp.maximum(lin(x, d1), 0.0), d2)

    S, P = shared_dim, spec_dim
    meg_feat = mlp(meg.reshape(B, -1), p["meg_enc1"], p["meg_enc2"])
    vid_feat = mlp(video.reshape(B, -1), p["vid_enc1"], p["vid_enc2"])
    beh_feat = mlp(behavioral, p["beh_enc1"], p["beh_enc2"])
    shared_in = jnp.concatenate(
        [meg_feat[:, :S], vid_feat[:, :S], beh_feat[:, :S]], axis=1)
    shared_latent = mlp(shared_in, p["shared1"], p["shared2"])
    meg_sp = jnp.maximum(lin(meg_feat[:, S:S + P], p["meg_spec"]), 0.0)
    vid_sp = jnp.maximum(lin(vid_feat[:, S:S + P], p["vid_spec"]), 0.0)
    beh_sp = jnp.maximum(lin(beh_feat[:, S:S + P], p["beh_spec"]), 0.0)
    combined = jnp.concatenate([shared_latent, meg_sp, vid_sp, beh_sp], axis=1)
    mu = lin(combined, p["fc_mu"])
    logvar = lin(combined, p["fc_logvar"])
    z = mu + eps * jnp.exp(0.5 * logvar)
    return {
        "reconstructions": {
            "meg": mlp(z, p["meg_dec1"], p["meg_dec2"]).reshape(meg.shape),
            "video": mlp(z, p["vid_dec1"], p["vid_dec2"]).reshape(video.shape),
            "behavioral": mlp(z, p["beh_dec1"], p["beh_dec2"]),
        },
        "mu": mu,
        "logvar": logvar,
        "z": z,
    }


# ---------------------------------------------------------------------------
# Main
# ---------------------------------------------------------------------------

if __name__ == "__main__":
    B = 2
    meg_shape = (B, 4, 8, 16)       # (batch, channels, sensors, time)
    video_shape = (B, 3, 4, 8, 8)   # (batch, channels, frames, H, W)
    behavioral_dim = 16
    latent_dim = 32
    shared_dim = 16
    spec_dim = 8

    meg_flat = 4 * 8 * 16
    video_flat = 3 * 4 * 8 * 8

    key = jax.random.PRNGKey(0)
    k_meg, k_vid, k_beh, k_eps, k_params = jax.random.split(key, 5)

    meg = jax.random.normal(k_meg, meg_shape, jnp.float32)
    video = jax.random.normal(k_vid, video_shape, jnp.float32)
    behavioral = jax.random.normal(k_beh, (B, behavioral_dim), jnp.float32)
    eps = jax.random.normal(k_eps, (B, latent_dim), jnp.float32)

    params = init_params(k_params, meg_flat, video_flat, behavioral_dim,
                         latent_dim, shared_dim, spec_dim)
    flat_params = prepare_params(params, shared_dim, spec_dim)

    fwd = jax.jit(multimodal_vae_forward)
    out = fwd(flat_params, meg, video, behavioral, eps)
    jax.block_until_ready(out)

    # sanity shape checks
    assert out["mu"].shape == (B, latent_dim)
    assert out["logvar"].shape == (B, latent_dim)
    assert out["z"].shape == (B, latent_dim)
    assert out["reconstructions"]["meg"].shape == meg_shape
    assert out["reconstructions"]["video"].shape == video_shape
    assert out["reconstructions"]["behavioral"].shape == (B, behavioral_dim)

    # numerical check against a pure-JAX reference of the same math
    ref = reference_forward(params, meg, video, behavioral, eps,
                            shared_dim, spec_dim)
    for o, r in zip(jax.tree_util.tree_leaves(out),
                    jax.tree_util.tree_leaves(ref)):
        assert o.shape == r.shape
        assert jnp.allclose(o, r, atol=2e-2, rtol=2e-2), \
            float(jnp.max(jnp.abs(o - r)))

    print("KERNEL_OK")
</pallas_src>

<mosaic_0001>
module attributes {stable_mosaic.version = 11 : i64} {
  func.func @_fused_vae_kernel(%arg0: memref<2x512xf32, #tpu.memory_space<vmem>>, %arg1: memref<2x768xf32, #tpu.memory_space<vmem>>, %arg2: memref<2x16xf32, #tpu.memory_space<vmem>>, %arg3: memref<2x32xf32, #tpu.memory_space<vmem>>, %arg4: memref<512x64xf32, #tpu.memory_space<vmem>>, %arg5: memref<1x64xf32, #tpu.memory_space<vmem>>, %arg6: memref<64x16xf32, #tpu.memory_space<vmem>>, %arg7: memref<1x16xf32, #tpu.memory_space<vmem>>, %arg8: memref<64x8xf32, #tpu.memory_space<vmem>>, %arg9: memref<1x8xf32, #tpu.memory_space<vmem>>, %arg10: memref<768x64xf32, #tpu.memory_space<vmem>>, %arg11: memref<1x64xf32, #tpu.memory_space<vmem>>, %arg12: memref<64x16xf32, #tpu.memory_space<vmem>>, %arg13: memref<1x16xf32, #tpu.memory_space<vmem>>, %arg14: memref<64x8xf32, #tpu.memory_space<vmem>>, %arg15: memref<1x8xf32, #tpu.memory_space<vmem>>, %arg16: memref<16x64xf32, #tpu.memory_space<vmem>>, %arg17: memref<1x64xf32, #tpu.memory_space<vmem>>, %arg18: memref<64x16xf32, #tpu.memory_space<vmem>>, %arg19: memref<1x16xf32, #tpu.memory_space<vmem>>, %arg20: memref<64x8xf32, #tpu.memory_space<vmem>>, %arg21: memref<1x8xf32, #tpu.memory_space<vmem>>, %arg22: memref<16x32xf32, #tpu.memory_space<vmem>>, %arg23: memref<16x32xf32, #tpu.memory_space<vmem>>, %arg24: memref<16x32xf32, #tpu.memory_space<vmem>>, %arg25: memref<1x32xf32, #tpu.memory_space<vmem>>, %arg26: memref<32x16xf32, #tpu.memory_space<vmem>>, %arg27: memref<1x16xf32, #tpu.memory_space<vmem>>, %arg28: memref<8x8xf32, #tpu.memory_space<vmem>>, %arg29: memref<1x8xf32, #tpu.memory_space<vmem>>, %arg30: memref<8x8xf32, #tpu.memory_space<vmem>>, %arg31: memref<1x8xf32, #tpu.memory_space<vmem>>, %arg32: memref<8x8xf32, #tpu.memory_space<vmem>>, %arg33: memref<1x8xf32, #tpu.memory_space<vmem>>, %arg34: memref<16x32xf32, #tpu.memory_space<vmem>>, %arg35: memref<8x32xf32, #tpu.memory_space<vmem>>, %arg36: memref<8x32xf32, #tpu.memory_space<vmem>>, %arg37: memref<8x32xf32, #tpu.memory_space<vmem>>, %arg38: memref<1x32xf32, #tpu.memory_space<vmem>>, %arg39: memref<16x32xf32, #tpu.memory_space<vmem>>, %arg40: memref<8x32xf32, #tpu.memory_space<vmem>>, %arg41: memref<8x32xf32, #tpu.memory_space<vmem>>, %arg42: memref<8x32xf32, #tpu.memory_space<vmem>>, %arg43: memref<1x32xf32, #tpu.memory_space<vmem>>, %arg44: memref<32x64xf32, #tpu.memory_space<vmem>>, %arg45: memref<1x64xf32, #tpu.memory_space<vmem>>, %arg46: memref<64x512xf32, #tpu.memory_space<vmem>>, %arg47: memref<1x512xf32, #tpu.memory_space<vmem>>, %arg48: memref<32x64xf32, #tpu.memory_space<vmem>>, %arg49: memref<1x64xf32, #tpu.memory_space<vmem>>, %arg50: memref<64x768xf32, #tpu.memory_space<vmem>>, %arg51: memref<1x768xf32, #tpu.memory_space<vmem>>, %arg52: memref<32x64xf32, #tpu.memory_space<vmem>>, %arg53: memref<1x64xf32, #tpu.memory_space<vmem>>, %arg54: memref<64x16xf32, #tpu.memory_space<vmem>>, %arg55: memref<1x16xf32, #tpu.memory_space<vmem>>, %arg56: memref<2x512xf32, #tpu.memory_space<vmem>>, %arg57: memref<2x768xf32, #tpu.memory_space<vmem>>, %arg58: memref<2x16xf32, #tpu.memory_space<vmem>>, %arg59: memref<2x32xf32, #tpu.memory_space<vmem>>, %arg60: memref<2x32xf32, #tpu.memory_space<vmem>>, %arg61: memref<2x32xf32, #tpu.memory_space<vmem>>) attributes {dimension_semantics = [], scalar_prefetch = 0 : i64, scratch_operands = 0 : i64, tpu.core_type = #tpu.core_type<tc>} {
    %c0 = arith.constant 0 : index
    %c0_0 = arith.constant 0 : index
    %0 = vector.load %arg0[%c0, %c0_0] : memref<2x512xf32, #tpu.memory_space<vmem>>, vector<2x512xf32>
    %c0_1 = arith.constant 0 : index
    %c0_2 = arith.constant 0 : index
    %1 = vector.load %arg4[%c0_1, %c0_2] : memref<512x64xf32, #tpu.memory_space<vmem>>, vector<512x64xf32>
    %cst = arith.constant dense<0.000000e+00> : vector<2x64xf32>
    %2 = tpu.matmul %0, %1, %cst {dimension_numbers = #tpu.dot_dimension_numbers<[1], [0], [0], [1], [0, 0, 1, 1], [], []>} : vector<2x512xf32>, vector<512x64xf32>, vector<2x64xf32> -> vector<2x64xf32>
    %c0_3 = arith.constant 0 : index
    %c0_4 = arith.constant 0 : index
    %3 = vector.load %arg5[%c0_3, %c0_4] : memref<1x64xf32, #tpu.memory_space<vmem>>, vector<1x64xf32>
    %4 = vector.broadcast %3 : vector<1x64xf32> to vector<2x64xf32>
    %5 = arith.addf %2, %4 : vector<2x64xf32>
    %cst_5 = arith.constant 0.000000e+00 : f32
    %6 = vector.broadcast %cst_5 : f32 to vector<2x64xf32>
    %7 = arith.maximumf %5, %6 : vector<2x64xf32>
    %c0_6 = arith.constant 0 : index
    %c0_7 = arith.constant 0 : index
    %8 = vector.load %arg6[%c0_6, %c0_7] : memref<64x16xf32, #tpu.memory_space<vmem>>, vector<64x16xf32>
    %cst_8 = arith.constant dense<0.000000e+00> : vector<2x16xf32>
    %9 = tpu.matmul %7, %8, %cst_8 {dimension_numbers = #tpu.dot_dimension_numbers<[1], [0], [0], [1], [0, 0, 1, 1], [], []>} : vector<2x64xf32>, vector<64x16xf32>, vector<2x16xf32> -> vector<2x16xf32>
    %c0_9 = arith.constant 0 : index
    %c0_10 = arith.constant 0 : index
    %10 = vector.load %arg7[%c0_9, %c0_10] : memref<1x16xf32, #tpu.memory_space<vmem>>, vector<1x16xf32>
    %11 = vector.broadcast %10 : vector<1x16xf32> to vector<2x16xf32>
    %12 = arith.addf %9, %11 : vector<2x16xf32>
    %c0_11 = arith.constant 0 : index
    %c0_12 = arith.constant 0 : index
    %13 = vector.load %arg8[%c0_11, %c0_12] : memref<64x8xf32, #tpu.memory_space<vmem>>, vector<64x8xf32>
    %cst_13 = arith.constant dense<0.000000e+00> : vector<2x8xf32>
    %14 = tpu.matmul %7, %13, %cst_13 {dimension_numbers = #tpu.dot_dimension_numbers<[1], [0], [0], [1], [0, 0, 1, 1], [], []>} : vector<2x64xf32>, vector<64x8xf32>, vector<2x8xf32> -> vector<2x8xf32>
    %c0_14 = arith.constant 0 : index
    %c0_15 = arith.constant 0 : index
    %15 = vector.load %arg9[%c0_14, %c0_15] : memref<1x8xf32, #tpu.memory_space<vmem>>, vector<1x8xf32>
    %16 = vector.broadcast %15 : vector<1x8xf32> to vector<2x8xf32>
    %17 = arith.addf %14, %16 : vector<2x8xf32>
    %c0_16 = arith.constant 0 : index
    %c0_17 = arith.constant 0 : index
    %18 = vector.load %arg1[%c0_16, %c0_17] : memref<2x768xf32, #tpu.memory_space<vmem>>, vector<2x768xf32>
    %c0_18 = arith.constant 0 : index
    %c0_19 = arith.constant 0 : index
    %19 = vector.load %arg10[%c0_18, %c0_19] : memref<768x64xf32, #tpu.memory_space<vmem>>, vector<768x64xf32>
    %cst_20 = arith.constant dense<0.000000e+00> : vector<2x64xf32>
    %20 = tpu.matmul %18, %19, %cst_20 {dimension_numbers = #tpu.dot_dimension_numbers<[1], [0], [0], [1], [0, 0, 1, 1], [], []>} : vector<2x768xf32>, vector<768x64xf32>, vector<2x64xf32> -> vector<2x64xf32>
    %c0_21 = arith.constant 0 : index
    %c0_22 = arith.constant 0 : index
    %21 = vector.load %arg11[%c0_21, %c0_22] : memref<1x64xf32, #tpu.memory_space<vmem>>, vector<1x64xf32>
    %22 = vector.broadcast %21 : vector<1x64xf32> to vector<2x64xf32>
    %23 = arith.addf %20, %22 : vector<2x64xf32>
    %cst_23 = arith.constant 0.000000e+00 : f32
    %24 = vector.broadcast %cst_23 : f32 to vector<2x64xf32>
    %25 = arith.maximumf %23, %24 : vector<2x64xf32>
    %c0_24 = arith.constant 0 : index
    %c0_25 = arith.constant 0 : index
    %26 = vector.load %arg12[%c0_24, %c0_25] : memref<64x16xf32, #tpu.memory_space<vmem>>, vector<64x16xf32>
    %cst_26 = arith.constant dense<0.000000e+00> : vector<2x16xf32>
    %27 = tpu.matmul %25, %26, %cst_26 {dimension_numbers = #tpu.dot_dimension_numbers<[1], [0], [0], [1], [0, 0, 1, 1], [], []>} : vector<2x64xf32>, vector<64x16xf32>, vector<2x16xf32> -> vector<2x16xf32>
    %c0_27 = arith.constant 0 : index
    %c0_28 = arith.constant 0 : index
    %28 = vector.load %arg13[%c0_27, %c0_28] : memref<1x16xf32, #tpu.memory_space<vmem>>, vector<1x16xf32>
    %29 = vector.broadcast %28 : vector<1x16xf32> to vector<2x16xf32>
    %30 = arith.addf %27, %29 : vector<2x16xf32>
    %c0_29 = arith.constant 0 : index
    %c0_30 = arith.constant 0 : index
    %31 = vector.load %arg14[%c0_29, %c0_30] : memref<64x8xf32, #tpu.memory_space<vmem>>, vector<64x8xf32>
    %cst_31 = arith.constant dense<0.000000e+00> : vector<2x8xf32>
    %32 = tpu.matmul %25, %31, %cst_31 {dimension_numbers = #tpu.dot_dimension_numbers<[1], [0], [0], [1], [0, 0, 1, 1], [], []>} : vector<2x64xf32>, vector<64x8xf32>, vector<2x8xf32> -> vector<2x8xf32>
    %c0_32 = arith.constant 0 : index
    %c0_33 = arith.constant 0 : index
    %33 = vector.load %arg15[%c0_32, %c0_33] : memref<1x8xf32, #tpu.memory_space<vmem>>, vector<1x8xf32>
    %34 = vector.broadcast %33 : vector<1x8xf32> to vector<2x8xf32>
    %35 = arith.addf %32, %34 : vector<2x8xf32>
    %c0_34 = arith.constant 0 : index
    %c0_35 = arith.constant 0 : index
    %36 = vector.load %arg2[%c0_34, %c0_35] : memref<2x16xf32, #tpu.memory_space<vmem>>, vector<2x16xf32>
    %c0_36 = arith.constant 0 : index
    %c0_37 = arith.constant 0 : index
    %37 = vector.load %arg16[%c0_36, %c0_37] : memref<16x64xf32, #tpu.memory_space<vmem>>, vector<16x64xf32>
    %cst_38 = arith.constant dense<0.000000e+00> : vector<2x64xf32>
    %38 = tpu.matmul %36, %37, %cst_38 {dimension_numbers = #tpu.dot_dimension_numbers<[1], [0], [0], [1], [0, 0, 1, 1], [], []>} : vector<2x16xf32>, vector<16x64xf32>, vector<2x64xf32> -> vector<2x64xf32>
    %c0_39 = arith.constant 0 : index
    %c0_40 = arith.constant 0 : index
    %39 = vector.load %arg17[%c0_39, %c0_40] : memref<1x64xf32, #tpu.memory_space<vmem>>, vector<1x64xf32>
    %40 = vector.broadcast %39 : vector<1x64xf32> to vector<2x64xf32>
    %41 = arith.addf %38, %40 : vector<2x64xf32>
    %cst_41 = arith.constant 0.000000e+00 : f32
    %42 = vector.broadcast %cst_41 : f32 to vector<2x64xf32>
    %43 = arith.maximumf %41, %42 : vector<2x64xf32>
    %c0_42 = arith.constant 0 : index
    %c0_43 = arith.constant 0 : index
    %44 = vector.load %arg18[%c0_42, %c0_43] : memref<64x16xf32, #tpu.memory_space<vmem>>, vector<64x16xf32>
    %cst_44 = arith.constant dense<0.000000e+00> : vector<2x16xf32>
    %45 = tpu.matmul %43, %44, %cst_44 {dimension_numbers = #tpu.dot_dimension_numbers<[1], [0], [0], [1], [0, 0, 1, 1], [], []>} : vector<2x64xf32>, vector<64x16xf32>, vector<2x16xf32> -> vector<2x16xf32>
    %c0_45 = arith.constant 0 : index
    %c0_46 = arith.constant 0 : index
    %46 = vector.load %arg19[%c0_45, %c0_46] : memref<1x16xf32, #tpu.memory_space<vmem>>, vector<1x16xf32>
    %47 = vector.broadcast %46 : vector<1x16xf32> to vector<2x16xf32>
    %48 = arith.addf %45, %47 : vector<2x16xf32>
    %c0_47 = arith.constant 0 : index
    %c0_48 = arith.constant 0 : index
    %49 = vector.load %arg20[%c0_47, %c0_48] : memref<64x8xf32, #tpu.memory_space<vmem>>, vector<64x8xf32>
    %cst_49 = arith.constant dense<0.000000e+00> : vector<2x8xf32>
    %50 = tpu.matmul %43, %49, %cst_49 {dimension_numbers = #tpu.dot_dimension_numbers<[1], [0], [0], [1], [0, 0, 1, 1], [], []>} : vector<2x64xf32>, vector<64x8xf32>, vector<2x8xf32> -> vector<2x8xf32>
    %c0_50 = arith.constant 0 : index
    %c0_51 = arith.constant 0 : index
    %51 = vector.load %arg21[%c0_50, %c0_51] : memref<1x8xf32, #tpu.memory_space<vmem>>, vector<1x8xf32>
    %52 = vector.broadcast %51 : vector<1x8xf32> to vector<2x8xf32>
    %53 = arith.addf %50, %52 : vector<2x8xf32>
    %c0_52 = arith.constant 0 : index
    %c0_53 = arith.constant 0 : index
    %54 = vector.load %arg22[%c0_52, %c0_53] : memref<16x32xf32, #tpu.memory_space<vmem>>, vector<16x32xf32>
    %cst_54 = arith.constant dense<0.000000e+00> : vector<2x32xf32>
    %55 = tpu.matmul %12, %54, %cst_54 {dimension_numbers = #tpu.dot_dimension_numbers<[1], [0], [0], [1], [0, 0, 1, 1], [], []>} : vector<2x16xf32>, vector<16x32xf32>, vector<2x32xf32> -> vector<2x32xf32>
    %c0_55 = arith.constant 0 : index
    %c0_56 = arith.constant 0 : index
    %56 = vector.load %arg23[%c0_55, %c0_56] : memref<16x32xf32, #tpu.memory_space<vmem>>, vector<16x32xf32>
    %cst_57 = arith.constant dense<0.000000e+00> : vector<2x32xf32>
    %57 = tpu.matmul %30, %56, %cst_57 {dimension_numbers = #tpu.dot_dimension_numbers<[1], [0], [0], [1], [0, 0, 1, 1], [], []>} : vector<2x16xf32>, vector<16x32xf32>, vector<2x32xf32> -> vector<2x32xf32>
    %58 = arith.addf %55, %57 : vector<2x32xf32>
    %c0_58 = arith.constant 0 : index
    %c0_59 = arith.constant 0 : index
    %59 = vector.load %arg24[%c0_58, %c0_59] : memref<16x32xf32, #tpu.memory_space<vmem>>, vector<16x32xf32>
    %cst_60 = arith.constant dense<0.000000e+00> : vector<2x32xf32>
    %60 = tpu.matmul %48, %59, %cst_60 {dimension_numbers = #tpu.dot_dimension_numbers<[1], [0], [0], [1], [0, 0, 1, 1], [], []>} : vector<2x16xf32>, vector<16x32xf32>, vector<2x32xf32> -> vector<2x32xf32>
    %61 = arith.addf %58, %60 : vector<2x32xf32>
    %c0_61 = arith.constant 0 : index
    %c0_62 = arith.constant 0 : index
    %62 = vector.load %arg25[%c0_61, %c0_62] : memref<1x32xf32, #tpu.memory_space<vmem>>, vector<1x32xf32>
    %63 = vector.broadcast %62 : vector<1x32xf32> to vector<2x32xf32>
    %64 = arith.addf %61, %63 : vector<2x32xf32>
    %cst_63 = arith.constant 0.000000e+00 : f32
    %65 = vector.broadcast %cst_63 : f32 to vector<2x32xf32>
    %66 = arith.maximumf %64, %65 : vector<2x32xf32>
    %c0_64 = arith.constant 0 : index
    %c0_65 = arith.constant 0 : index
    %67 = vector.load %arg26[%c0_64, %c0_65] : memref<32x16xf32, #tpu.memory_space<vmem>>, vector<32x16xf32>
    %cst_66 = arith.constant dense<0.000000e+00> : vector<2x16xf32>
    %68 = tpu.matmul %66, %67, %cst_66 {dimension_numbers = #tpu.dot_dimension_numbers<[1], [0], [0], [1], [0, 0, 1, 1], [], []>} : vector<2x32xf32>, vector<32x16xf32>, vector<2x16xf32> -> vector<2x16xf32>
    %c0_67 = arith.constant 0 : index
    %c0_68 = arith.constant 0 : index
    %69 = vector.load %arg27[%c0_67, %c0_68] : memref<1x16xf32, #tpu.memory_space<vmem>>, vector<1x16xf32>
    %70 = vector.broadcast %69 : vector<1x16xf32> to vector<2x16xf32>
    %71 = arith.addf %68, %70 : vector<2x16xf32>
    %c0_69 = arith.constant 0 : index
    %c0_70 = arith.constant 0 : index
    %72 = vector.load %arg28[%c0_69, %c0_70] : memref<8x8xf32, #tpu.memory_space<vmem>>, vector<8x8xf32>
    %cst_71 = arith.constant dense<0.000000e+00> : vector<2x8xf32>
    %73 = tpu.matmul %17, %72, %cst_71 {dimension_numbers = #tpu.dot_dimension_numbers<[1], [0], [0], [1], [0, 0, 1, 1], [], []>} : vector<2x8xf32>, vector<8x8xf32>, vector<2x8xf32> -> vector<2x8xf32>
    %c0_72 = arith.constant 0 : index
    %c0_73 = arith.constant 0 : index
    %74 = vector.load %arg29[%c0_72, %c0_73] : memref<1x8xf32, #tpu.memory_space<vmem>>, vector<1x8xf32>
    %75 = vector.broadcast %74 : vector<1x8xf32> to vector<2x8xf32>
    %76 = arith.addf %73, %75 : vector<2x8xf32>
    %cst_74 = arith.constant 0.000000e+00 : f32
    %77 = vector.broadcast %cst_74 : f32 to vector<2x8xf32>
    %78 = arith.maximumf %76, %77 : vector<2x8xf32>
    %c0_75 = arith.constant 0 : index
    %c0_76 = arith.constant 0 : index
    %79 = vector.load %arg30[%c0_75, %c0_76] : memref<8x8xf32, #tpu.memory_space<vmem>>, vector<8x8xf32>
    %cst_77 = arith.constant dense<0.000000e+00> : vector<2x8xf32>
    %80 = tpu.matmul %35, %79, %cst_77 {dimension_numbers = #tpu.dot_dimension_numbers<[1], [0], [0], [1], [0, 0, 1, 1], [], []>} : vector<2x8xf32>, vector<8x8xf32>, vector<2x8xf32> -> vector<2x8xf32>
    %c0_78 = arith.constant 0 : index
    %c0_79 = arith.constant 0 : index
    %81 = vector.load %arg31[%c0_78, %c0_79] : memref<1x8xf32, #tpu.memory_space<vmem>>, vector<1x8xf32>
    %82 = vector.broadcast %81 : vector<1x8xf32> to vector<2x8xf32>
    %83 = arith.addf %80, %82 : vector<2x8xf32>
    %cst_80 = arith.constant 0.000000e+00 : f32
    %84 = vector.broadcast %cst_80 : f32 to vector<2x8xf32>
    %85 = arith.maximumf %83, %84 : vector<2x8xf32>
    %c0_81 = arith.constant 0 : index
    %c0_82 = arith.constant 0 : index
    %86 = vector.load %arg32[%c0_81, %c0_82] : memref<8x8xf32, #tpu.memory_space<vmem>>, vector<8x8xf32>
    %cst_83 = arith.constant dense<0.000000e+00> : vector<2x8xf32>
    %87 = tpu.matmul %53, %86, %cst_83 {dimension_numbers = #tpu.dot_dimension_numbers<[1], [0], [0], [1], [0, 0, 1, 1], [], []>} : vector<2x8xf32>, vector<8x8xf32>, vector<2x8xf32> -> vector<2x8xf32>
    %c0_84 = arith.constant 0 : index
    %c0_85 = arith.constant 0 : index
    %88 = vector.load %arg33[%c0_84, %c0_85] : memref<1x8xf32, #tpu.memory_space<vmem>>, vector<1x8xf32>
    %89 = vector.broadcast %88 : vector<1x8xf32> to vector<2x8xf32>
    %90 = arith.addf %87, %89 : vector<2x8xf32>
    %cst_86 = arith.constant 0.000000e+00 : f32
    %91 = vector.broadcast %cst_86 : f32 to vector<2x8xf32>
    %92 = arith.maximumf %90, %91 : vector<2x8xf32>
    %c0_87 = arith.constant 0 : index
    %c0_88 = arith.constant 0 : index
    %93 = vector.load %arg34[%c0_87, %c0_88] : memref<16x32xf32, #tpu.memory_space<vmem>>, vector<16x32xf32>
    %cst_89 = arith.constant dense<0.000000e+00> : vector<2x32xf32>
    %94 = tpu.matmul %71, %93, %cst_89 {dimension_numbers = #tpu.dot_dimension_numbers<[1], [0], [0], [1], [0, 0, 1, 1], [], []>} : vector<2x16xf32>, vector<16x32xf32>, vector<2x32xf32> -> vector<2x32xf32>
    %c0_90 = arith.constant 0 : index
    %c0_91 = arith.constant 0 : index
    %95 = vector.load %arg35[%c0_90, %c0_91] : memref<8x32xf32, #tpu.memory_space<vmem>>, vector<8x32xf32>
    %cst_92 = arith.constant dense<0.000000e+00> : vector<2x32xf32>
    %96 = tpu.matmul %78, %95, %cst_92 {dimension_numbers = #tpu.dot_dimension_numbers<[1], [0], [0], [1], [0, 0, 1, 1], [], []>} : vector<2x8xf32>, vector<8x32xf32>, vector<2x32xf32> -> vector<2x32xf32>
    %97 = arith.addf %94, %96 : vector<2x32xf32>
    %c0_93 = arith.constant 0 : index
    %c0_94 = arith.constant 0 : index
    %98 = vector.load %arg36[%c0_93, %c0_94] : memref<8x32xf32, #tpu.memory_space<vmem>>, vector<8x32xf32>
    %cst_95 = arith.constant dense<0.000000e+00> : vector<2x32xf32>
    %99 = tpu.matmul %85, %98, %cst_95 {dimension_numbers = #tpu.dot_dimension_numbers<[1], [0], [0], [1], [0, 0, 1, 1], [], []>} : vector<2x8xf32>, vector<8x32xf32>, vector<2x32xf32> -> vector<2x32xf32>
    %100 = arith.addf %97, %99 : vector<2x32xf32>
    %c0_96 = arith.constant 0 : index
    %c0_97 = arith.constant 0 : index
    %101 = vector.load %arg37[%c0_96, %c0_97] : memref<8x32xf32, #tpu.memory_space<vmem>>, vector<8x32xf32>
    %cst_98 = arith.constant dense<0.000000e+00> : vector<2x32xf32>
    %102 = tpu.matmul %92, %101, %cst_98 {dimension_numbers = #tpu.dot_dimension_numbers<[1], [0], [0], [1], [0, 0, 1, 1], [], []>} : vector<2x8xf32>, vector<8x32xf32>, vector<2x32xf32> -> vector<2x32xf32>
    %103 = arith.addf %100, %102 : vector<2x32xf32>
    %c0_99 = arith.constant 0 : index
    %c0_100 = arith.constant 0 : index
    %104 = vector.load %arg38[%c0_99, %c0_100] : memref<1x32xf32, #tpu.memory_space<vmem>>, vector<1x32xf32>
    %105 = vector.broadcast %104 : vector<1x32xf32> to vector<2x32xf32>
    %106 = arith.addf %103, %105 : vector<2x32xf32>
    %c0_101 = arith.constant 0 : index
    %c0_102 = arith.constant 0 : index
    %107 = vector.load %arg39[%c0_101, %c0_102] : memref<16x32xf32, #tpu.memory_space<vmem>>, vector<16x32xf32>
    %cst_103 = arith.constant dense<0.000000e+00> : vector<2x32xf32>
    %108 = tpu.matmul %71, %107, %cst_103 {dimension_numbers = #tpu.dot_dimension_numbers<[1], [0], [0], [1], [0, 0, 1, 1], [], []>} : vector<2x16xf32>, vector<16x32xf32>, vector<2x32xf32> -> vector<2x32xf32>
    %c0_104 = arith.constant 0 : index
    %c0_105 = arith.constant 0 : index
    %109 = vector.load %arg40[%c0_104, %c0_105] : memref<8x32xf32, #tpu.memory_space<vmem>>, vector<8x32xf32>
    %cst_106 = arith.constant dense<0.000000e+00> : vector<2x32xf32>
    %110 = tpu.matmul %78, %109, %cst_106 {dimension_numbers = #tpu.dot_dimension_numbers<[1], [0], [0], [1], [0, 0, 1, 1], [], []>} : vector<2x8xf32>, vector<8x32xf32>, vector<2x32xf32> -> vector<2x32xf32>
    %111 = arith.addf %108, %110 : vector<2x32xf32>
    %c0_107 = arith.constant 0 : index
    %c0_108 = arith.constant 0 : index
    %112 = vector.load %arg41[%c0_107, %c0_108] : memref<8x32xf32, #tpu.memory_space<vmem>>, vector<8x32xf32>
    %cst_109 = arith.constant dense<0.000000e+00> : vector<2x32xf32>
    %113 = tpu.matmul %85, %112, %cst_109 {dimension_numbers = #tpu.dot_dimension_numbers<[1], [0], [0], [1], [0, 0, 1, 1], [], []>} : vector<2x8xf32>, vector<8x32xf32>, vector<2x32xf32> -> vector<2x32xf32>
    %114 = arith.addf %111, %113 : vector<2x32xf32>
    %c0_110 = arith.constant 0 : index
    %c0_111 = arith.constant 0 : index
    %115 = vector.load %arg42[%c0_110, %c0_111] : memref<8x32xf32, #tpu.memory_space<vmem>>, vector<8x32xf32>
    %cst_112 = arith.constant dense<0.000000e+00> : vector<2x32xf32>
    %116 = tpu.matmul %92, %115, %cst_112 {dimension_numbers = #tpu.dot_dimension_numbers<[1], [0], [0], [1], [0, 0, 1, 1], [], []>} : vector<2x8xf32>, vector<8x32xf32>, vector<2x32xf32> -> vector<2x32xf32>
    %117 = arith.addf %114, %116 : vector<2x32xf32>
    %c0_113 = arith.constant 0 : index
    %c0_114 = arith.constant 0 : index
    %118 = vector.load %arg43[%c0_113, %c0_114] : memref<1x32xf32, #tpu.memory_space<vmem>>, vector<1x32xf32>
    %119 = vector.broadcast %118 : vector<1x32xf32> to vector<2x32xf32>
    %120 = arith.addf %117, %119 : vector<2x32xf32>
    %c0_115 = arith.constant 0 : index
    %c0_116 = arith.constant 0 : index
    %121 = vector.load %arg3[%c0_115, %c0_116] : memref<2x32xf32, #tpu.memory_space<vmem>>, vector<2x32xf32>
    %cst_117 = arith.constant 5.000000e-01 : f32
    %122 = vector.broadcast %cst_117 : f32 to vector<2x32xf32>
    %123 = arith.mulf %122, %120 : vector<2x32xf32>
    %124 = math.exp %123 : vector<2x32xf32>
    %125 = arith.mulf %121, %124 : vector<2x32xf32>
    %126 = arith.addf %106, %125 : vector<2x32xf32>
    %c0_118 = arith.constant 0 : index
    %c0_119 = arith.constant 0 : index
    %127 = vector.load %arg59[%c0_118, %c0_119] : memref<2x32xf32, #tpu.memory_space<vmem>>, vector<2x32xf32>
    tpu.vector_store %arg59[%c0_118, %c0_119], %106 {strides = array<i32>} : memref<2x32xf32, #tpu.memory_space<vmem>>, vector<2x32xf32>,
    %c0_120 = arith.constant 0 : index
    %c0_121 = arith.constant 0 : index
    %128 = vector.load %arg60[%c0_120, %c0_121] : memref<2x32xf32, #tpu.memory_space<vmem>>, vector<2x32xf32>
    tpu.vector_store %arg60[%c0_120, %c0_121], %120 {strides = array<i32>} : memref<2x32xf32, #tpu.memory_space<vmem>>, vector<2x32xf32>,
    %c0_122 = arith.constant 0 : index
    %c0_123 = arith.constant 0 : index
    %129 = vector.load %arg61[%c0_122, %c0_123] : memref<2x32xf32, #tpu.memory_space<vmem>>, vector<2x32xf32>
    tpu.vector_store %arg61[%c0_122, %c0_123], %126 {strides = array<i32>} : memref<2x32xf32, #tpu.memory_space<vmem>>, vector<2x32xf32>,
    %c0_124 = arith.constant 0 : index
    %c0_125 = arith.constant 0 : index
    %130 = vector.load %arg44[%c0_124, %c0_125] : memref<32x64xf32, #tpu.memory_space<vmem>>, vector<32x64xf32>
    %cst_126 = arith.constant dense<0.000000e+00> : vector<2x64xf32>
    %131 = tpu.matmul %126, %130, %cst_126 {dimension_numbers = #tpu.dot_dimension_numbers<[1], [0], [0], [1], [0, 0, 1, 1], [], []>} : vector<2x32xf32>, vector<32x64xf32>, vector<2x64xf32> -> vector<2x64xf32>
    %c0_127 = arith.constant 0 : index
    %c0_128 = arith.constant 0 : index
    %132 = vector.load %arg45[%c0_127, %c0_128] : memref<1x64xf32, #tpu.memory_space<vmem>>, vector<1x64xf32>
    %133 = vector.broadcast %132 : vector<1x64xf32> to vector<2x64xf32>
    %134 = arith.addf %131, %133 : vector<2x64xf32>
    %cst_129 = arith.constant 0.000000e+00 : f32
    %135 = vector.broadcast %cst_129 : f32 to vector<2x64xf32>
    %136 = arith.maximumf %134, %135 : vector<2x64xf32>
    %c0_130 = arith.constant 0 : index
    %c0_131 = arith.constant 0 : index
    %137 = vector.load %arg46[%c0_130, %c0_131] : memref<64x512xf32, #tpu.memory_space<vmem>>, vector<64x512xf32>
    %cst_132 = arith.constant dense<0.000000e+00> : vector<2x512xf32>
    %138 = tpu.matmul %136, %137, %cst_132 {dimension_numbers = #tpu.dot_dimension_numbers<[1], [0], [0], [1], [0, 0, 1, 1], [], []>} : vector<2x64xf32>, vector<64x512xf32>, vector<2x512xf32> -> vector<2x512xf32>
    %c0_133 = arith.constant 0 : index
    %c0_134 = arith.constant 0 : index
    %139 = vector.load %arg47[%c0_133, %c0_134] : memref<1x512xf32, #tpu.memory_space<vmem>>, vector<1x512xf32>
    %140 = vector.broadcast %139 : vector<1x512xf32> to vector<2x512xf32>
    %141 = arith.addf %138, %140 : vector<2x512xf32>
    %c0_135 = arith.constant 0 : index
    %c0_136 = arith.constant 0 : index
    %142 = vector.load %arg56[%c0_135, %c0_136] : memref<2x512xf32, #tpu.memory_space<vmem>>, vector<2x512xf32>
    tpu.vector_store %arg56[%c0_135, %c0_136], %141 {strides = array<i32>} : memref<2x512xf32, #tpu.memory_space<vmem>>, vector<2x512xf32>,
    %c0_137 = arith.constant 0 : index
    %c0_138 = arith.constant 0 : index
    %143 = vector.load %arg48[%c0_137, %c0_138] : memref<32x64xf32, #tpu.memory_space<vmem>>, vector<32x64xf32>
    %cst_139 = arith.constant dense<0.000000e+00> : vector<2x64xf32>
    %144 = tpu.matmul %126, %143, %cst_139 {dimension_numbers = #tpu.dot_dimension_numbers<[1], [0], [0], [1], [0, 0, 1, 1], [], []>} : vector<2x32xf32>, vector<32x64xf32>, vector<2x64xf32> -> vector<2x64xf32>
    %c0_140 = arith.constant 0 : index
    %c0_141 = arith.constant 0 : index
    %145 = vector.load %arg49[%c0_140, %c0_141] : memref<1x64xf32, #tpu.memory_space<vmem>>, vector<1x64xf32>
    %146 = vector.broadcast %145 : vector<1x64xf32> to vector<2x64xf32>
    %147 = arith.addf %144, %146 : vector<2x64xf32>
    %cst_142 = arith.constant 0.000000e+00 : f32
    %148 = vector.broadcast %cst_142 : f32 to vector<2x64xf32>
    %149 = arith.maximumf %147, %148 : vector<2x64xf32>
    %c0_143 = arith.constant 0 : index
    %c0_144 = arith.constant 0 : index
    %150 = vector.load %arg50[%c0_143, %c0_144] : memref<64x768xf32, #tpu.memory_space<vmem>>, vector<64x768xf32>
    %cst_145 = arith.constant dense<0.000000e+00> : vector<2x768xf32>
    %151 = tpu.matmul %149, %150, %cst_145 {dimension_numbers = #tpu.dot_dimension_numbers<[1], [0], [0], [1], [0, 0, 1, 1], [], []>} : vector<2x64xf32>, vector<64x768xf32>, vector<2x768xf32> -> vector<2x768xf32>
    %c0_146 = arith.constant 0 : index
    %c0_147 = arith.constant 0 : index
    %152 = vector.load %arg51[%c0_146, %c0_147] : memref<1x768xf32, #tpu.memory_space<vmem>>, vector<1x768xf32>
    %153 = vector.broadcast %152 : vector<1x768xf32> to vector<2x768xf32>
    %154 = arith.addf %151, %153 : vector<2x768xf32>
    %c0_148 = arith.constant 0 : index
    %c0_149 = arith.constant 0 : index
    %155 = vector.load %arg57[%c0_148, %c0_149] : memref<2x768xf32, #tpu.memory_space<vmem>>, vector<2x768xf32>
    tpu.vector_store %arg57[%c0_148, %c0_149], %154 {strides = array<i32>} : memref<2x768xf32, #tpu.memory_space<vmem>>, vector<2x768xf32>,
    %c0_150 = arith.constant 0 : index
    %c0_151 = arith.constant 0 : index
    %156 = vector.load %arg52[%c0_150, %c0_151] : memref<32x64xf32, #tpu.memory_space<vmem>>, vector<32x64xf32>
    %cst_152 = arith.constant dense<0.000000e+00> : vector<2x64xf32>
    %157 = tpu.matmul %126, %156, %cst_152 {dimension_numbers = #tpu.dot_dimension_numbers<[1], [0], [0], [1], [0, 0, 1, 1], [], []>} : vector<2x32xf32>, vector<32x64xf32>, vector<2x64xf32> -> vector<2x64xf32>
    %c0_153 = arith.constant 0 : index
    %c0_154 = arith.constant 0 : index
    %158 = vector.load %arg53[%c0_153, %c0_154] : memref<1x64xf32, #tpu.memory_space<vmem>>, vector<1x64xf32>
    %159 = vector.broadcast %158 : vector<1x64xf32> to vector<2x64xf32>
    %160 = arith.addf %157, %159 : vector<2x64xf32>
    %cst_155 = arith.constant 0.000000e+00 : f32
    %161 = vector.broadcast %cst_155 : f32 to vector<2x64xf32>
    %162 = arith.maximumf %160, %161 : vector<2x64xf32>
    %c0_156 = arith.constant 0 : index
    %c0_157 = arith.constant 0 : index
    %163 = vector.load %arg54[%c0_156, %c0_157] : memref<64x16xf32, #tpu.memory_space<vmem>>, vector<64x16xf32>
    %cst_158 = arith.constant dense<0.000000e+00> : vector<2x16xf32>
    %164 = tpu.matmul %162, %163, %cst_158 {dimension_numbers = #tpu.dot_dimension_numbers<[1], [0], [0], [1], [0, 0, 1, 1], [], []>} : vector<2x64xf32>, vector<64x16xf32>, vector<2x16xf32> -> vector<2x16xf32>
    %c0_159 = arith.constant 0 : index
    %c0_160 = arith.constant 0 : index
    %165 = vector.load %arg55[%c0_159, %c0_160] : memref<1x16xf32, #tpu.memory_space<vmem>>, vector<1x16xf32>
    %166 = vector.broadcast %165 : vector<1x16xf32> to vector<2x16xf32>
    %167 = arith.addf %164, %166 : vector<2x16xf32>
    %c0_161 = arith.constant 0 : index
    %c0_162 = arith.constant 0 : index
    %168 = vector.load %arg58[%c0_161, %c0_162] : memref<2x16xf32, #tpu.memory_space<vmem>>, vector<2x16xf32>
    tpu.vector_store %arg58[%c0_161, %c0_162], %167 {strides = array<i32>} : memref<2x16xf32, #tpu.memory_space<vmem>>, vector<2x16xf32>,
    return
  }
}

</mosaic_0001>

<llo_original>
// kernel: multimodal_vae_forward.1
$region0: #{multimodal_vae_forward.1}
  #allocation0 [shape = 'u32[]', space=smem, size = 0x4, offset = 0x4, fixed_abs, tag = 'smem constant byte address 0x4 - core index']
  #allocation1 [shape = 'u32[144,128]{1,0:T(1,128)}', space=vmem, size = 0x12000, scoped, tag = 'internal scratch']
  %s0 = inlined_call_operand.smem [shape: u32[62], index: -1, kind: input, shape index: {}]
  %s1 = sld [smem:[%s0]]
  %s2 = scalar_lea.smem %s0, 1
  %s3 = sld [smem:[%s2]]
  %s4 = scalar_lea.smem %s0, 2
  %s5 = sld [smem:[%s4]]
  %s6 = scalar_lea.smem %s0, 3
  %s7 = sld [smem:[%s6]]
  %s8 = scalar_lea.smem %s0, 4
  %s9 = sld [smem:[%s8]]
  %s10 = scalar_lea.smem %s0, 5
  %s11 = sld [smem:[%s10]]
  %s12 = scalar_lea.smem %s0, 6
  %s13 = sld [smem:[%s12]]
  %s14 = scalar_lea.smem %s0, 7
  %s15 = sld [smem:[%s14]]
  %s16 = scalar_lea.smem %s0, 8
  %s17 = sld [smem:[%s16]]
  %s18 = scalar_lea.smem %s0, 9
  %s19 = sld [smem:[%s18]]
  %s20 = scalar_lea.smem %s0, 10
  %s21 = sld [smem:[%s20]]
  %s22 = scalar_lea.smem %s0, 11
  %s23 = sld [smem:[%s22]]
  %s24 = scalar_lea.smem %s0, 12
  %s25 = sld [smem:[%s24]]
  %s26 = scalar_lea.smem %s0, 13
  %s27 = sld [smem:[%s26]]
  %s28 = scalar_lea.smem %s0, 14
  %s29 = sld [smem:[%s28]]
  %s30 = scalar_lea.smem %s0, 15
  %s31 = sld [smem:[%s30]]
  %s32 = scalar_lea.smem %s0, 16
  %s33 = sld [smem:[%s32]]
  %s34 = scalar_lea.smem %s0, 17
  %s35 = sld [smem:[%s34]]
  %s36 = scalar_lea.smem %s0, 18
  %s37 = sld [smem:[%s36]]
  %s38 = scalar_lea.smem %s0, 19
  %s39 = sld [smem:[%s38]]
  %s40 = scalar_lea.smem %s0, 20
  %s41 = sld [smem:[%s40]]
  %s42 = scalar_lea.smem %s0, 21
  %s43 = sld [smem:[%s42]]
  %s44 = scalar_lea.smem %s0, 22
  %s45 = sld [smem:[%s44]]
  %s46 = scalar_lea.smem %s0, 23
  %s47 = sld [smem:[%s46]]
  %s48 = scalar_lea.smem %s0, 24
  %s49 = sld [smem:[%s48]]
  %s50 = scalar_lea.smem %s0, 25
  %s51 = sld [smem:[%s50]]
  %s52 = scalar_lea.smem %s0, 26
  %s53 = sld [smem:[%s52]]
  %s54 = scalar_lea.smem %s0, 27
  %s55 = sld [smem:[%s54]]
  %s56 = scalar_lea.smem %s0, 28
  %s57 = sld [smem:[%s56]]
  %s58 = scalar_lea.smem %s0, 29
  %s59 = sld [smem:[%s58]]
  %s60 = scalar_lea.smem %s0, 30
  %s61 = sld [smem:[%s60]]
  %s62 = scalar_lea.smem %s0, 31
  %s63 = sld [smem:[%s62]]
  %s64 = scalar_lea.smem %s0, 32
  %s65 = sld [smem:[%s64]]
  %s66 = scalar_lea.smem %s0, 33
  %s67 = sld [smem:[%s66]]
  %s68 = scalar_lea.smem %s0, 34
  %s69 = sld [smem:[%s68]]
  %s70 = scalar_lea.smem %s0, 35
  %s71 = sld [smem:[%s70]]
  %s72 = scalar_lea.smem %s0, 36
  %s73 = sld [smem:[%s72]]
  %s74 = scalar_lea.smem %s0, 37
  %s75 = sld [smem:[%s74]]
  %s76 = scalar_lea.smem %s0, 38
  %s77 = sld [smem:[%s76]]
  %s78 = scalar_lea.smem %s0, 39
  %s79 = sld [smem:[%s78]]
  %s80 = scalar_lea.smem %s0, 40
  %s81 = sld [smem:[%s80]]
  %s82 = scalar_lea.smem %s0, 41
  %s83 = sld [smem:[%s82]]
  %s84 = scalar_lea.smem %s0, 42
  %s85 = sld [smem:[%s84]]
  %s86 = scalar_lea.smem %s0, 43
  %s87 = sld [smem:[%s86]]
  %s88 = scalar_lea.smem %s0, 44
  %s89 = sld [smem:[%s88]]
  %s90 = scalar_lea.smem %s0, 45
  %s91 = sld [smem:[%s90]]
  %s92 = scalar_lea.smem %s0, 46
  %s93 = sld [smem:[%s92]]
  %s94 = scalar_lea.smem %s0, 47
  %s95 = sld [smem:[%s94]]
  %s96 = scalar_lea.smem %s0, 48
  %s97 = sld [smem:[%s96]]
  %s98 = scalar_lea.smem %s0, 49
  %s99 = sld [smem:[%s98]]
  %s100 = scalar_lea.smem %s0, 50
  %s101 = sld [smem:[%s100]]
  %s102 = scalar_lea.smem %s0, 51
  %s103 = sld [smem:[%s102]]
  %s104 = scalar_lea.smem %s0, 52
  %s105 = sld [smem:[%s104]]
  %s106 = scalar_lea.smem %s0, 53
  %s107 = sld [smem:[%s106]]
  %s108 = scalar_lea.smem %s0, 54
  %s109 = sld [smem:[%s108]]
  %s110 = scalar_lea.smem %s0, 55
  %s111 = sld [smem:[%s110]]
  %s112 = scalar_lea.smem %s0, 56
  %s113 = sld [smem:[%s112]]
  %s114 = scalar_lea.smem %s0, 57
  %s115 = sld [smem:[%s114]]
  %s116 = scalar_lea.smem %s0, 58
  %s117 = sld [smem:[%s116]]
  %s118 = scalar_lea.smem %s0, 59
  %s119 = sld [smem:[%s118]]
  %s120 = scalar_lea.smem %s0, 60
  %s121 = sld [smem:[%s120]]
  %s122 = scalar_lea.smem %s0, 61
  %s123 = sld [smem:[%s122]]
  %124 = xla_tuple %s113, %s115, %s117, %s119, %s121, %s123
  %s125 = sld [smem:[#allocation0]]
  $region298: #{multimodal_vae_forward.1} parent=0
    _
  %s127 = ssub.s32 1, %s125
  %s128 = scalar_select 0, %s127, %s125
  $region1: #{multimodal_vae_forward.1} parent=0
    #allocation2 [shape = 'u8[512]{0}', space=vmem, size = 0x400, scoped, tag = 'input window, operand 38, single buffered']
    #allocation3 [shape = 's32[1]{0}', space=sflag, size = 0x4, scoped, tag = 'scoped memory for multimodal_vae_forward.1']
    #allocation4 [shape = 's32[1]{0}', space=sflag, size = 0x4, scoped, tag = 'scoped memory for multimodal_vae_forward.1']
    #allocation5 [shape = 'u8[512]{0}', space=vmem, size = 0x400, scoped, tag = 'input window, operand 43, single buffered']
    #allocation6 [shape = 's32[1]{0}', space=sflag, size = 0x4, scoped, tag = 'scoped memory for multimodal_vae_forward.1']
    #allocation7 [shape = 'u8[512]{0}', space=vmem, size = 0x400, scoped, tag = 'input window, operand 45, single buffered']
    #allocation8 [shape = 'u8[512]{0}', space=vmem, size = 0x400, scoped, tag = 'input window, operand 49, single buffered']
    #allocation9 [shape = 's32[1]{0}', space=sflag, size = 0x4, scoped, tag = 'scoped memory for multimodal_vae_forward.1']
    #allocation10 [shape = 'u8[512]{0}', space=vmem, size = 0x400, scoped, tag = 'input window, operand 53, single buffered']
    #allocation11 [shape = 'u8[512]{0}', space=vmem, size = 0x400, scoped, tag = 'input window, operand 55, single buffered']
    #allocation12 [shape = 's32[1]{0}', space=sflag, size = 0x4, scoped, tag = 'scoped memory for multimodal_vae_forward.1']
    #allocation13 [shape = 'u8[1024]{0}', space=vmem, size = 0x400, scoped, tag = 'output window, operand 2, single buffered']
    #allocation14 [shape = 'u8[1024]{0}', space=vmem, size = 0x400, scoped, tag = 'output window, operand 3, single buffered']
    #allocation15 [shape = 's32[1]{0}', space=sflag, size = 0x4, scoped, tag = 'scoped memory for multimodal_vae_forward.1']
    #allocation16 [shape = 'u8[1024]{0}', space=vmem, size = 0x400, scoped, tag = 'output window, operand 4, single buffered']
    #allocation17 [shape = 'u8[1024]{0}', space=vmem, size = 0x400, scoped, tag = 'output window, operand 5, single buffered']
    #allocation18 [shape = 's32[1]{0}', space=sflag, size = 0x4, scoped, tag = 'scoped memory for multimodal_vae_forward.1']
    %129 = vsyncpa [#allocation3], 0
    %130 = vsyncpa [#allocation6], 0
    %131 = vsyncpa [#allocation9], 0
    %132 = vsyncpa [#allocation12], 0
    %133 = vsyncpa [#allocation4], 0
    %134 = vsyncpa [#allocation15], 0
    %135 = vsyncpa [#allocation18], 0
    // Predicated region
    $region2: #{multimodal_vae_forward.1} parent=1 // pred_check
      _
    $region3: #{multimodal_vae_forward.1} parent=1 // pred_check_branch
      %137 = sbr.rel (0) target = $region5
    $region4: #{multimodal_vae_forward.1} parent=1 // pred_region
      _
    $region5: #{multimodal_vae_forward.1} parent=1 // pred_fallthru
      _
    // Predicated region
    $region6: #{multimodal_vae_forward.1} parent=1 // pred_check
      _
    $region7: #{multimodal_vae_forward.1} parent=1 // pred_check_branch
      %139 = sbr.rel (0) target = $region9
    $region8: #{multimodal_vae_forward.1} parent=1 // pred_region
      _
    $region9: #{multimodal_vae_forward.1} parent=1 // pred_fallthru
      _
    // Predicated region
    $region10: #{multimodal_vae_forward.1} parent=1 // pred_check
      _
    $region11: #{multimodal_vae_forward.1} parent=1 // pred_check_branch
      %141 = sbr.rel (0) target = $region13
    $region12: #{multimodal_vae_forward.1} parent=1 // pred_region
      _
    $region13: #{multimodal_vae_forward.1} parent=1 // pred_fallthru
      _
    // Predicated region
    $region14: #{multimodal_vae_forward.1} parent=1 // pred_check
      _
    $region15: #{multimodal_vae_forward.1} parent=1 // pred_check_branch
      %143 = sbr.rel (0) target = $region17
    $region16: #{multimodal_vae_forward.1} parent=1 // pred_region
      _
    $region17: #{multimodal_vae_forward.1} parent=1 // pred_fallthru
      _
    // Predicated region
    $region18: #{multimodal_vae_forward.1} parent=1 // pred_check
      _
    $region19: #{multimodal_vae_forward.1} parent=1 // pred_check_branch
      %145 = sbr.rel (0) target = $region21
    $region20: #{multimodal_vae_forward.1} parent=1 // pred_region
      _
    $region21: #{multimodal_vae_forward.1} parent=1 // pred_fallthru
      _
    // Predicated region
    $region22: #{multimodal_vae_forward.1} parent=1 // pred_check
      _
    $region23: #{multimodal_vae_forward.1} parent=1 // pred_check_branch
      %147 = sbr.rel (0) target = $region25
    $region24: #{multimodal_vae_forward.1} parent=1 // pred_region
      _
    $region25: #{multimodal_vae_forward.1} parent=1 // pred_fallthru
      _
    // Predicated region
    $region26: #{multimodal_vae_forward.1} parent=1 // pred_check
      _
    $region27: #{multimodal_vae_forward.1} parent=1 // pred_check_branch
      %149 = sbr.rel (0) target = $region29
    $region28: #{multimodal_vae_forward.1} parent=1 // pred_region
      _
    $region29: #{multimodal_vae_forward.1} parent=1 // pred_fallthru
      _
    // Predicated region
    $region30: #{multimodal_vae_forward.1} parent=1 // pred_check
      _
    $region31: #{multimodal_vae_forward.1} parent=1 // pred_check_branch
      %151 = sbr.rel (0) target = $region33
    $region32: #{multimodal_vae_forward.1} parent=1 // pred_region
      _
    $region33: #{multimodal_vae_forward.1} parent=1 // pred_fallthru
      _
    // Predicated region
    $region34: #{multimodal_vae_forward.1} parent=1 // pred_check
      _
    $region35: #{multimodal_vae_forward.1} parent=1 // pred_check_branch
      %153 = sbr.rel (0) target = $region37
    $region36: #{multimodal_vae_forward.1} parent=1 // pred_region
      _
    $region37: #{multimodal_vae_forward.1} parent=1 // pred_fallthru
      _
    // Predicated region
    $region38: #{multimodal_vae_forward.1} parent=1 // pred_check
      _
    $region39: #{multimodal_vae_forward.1} parent=1 // pred_check_branch
      %155 = sbr.rel (0) target = $region41
    $region40: #{multimodal_vae_forward.1} parent=1 // pred_region
      _
    $region41: #{multimodal_vae_forward.1} parent=1 // pred_fallthru
      _
    // Predicated region
    $region42: #{multimodal_vae_forward.1} parent=1 // pred_check
      _
    $region43: #{multimodal_vae_forward.1} parent=1 // pred_check_branch
      %157 = sbr.rel (0) target = $region45
    $region44: #{multimodal_vae_forward.1} parent=1 // pred_region
      _
    $region45: #{multimodal_vae_forward.1} parent=1 // pred_fallthru
      _
    // Predicated region
    $region46: #{multimodal_vae_forward.1} parent=1 // pred_check
      _
    $region47: #{multimodal_vae_forward.1} parent=1 // pred_check_branch
      %159 = sbr.rel (0) target = $region49
    $region48: #{multimodal_vae_forward.1} parent=1 // pred_region
      _
    $region49: #{multimodal_vae_forward.1} parent=1 // pred_fallthru
      _
    // Predicated region
    $region50: #{multimodal_vae_forward.1} parent=1 // pred_check
      _
    $region51: #{multimodal_vae_forward.1} parent=1 // pred_check_branch
      %161 = sbr.rel (0) target = $region53
    $region52: #{multimodal_vae_forward.1} parent=1 // pred_region
      _
    $region53: #{multimodal_vae_forward.1} parent=1 // pred_fallthru
      _
    // Predicated region
    $region54: #{multimodal_vae_forward.1} parent=1 // pred_check
      _
    $region55: #{multimodal_vae_forward.1} parent=1 // pred_check_branch
      %163 = sbr.rel (0) target = $region57
    $region56: #{multimodal_vae_forward.1} parent=1 // pred_region
      _
    $region57: #{multimodal_vae_forward.1} parent=1 // pred_fallthru
      _
    // Predicated region
    $region58: #{multimodal_vae_forward.1} parent=1 // pred_check
      _
    $region59: #{multimodal_vae_forward.1} parent=1 // pred_check_branch
      %165 = sbr.rel (0) target = $region61
    $region60: #{multimodal_vae_forward.1} parent=1 // pred_region
      _
    $region61: #{multimodal_vae_forward.1} parent=1 // pred_fallthru
      _
    // Predicated region
    $region62: #{multimodal_vae_forward.1} parent=1 // pred_check
      _
    $region63: #{multimodal_vae_forward.1} parent=1 // pred_check_branch
      %167 = sbr.rel (0) target = $region65
    $region64: #{multimodal_vae_forward.1} parent=1 // pred_region
      _
    $region65: #{multimodal_vae_forward.1} parent=1 // pred_fallthru
      _
    // Predicated region
    $region66: #{multimodal_vae_forward.1} parent=1 // pred_check
      _
    $region67: #{multimodal_vae_forward.1} parent=1 // pred_check_branch
      %169 = sbr.rel (0) target = $region69
    $region68: #{multimodal_vae_forward.1} parent=1 // pred_region
      _
    $region69: #{multimodal_vae_forward.1} parent=1 // pred_fallthru
      _
    // Predicated region
    $region70: #{multimodal_vae_forward.1} parent=1 // pred_check
      _
    $region71: #{multimodal_vae_forward.1} parent=1 // pred_check_branch
      %171 = sbr.rel (0) target = $region73
    $region72: #{multimodal_vae_forward.1} parent=1 // pred_region
      _
    $region73: #{multimodal_vae_forward.1} parent=1 // pred_fallthru
      _
    // Predicated region
    $region74: #{multimodal_vae_forward.1} parent=1 // pred_check
      _
    $region75: #{multimodal_vae_forward.1} parent=1 // pred_check_branch
      %173 = sbr.rel (0) target = $region77
    $region76: #{multimodal_vae_forward.1} parent=1 // pred_region
      _
    $region77: #{multimodal_vae_forward.1} parent=1 // pred_fallthru
      _
    // Predicated region
    $region78: #{multimodal_vae_forward.1} parent=1 // pred_check
      _
    $region79: #{multimodal_vae_forward.1} parent=1 // pred_check_branch
      %175 = sbr.rel (0) target = $region81
    $region80: #{multimodal_vae_forward.1} parent=1 // pred_region
      _
    $region81: #{multimodal_vae_forward.1} parent=1 // pred_fallthru
      _
    // Predicated region
    $region82: #{multimodal_vae_forward.1} parent=1 // pred_check
      _
    $region83: #{multimodal_vae_forward.1} parent=1 // pred_check_branch
      %177 = sbr.rel (0) target = $region85
    $region84: #{multimodal_vae_forward.1} parent=1 // pred_region
      _
    $region85: #{multimodal_vae_forward.1} parent=1 // pred_fallthru
      _
    // Predicated region
    $region86: #{multimodal_vae_forward.1} parent=1 // pred_check
      _
    $region87: #{multimodal_vae_forward.1} parent=1 // pred_check_branch
      %179 = sbr.rel (0) target = $region89
    $region88: #{multimodal_vae_forward.1} parent=1 // pred_region
      _
    $region89: #{multimodal_vae_forward.1} parent=1 // pred_fallthru
      _
    // Predicated region
    $region90: #{multimodal_vae_forward.1} parent=1 // pred_check
      _
    $region91: #{multimodal_vae_forward.1} parent=1 // pred_check_branch
      %181 = sbr.rel (0) target = $region93
    $region92: #{multimodal_vae_forward.1} parent=1 // pred_region
      _
    $region93: #{multimodal_vae_forward.1} parent=1 // pred_fallthru
      _
    // Predicated region
    $region94: #{multimodal_vae_forward.1} parent=1 // pred_check
      _
    $region95: #{multimodal_vae_forward.1} parent=1 // pred_check_branch
      %183 = sbr.rel (0) target = $region97
    $region96: #{multimodal_vae_forward.1} parent=1 // pred_region
      _
    $region97: #{multimodal_vae_forward.1} parent=1 // pred_fallthru
      _
    // Predicated region
    $region98: #{multimodal_vae_forward.1} parent=1 // pred_check
      _
    $region99: #{multimodal_vae_forward.1} parent=1 // pred_check_branch
      %185 = sbr.rel (0) target = $region101
    $region100: #{multimodal_vae_forward.1} parent=1 // pred_region
      _
    $region101: #{multimodal_vae_forward.1} parent=1 // pred_fallthru
      _
    // Predicated region
    $region102: #{multimodal_vae_forward.1} parent=1 // pred_check
      _
    $region103: #{multimodal_vae_forward.1} parent=1 // pred_check_branch
      %187 = sbr.rel (0) target = $region105
    $region104: #{multimodal_vae_forward.1} parent=1 // pred_region
      _
    $region105: #{multimodal_vae_forward.1} parent=1 // pred_fallthru
      _
    // Predicated region
    $region106: #{multimodal_vae_forward.1} parent=1 // pred_check
      _
    $region107: #{multimodal_vae_forward.1} parent=1 // pred_check_branch
      %189 = sbr.rel (0) target = $region109
    $region108: #{multimodal_vae_forward.1} parent=1 // pred_region
      _
    $region109: #{multimodal_vae_forward.1} parent=1 // pred_fallthru
      _
    // Predicated region
    $region110: #{multimodal_vae_forward.1} parent=1 // pred_check
      _
    $region111: #{multimodal_vae_forward.1} parent=1 // pred_check_branch
      %191 = sbr.rel (0) target = $region113
    $region112: #{multimodal_vae_forward.1} parent=1 // pred_region
      _
    $region113: #{multimodal_vae_forward.1} parent=1 // pred_fallthru
      _
    // Predicated region
    $region114: #{multimodal_vae_forward.1} parent=1 // pred_check
      _
    $region115: #{multimodal_vae_forward.1} parent=1 // pred_check_branch
      %193 = sbr.rel (0) target = $region117
    $region116: #{multimodal_vae_forward.1} parent=1 // pred_region
      _
    $region117: #{multimodal_vae_forward.1} parent=1 // pred_fallthru
      _
    // Predicated region
    $region118: #{multimodal_vae_forward.1} parent=1 // pred_check
      _
    $region119: #{multimodal_vae_forward.1} parent=1 // pred_check_branch
      %195 = sbr.rel (0) target = $region121
    $region120: #{multimodal_vae_forward.1} parent=1 // pred_region
      _
    $region121: #{multimodal_vae_forward.1} parent=1 // pred_fallthru
      _
    // Predicated region
    $region122: #{multimodal_vae_forward.1} parent=1 // pred_check
      _
    $region123: #{multimodal_vae_forward.1} parent=1 // pred_check_branch
      %197 = sbr.rel (0) target = $region125
    $region124: #{multimodal_vae_forward.1} parent=1 // pred_region
      _
    $region125: #{multimodal_vae_forward.1} parent=1 // pred_fallthru
      _
    // Predicated region
    $region126: #{multimodal_vae_forward.1} parent=1 // pred_check
      _
    $region127: #{multimodal_vae_forward.1} parent=1 // pred_check_branch
      %199 = sbr.rel (0) target = $region129
    $region128: #{multimodal_vae_forward.1} parent=1 // pred_region
      _
    $region129: #{multimodal_vae_forward.1} parent=1 // pred_fallthru
      _
    // Predicated region
    $region130: #{multimodal_vae_forward.1} parent=1 // pred_check
      _
    $region131: #{multimodal_vae_forward.1} parent=1 // pred_check_branch
      %201 = sbr.rel (0) target = $region133
    $region132: #{multimodal_vae_forward.1} parent=1 // pred_region
      _
    $region133: #{multimodal_vae_forward.1} parent=1 // pred_fallthru
      _
    // Predicated region
    $region134: #{multimodal_vae_forward.1} parent=1 // pred_check
      _
    $region135: #{multimodal_vae_forward.1} parent=1 // pred_check_branch
      %203 = sbr.rel (0) target = $region137
    $region136: #{multimodal_vae_forward.1} parent=1 // pred_region
      _
    $region137: #{multimodal_vae_forward.1} parent=1 // pred_fallthru
      _
    // Predicated region
    $region138: #{multimodal_vae_forward.1} parent=1 // pred_check
      _
    $region139: #{multimodal_vae_forward.1} parent=1 // pred_check_branch
      %205 = sbr.rel (0) target = $region141
    $region140: #{multimodal_vae_forward.1} parent=1 // pred_region
      _
    $region141: #{multimodal_vae_forward.1} parent=1 // pred_fallthru
      _
    // Predicated region
    $region142: #{multimodal_vae_forward.1} parent=1 // pred_check
      _
    $region143: #{multimodal_vae_forward.1} parent=1 // pred_check_branch
      %207 = sbr.rel (0) target = $region145
    $region144: #{multimodal_vae_forward.1} parent=1 // pred_region
      _
    $region145: #{multimodal_vae_forward.1} parent=1 // pred_fallthru
      _
    // Predicated region
    $region146: #{multimodal_vae_forward.1} parent=1 // pred_check
      _
    $region147: #{multimodal_vae_forward.1} parent=1 // pred_check_branch
      %209 = sbr.rel (0) target = $region149
    $region148: #{multimodal_vae_forward.1} parent=1 // pred_region
      _
    $region149: #{multimodal_vae_forward.1} parent=1 // pred_fallthru
      _
    // Predicated region
    $region150: #{multimodal_vae_forward.1} parent=1 // pred_check
      _
    $region151: #{multimodal_vae_forward.1} parent=1 // pred_check_branch
      %211 = sbr.rel (0) target = $region153
    $region152: #{multimodal_vae_forward.1} parent=1 // pred_region
      _
    $region153: #{multimodal_vae_forward.1} parent=1 // pred_fallthru
      _
    // Predicated region
    $region154: #{multimodal_vae_forward.1} parent=1 // pred_check
      _
    $region155: #{multimodal_vae_forward.1} parent=1 // pred_check_branch
      %213 = sbr.rel (0) target = $region157
    $region156: #{multimodal_vae_forward.1} parent=1 // pred_region
      %s215 = ssub.s32 16, 16
      %216 = vsyncadd [#allocation3], %s215
      %s218 = sshll.u32 [#allocation2], 4
      %s219 = int_to_ptr.vmem [resolvable:$true] %s218
      %221 = dma.hbm_to_vmem [thread:$0]  %s77, 16, %s219, [#allocation3]
    $region157: #{multimodal_vae_forward.1} parent=1 // pred_fallthru
      _
    // Predicated region
    $region158: #{multimodal_vae_forward.1} parent=1 // pred_check
      _
    $region159: #{multimodal_vae_forward.1} parent=1 // pred_check_branch
      %223 = sbr.rel (0) target = $region161
    $region160: #{multimodal_vae_forward.1} parent=1 // pred_region
      _
    $region161: #{multimodal_vae_forward.1} parent=1 // pred_fallthru
      _
    // Predicated region
    $region162: #{multimodal_vae_forward.1} parent=1 // pred_check
      _
    $region163: #{multimodal_vae_forward.1} parent=1 // pred_check_branch
      %225 = sbr.rel (0) target = $region165
    $region164: #{multimodal_vae_forward.1} parent=1 // pred_region
      _
    $region165: #{multimodal_vae_forward.1} parent=1 // pred_fallthru
      _
    // Predicated region
    $region166: #{multimodal_vae_forward.1} parent=1 // pred_check
      _
    $region167: #{multimodal_vae_forward.1} parent=1 // pred_check_branch
      %227 = sbr.rel (0) target = $region169
    $region168: #{multimodal_vae_forward.1} parent=1 // pred_region
      _
    $region169: #{multimodal_vae_forward.1} parent=1 // pred_fallthru
      _
    // Predicated region
    $region170: #{multimodal_vae_forward.1} parent=1 // pred_check
      _
    $region171: #{multimodal_vae_forward.1} parent=1 // pred_check_branch
      %229 = sbr.rel (0) target = $region173
    $region172: #{multimodal_vae_forward.1} parent=1 // pred_region
      _
    $region173: #{multimodal_vae_forward.1} parent=1 // pred_fallthru
      _
    // Predicated region
    $region174: #{multimodal_vae_forward.1} parent=1 // pred_check
      _
    $region175: #{multimodal_vae_forward.1} parent=1 // pred_check_branch
      %231 = sbr.rel (0) target = $region177
    $region176: #{multimodal_vae_forward.1} parent=1 // pred_region
      %s233 = ssub.s32 16, 16
      %234 = vsyncadd [#allocation6], %s233
      %s236 = sshll.u32 [#allocation5], 4
      %s237 = int_to_ptr.vmem [resolvable:$true] %s236
      %239 = dma.hbm_to_vmem [thread:$0]  %s87, 16, %s237, [#allocation6]
    $region177: #{multimodal_vae_forward.1} parent=1 // pred_fallthru
      _
    // Predicated region
    $region178: #{multimodal_vae_forward.1} parent=1 // pred_check
      _
    $region179: #{multimodal_vae_forward.1} parent=1 // pred_check_branch
      %241 = sbr.rel (0) target = $region181
    $region180: #{multimodal_vae_forward.1} parent=1 // pred_region
      _
    $region181: #{multimodal_vae_forward.1} parent=1 // pred_fallthru
      _
    // Predicated region
    $region182: #{multimodal_vae_forward.1} parent=1 // pred_check
      _
    $region183: #{multimodal_vae_forward.1} parent=1 // pred_check_branch
      %243 = sbr.rel (0) target = $region185
    $region184: #{multimodal_vae_forward.1} parent=1 // pred_region
      %s245 = ssub.s32 16, 16
      %246 = vsyncadd [#allocation6], %s245
      %s248 = sshll.u32 [#allocation7], 4
      %s249 = int_to_ptr.vmem [resolvable:$true] %s248
      %251 = dma.hbm_to_vmem [thread:$0]  %s91, 16, %s249, [#allocation6]
    $region185: #{multimodal_vae_forward.1} parent=1 // pred_fallthru
      _
    // Predicated region
    $region186: #{multimodal_vae_forward.1} parent=1 // pred_check
      _
    $region187: #{multimodal_vae_forward.1} parent=1 // pred_check_branch
      %253 = sbr.rel (0) target = $region189
    $region188: #{multimodal_vae_forward.1} parent=1 // pred_region
      _
    $region189: #{multimodal_vae_forward.1} parent=1 // pred_fallthru
      _
    // Predicated region
    $region190: #{multimodal_vae_forward.1} parent=1 // pred_check
      _
    $region191: #{multimodal_vae_forward.1} parent=1 // pred_check_branch
      %255 = sbr.rel (0) target = $region193
    $region192: #{multimodal_vae_forward.1} parent=1 // pred_region
      _
    $region193: #{multimodal_vae_forward.1} parent=1 // pred_fallthru
      _
    // Predicated region
    $region194: #{multimodal_vae_forward.1} parent=1 // pred_check
      _
    $region195: #{multimodal_vae_forward.1} parent=1 // pred_check_branch
      %257 = sbr.rel (0) target = $region197
    $region196: #{multimodal_vae_forward.1} parent=1 // pred_region
      _
    $region197: #{multimodal_vae_forward.1} parent=1 // pred_fallthru
      _
    // Predicated region
    $region198: #{multimodal_vae_forward.1} parent=1 // pred_check
      _
    $region199: #{multimodal_vae_forward.1} parent=1 // pred_check_branch
      %259 = sbr.rel (0) target = $region201
    $region200: #{multimodal_vae_forward.1} parent=1 // pred_region
      %s261 = ssub.s32 16, 16
      %262 = vsyncadd [#allocation9], %s261
      %s264 = sshll.u32 [#allocation8], 4
      %s265 = int_to_ptr.vmem [resolvable:$true] %s264
      %267 = dma.hbm_to_vmem [thread:$0]  %s99, 16, %s265, [#allocation9]
    $region201: #{multimodal_vae_forward.1} parent=1 // pred_fallthru
      _
    // Predicated region
    $region202: #{multimodal_vae_forward.1} parent=1 // pred_check
      _
    $region203: #{multimodal_vae_forward.1} parent=1 // pred_check_branch
      %269 = sbr.rel (0) target = $region205
    $region204: #{multimodal_vae_forward.1} parent=1 // pred_region
      _
    $region205: #{multimodal_vae_forward.1} parent=1 // pred_fallthru
      _
    // Predicated region
    $region206: #{multimodal_vae_forward.1} parent=1 // pred_check
      _
    $region207: #{multimodal_vae_forward.1} parent=1 // pred_check_branch
      %271 = sbr.rel (0) target = $region209
    $region208: #{multimodal_vae_forward.1} parent=1 // pred_region
      _
    $region209: #{multimodal_vae_forward.1} parent=1 // pred_fallthru
      _
    // Predicated region
    $region210: #{multimodal_vae_forward.1} parent=1 // pred_check
      _
    $region211: #{multimodal_vae_forward.1} parent=1 // pred_check_branch
      %273 = sbr.rel (0) target = $region213
    $region212: #{multimodal_vae_forward.1} parent=1 // pred_region
      _
    $region213: #{multimodal_vae_forward.1} parent=1 // pred_fallthru
      _
    // Predicated region
    $region214: #{multimodal_vae_forward.1} parent=1 // pred_check
      _
    $region215: #{multimodal_vae_forward.1} parent=1 // pred_check_branch
      %275 = sbr.rel (0) target = $region217
    $region216: #{multimodal_vae_forward.1} parent=1 // pred_region
      %s277 = ssub.s32 16, 16
      %278 = vsyncadd [#allocation9], %s277
      %s280 = sshll.u32 [#allocation10], 4
      %s281 = int_to_ptr.vmem [resolvable:$true] %s280
      %283 = dma.hbm_to_vmem [thread:$0]  %s107, 16, %s281, [#allocation9]
    $region217: #{multimodal_vae_forward.1} parent=1 // pred_fallthru
      _
    // Predicated region
    $region218: #{multimodal_vae_forward.1} parent=1 // pred_check
      _
    $region219: #{multimodal_vae_forward.1} parent=1 // pred_check_branch
      %285 = sbr.rel (0) target = $region221
    $region220: #{multimodal_vae_forward.1} parent=1 // pred_region
      _
    $region221: #{multimodal_vae_forward.1} parent=1 // pred_fallthru
      _
    // Predicated region
    $region222: #{multimodal_vae_forward.1} parent=1 // pred_check
      _
    $region223: #{multimodal_vae_forward.1} parent=1 // pred_check_branch
      %287 = sbr.rel (0) target = $region225
    $region224: #{multimodal_vae_forward.1} parent=1 // pred_region
      %s289 = ssub.s32 16, 16
      %290 = vsyncadd [#allocation12], %s289
      %s292 = sshll.u32 [#allocation11], 4
      %s293 = int_to_ptr.vmem [resolvable:$true] %s292
      %295 = dma.hbm_to_vmem [thread:$0]  %s111, 16, %s293, [#allocation12]
    $region225: #{multimodal_vae_forward.1} parent=1 // pred_fallthru
      _
    // Predicated region
    $region226: #{multimodal_vae_forward.1} parent=1 // pred_check
      _
    $region227: #{multimodal_vae_forward.1} parent=1 // pred_check_branch
      %297 = sbr.rel (0) target = $region229
    $region228: #{multimodal_vae_forward.1} parent=1 // pred_region
      %298 = dma.done [#allocation3], 16
    $region229: #{multimodal_vae_forward.1} parent=1 // pred_fallthru
      _
    // Predicated region
    $region230: #{multimodal_vae_forward.1} parent=1 // pred_check
      _
    $region231: #{multimodal_vae_forward.1} parent=1 // pred_check_branch
      %300 = sbr.rel (0) target = $region233
    $region232: #{multimodal_vae_forward.1} parent=1 // pred_region
      %301 = dma.done [#allocation6], 16
    $region233: #{multimodal_vae_forward.1} parent=1 // pred_fallthru
      _
    // Predicated region
    $region234: #{multimodal_vae_forward.1} parent=1 // pred_check
      _
    $region235: #{multimodal_vae_forward.1} parent=1 // pred_check_branch
      %303 = sbr.rel (0) target = $region237
    $region236: #{multimodal_vae_forward.1} parent=1 // pred_region
      %304 = dma.done [#allocation6], 16
    $region237: #{multimodal_vae_forward.1} parent=1 // pred_fallthru
      _
    // Predicated region
    $region238: #{multimodal_vae_forward.1} parent=1 // pred_check
      _
    $region239: #{multimodal_vae_forward.1} parent=1 // pred_check_branch
      %306 = sbr.rel (0) target = $region241
    $region240: #{multimodal_vae_forward.1} parent=1 // pred_region
      %307 = dma.done [#allocation9], 16
    $region241: #{multimodal_vae_forward.1} parent=1 // pred_fallthru
      _
    // Predicated region
    $region242: #{multimodal_vae_forward.1} parent=1 // pred_check
      _
    $region243: #{multimodal_vae_forward.1} parent=1 // pred_check_branch
      %309 = sbr.rel (0) target = $region245
    $region244: #{multimodal_vae_forward.1} parent=1 // pred_region
      %310 = dma.done [#allocation9], 16
    $region245: #{multimodal_vae_forward.1} parent=1 // pred_fallthru
      _
    // Predicated region
    $region246: #{multimodal_vae_forward.1} parent=1 // pred_check
      _
    $region247: #{multimodal_vae_forward.1} parent=1 // pred_check_branch
      %312 = sbr.rel (0) target = $region249
    $region248: #{multimodal_vae_forward.1} parent=1 // pred_region
      %313 = dma.done [#allocation12], 16
    $region249: #{multimodal_vae_forward.1} parent=1 // pred_fallthru
      _
    %v314 = vld [vmem:[%s1] sm:$0xff]
    %v315 = vld [vmem:[%s9] sm:$0xff]
    %v316 = vld [vmem:[%s9 + $0x8] sm:$0xff]
    %v317 = vld [vmem:[%s9 + $0x10] sm:$0xff]
    %v318 = vld [vmem:[%s9 + $0x18] sm:$0xff]
    %v319 = vld [vmem:[%s9 + $0x20] sm:$0xff]
    %v320 = vld [vmem:[%s9 + $0x28] sm:$0xff]
    %v321 = vld [vmem:[%s9 + $0x30] sm:$0xff]
    %v322 = vld [vmem:[%s9 + $0x38] sm:$0xff]
    %v323 = vld [vmem:[%s9 + $0x40] sm:$0xff]
    %v324 = vld [vmem:[%s9 + $0x48] sm:$0xff]
    %v325 = vld [vmem:[%s9 + $0x50] sm:$0xff]
    %v326 = vld [vmem:[%s9 + $0x58] sm:$0xff]
    %v327 = vld [vmem:[%s9 + $0x60] sm:$0xff]
    %v328 = vld [vmem:[%s9 + $0x68] sm:$0xff]
    %v329 = vld [vmem:[%s9 + $0x70] sm:$0xff]
    %v330 = vld [vmem:[%s9 + $0x78] sm:$0xff]
    %v331 = vld [vmem:[%s9 + $0x80] sm:$0xff]
    %v332 = vld [vmem:[%s9 + $0x88] sm:$0xff]
    %v333 = vld [vmem:[%s9 + $0x90] sm:$0xff]
    %v334 = vld [vmem:[%s9 + $0x98] sm:$0xff]
    %v335 = vld [vmem:[%s9 + $0xa0] sm:$0xff]
    %v336 = vld [vmem:[%s9 + $0xa8] sm:$0xff]
    %v337 = vld [vmem:[%s9 + $0xb0] sm:$0xff]
    %v338 = vld [vmem:[%s9 + $0xb8] sm:$0xff]
    %v339 = vld [vmem:[%s9 + $0xc0] sm:$0xff]
    %v340 = vld [vmem:[%s9 + $0xc8] sm:$0xff]
    %v341 = vld [vmem:[%s9 + $0xd0] sm:$0xff]
    %v342 = vld [vmem:[%s9 + $0xd8] sm:$0xff]
    %v343 = vld [vmem:[%s9 + $0xe0] sm:$0xff]
    %v344 = vld [vmem:[%s9 + $0xe8] sm:$0xff]
    %v345 = vld [vmem:[%s9 + $0xf0] sm:$0xff]
    %v346 = vld [vmem:[%s9 + $0xf8] sm:$0xff]
    %v347 = vld [vmem:[%s9 + $0x100] sm:$0xff]
    %v348 = vld [vmem:[%s9 + $0x108] sm:$0xff]
    %v349 = vld [vmem:[%s9 + $0x110] sm:$0xff]
    %v350 = vld [vmem:[%s9 + $0x118] sm:$0xff]
    %v351 = vld [vmem:[%s9 + $0x120] sm:$0xff]
    %v352 = vld [vmem:[%s9 + $0x128] sm:$0xff]
    %v353 = vld [vmem:[%s9 + $0x130] sm:$0xff]
    %v354 = vld [vmem:[%s9 + $0x138] sm:$0xff]
    %v355 = vld [vmem:[%s9 + $0x140] sm:$0xff]
    %v356 = vld [vmem:[%s9 + $0x148] sm:$0xff]
    %v357 = vld [vmem:[%s9 + $0x150] sm:$0xff]
    %v358 = vld [vmem:[%s9 + $0x158] sm:$0xff]
    %v359 = vld [vmem:[%s9 + $0x160] sm:$0xff]
    %v360 = vld [vmem:[%s9 + $0x168] sm:$0xff]
    %v361 = vld [vmem:[%s9 + $0x170] sm:$0xff]
    %v362 = vld [vmem:[%s9 + $0x178] sm:$0xff]
    %v363 = vld [vmem:[%s9 + $0x180] sm:$0xff]
    %v364 = vld [vmem:[%s9 + $0x188] sm:$0xff]
    %v365 = vld [vmem:[%s9 + $0x190] sm:$0xff]
    %v366 = vld [vmem:[%s9 + $0x198] sm:$0xff]
    %v367 = vld [vmem:[%s9 + $0x1a0] sm:$0xff]
    %v368 = vld [vmem:[%s9 + $0x1a8] sm:$0xff]
    %v369 = vld [vmem:[%s9 + $0x1b0] sm:$0xff]
    %v370 = vld [vmem:[%s9 + $0x1b8] sm:$0xff]
    %v371 = vld [vmem:[%s9 + $0x1c0] sm:$0xff]
    %v372 = vld [vmem:[%s9 + $0x1c8] sm:$0xff]
    %v373 = vld [vmem:[%s9 + $0x1d0] sm:$0xff]
    %v374 = vld [vmem:[%s9 + $0x1d8] sm:$0xff]
    %v375 = vld [vmem:[%s9 + $0x1e0] sm:$0xff]
    %v376 = vld [vmem:[%s9 + $0x1e8] sm:$0xff]
    %v377 = vld [vmem:[%s9 + $0x1f0] sm:$0xff]
    %v378 = vld [vmem:[%s9 + $0x1f8] sm:$0xff]
    %v379 = vld [vmem:[%s11] sm:$0x1]
    %v381 = vlaneseq
    %v382 = vshrl.u32 %v381, 7
    %v383 = vsub.s32 0, %v382
    %v384 = vrot.slane %v379, %v383
    %v387 = vcombine.high %v314, %v314
    %v389 = vunpack.c.l.s4 1983009808
    %v390 = vunpack.c.0.s8 %v389
    %v391 = vlaneseq
    %v392 = vshrl.u32 %v391, 7
    %v393 = vsub.s32 %v390, %v392
    %v394 = vrot.slane %v314, %v393
    %v396 = vunpack.c.l.s4 1983009808
    %v397 = vunpack.c.0.s8 %v396
    %v398 = vlaneseq
    %v399 = vshrl.u32 %v398, 7
    %v400 = vsub.s32 %v397, %v399
    %v401 = vrot.slane %v387, %v400
    %v402 = vcombine.high %v394, %v394
    %v403 = vcombine.high %v401, %v401
    %408 = vmatprep.subr.mxu0 0.0
    %409 = vmatpush1.msra.mxu0 %v315
    %410 = vmatprep.subr.mxu0 0.0
    %411 = vmatpush1.msra.mxu0 %v316
    %412 = vmatprep.subr.mxu0 0.0
    %413 = vmatpush1.msra.mxu0 %v317
    %414 = vmatprep.subr.mxu0 0.0
    %415 = vmatpush1.msra.mxu0 %v318
    %416 = vmatprep.subr.mxu0 0.0
    %417 = vmatpush1.msra.mxu0 %v319
    %418 = vmatprep.subr.mxu0 0.0
    %419 = vmatpush1.msra.mxu0 %v320
    %420 = vmatprep.subr.mxu0 0.0
    %421 = vmatpush1.msra.mxu0 %v321
    %422 = vmatprep.subr.mxu0 0.0
    %423 = vmatpush1.msra.mxu0 %v322
    %424 = vmatprep.subr.mxu0 0.0
    %425 = vmatpush1.msra.mxu0 %v323
    %426 = vmatprep.subr.mxu0 0.0
    %427 = vmatpush1.msra.mxu0 %v324
    %428 = vmatprep.subr.mxu0 0.0
    %429 = vmatpush1.msra.mxu0 %v325
    %430 = vmatprep.subr.mxu0 0.0
    %431 = vmatpush1.msra.mxu0 %v326
    %432 = vmatprep.subr.mxu0 0.0
    %433 = vmatpush1.msra.mxu0 %v327
    %434 = vmatprep.subr.mxu0 0.0
    %435 = vmatpush1.msra.mxu0 %v328
    %436 = vmatprep.subr.mxu0 0.0
    %437 = vmatpush1.msra.mxu0 %v329
    %438 = vmatprep.subr.mxu0 0.0
    %439 = vmatpush1.msra.mxu0 %v330
    %440 = vmatprep.subr.mxu0 0.0
    %441 = vmatpush1.msra.mxu0 %v331
    %442 = vmatprep.subr.mxu0 0.0
    %443 = vmatpush1.msra.mxu0 %v332
    %444 = vmatprep.subr.mxu0 0.0
    %445 = vmatpush1.msra.mxu0 %v333
    %446 = vmatprep.subr.mxu0 0.0
    %447 = vmatpush1.msra.mxu0 %v334
    %448 = vmatprep.subr.mxu0 0.0
    %449 = vmatpush1.msra.mxu0 %v335
    %450 = vmatprep.subr.mxu0 0.0
    %451 = vmatpush1.msra.mxu0 %v336
    %452 = vmatprep.subr.mxu0 0.0
    %453 = vmatpush1.msra.mxu0 %v337
    %454 = vmatprep.subr.mxu0 0.0
    %455 = vmatpush1.msra.mxu0 %v338
    %456 = vmatprep.subr.mxu0 0.0
    %457 = vmatpush1.msra.mxu0 %v339
    %458 = vmatprep.subr.mxu0 0.0
    %459 = vmatpush1.msra.mxu0 %v340
    %460 = vmatprep.subr.mxu0 0.0
    %461 = vmatpush1.msra.mxu0 %v341
    %462 = vmatprep.subr.mxu0 0.0
    %463 = vmatpush1.msra.mxu0 %v342
    %464 = vmatprep.subr.mxu0 0.0
    %465 = vmatpush1.msra.mxu0 %v343
    %466 = vmatprep.subr.mxu0 0.0
    %467 = vmatpush1.msra.mxu0 %v344
    %468 = vmatprep.subr.mxu0 0.0
    %469 = vmatpush1.msra.mxu0 %v345
    %470 = vmatprep.subr.mxu0 0.0
    %471 = vmatpush1.msra.mxu0 %v346
    %472 = vmatprep.mubr.f32.mxu0 %v402
    %473 = vmatmul.mubr.f32.gmra.mrb[0].mxu0 %v394
    %v474 = vpop.f32.mrb[0].mxu0
    %v475 = vadd.f32 %v384, %v474
    %v476 = vpop.f32.mrb[0].mxu0
    %477 = vdwg.mxu0
    %478 = vmatprep.subr.mxu0 0.0
    %479 = vmatpush1.msra.mxu0 %v347
    %480 = vmatprep.subr.mxu0 0.0
    %481 = vmatpush1.msra.mxu0 %v348
    %482 = vmatprep.subr.mxu0 0.0
    %483 = vmatpush1.msra.mxu0 %v349
    %484 = vmatprep.subr.mxu0 0.0
    %485 = vmatpush1.msra.mxu0 %v350
    %486 = vmatprep.subr.mxu0 0.0
    %487 = vmatpush1.msra.mxu0 %v351
    %488 = vmatprep.subr.mxu0 0.0
    %489 = vmatpush1.msra.mxu0 %v352
    %490 = vmatprep.subr.mxu0 0.0
    %491 = vmatpush1.msra.mxu0 %v353
    %492 = vmatprep.subr.mxu0 0.0
    %493 = vmatpush1.msra.mxu0 %v354
    %494 = vmatprep.subr.mxu0 0.0
    %495 = vmatpush1.msra.mxu0 %v355
    %496 = vmatprep.subr.mxu0 0.0
    %497 = vmatpush1.msra.mxu0 %v356
    %498 = vmatprep.subr.mxu0 0.0
    %499 = vmatpush1.msra.mxu0 %v357
    %500 = vmatprep.subr.mxu0 0.0
    %501 = vmatpush1.msra.mxu0 %v358
    %502 = vmatprep.subr.mxu0 0.0
    %503 = vmatpush1.msra.mxu0 %v359
    %504 = vmatprep.subr.mxu0 0.0
    %505 = vmatpush1.msra.mxu0 %v360
    %506 = vmatprep.subr.mxu0 0.0
    %507 = vmatpush1.msra.mxu0 %v361
    %508 = vmatprep.subr.mxu0 0.0
    %509 = vmatpush1.msra.mxu0 %v362
    %510 = vmatprep.subr.mxu0 0.0
    %511 = vmatpush1.msra.mxu0 %v363
    %512 = vmatprep.subr.mxu0 0.0
    %513 = vmatpush1.msra.mxu0 %v364
    %514 = vmatprep.subr.mxu0 0.0
    %515 = vmatpush1.msra.mxu0 %v365
    %516 = vmatprep.subr.mxu0 0.0
    %517 = vmatpush1.msra.mxu0 %v366
    %518 = vmatprep.subr.mxu0 0.0
    %519 = vmatpush1.msra.mxu0 %v367
    %520 = vmatprep.subr.mxu0 0.0
    %521 = vmatpush1.msra.mxu0 %v368
    %522 = vmatprep.subr.mxu0 0.0
    %523 = vmatpush1.msra.mxu0 %v369
    %524 = vmatprep.subr.mxu0 0.0
    %525 = vmatpush1.msra.mxu0 %v370
    %526 = vmatprep.subr.mxu0 0.0
    %527 = vmatpush1.msra.mxu0 %v371
    %528 = vmatprep.subr.mxu0 0.0
    %529 = vmatpush1.msra.mxu0 %v372
    %530 = vmatprep.subr.mxu0 0.0
    %531 = vmatpush1.msra.mxu0 %v373
    %532 = vmatprep.subr.mxu0 0.0
    %533 = vmatpush1.msra.mxu0 %v374
    %534 = vmatprep.subr.mxu0 0.0
    %535 = vmatpush1.msra.mxu0 %v375
    %536 = vmatprep.subr.mxu0 0.0
    %537 = vmatpush1.msra.mxu0 %v376
    %538 = vmatprep.subr.mxu0 0.0
    %539 = vmatpush1.msra.mxu0 %v377
    %540 = vmatprep.subr.mxu0 0.0
    %541 = vmatpush1.msra.mxu0 %v378
    %542 = vmatprep.mubr.f32.mxu0 %v403
    %543 = vmatmul.mubr.f32.gmra.mrb[0].mxu0 %v401
    %v544 = vpop.f32.mrb[0].mxu0
    %v545 = vadd.f32 %v475, %v544
    %v546 = vpop.f32.mrb[0].mxu0
    %547 = vdwg.mxu0
    %v548 = vmax.f32 %v545, 0.0
    %v549 = vld [vmem:[%s13] sm:$0xff]
    %v550 = vld [vmem:[%s13 + $0x8] sm:$0xff]
    %v551 = vld [vmem:[%s13 + $0x10] sm:$0xff]
    %v552 = vld [vmem:[%s13 + $0x18] sm:$0xff]
    %v553 = vld [vmem:[%s13 + $0x20] sm:$0xff]
    %v554 = vld [vmem:[%s13 + $0x28] sm:$0xff]
    %v555 = vld [vmem:[%s13 + $0x30] sm:$0xff]
    %v556 = vld [vmem:[%s13 + $0x38] sm:$0xff]
    %v557 = vld [vmem:[%s15] sm:$0x1]
    %v559 = vlaneseq
    %v560 = vshrl.u32 %v559, 7
    %v561 = vsub.s32 0, %v560
    %v562 = vrot.slane %v557, %v561
    %vm564 = vcmask 523264
    %v566 = vsel %vm564, %v548, 0
    %568 = vmatprep.subr.mxu0 0.0
    %569 = vmatpush1.msra.mxu0 %v549
    %570 = vmatprep.subr.mxu0 0.0
    %571 = vmatpush1.msra.mxu0 %v550
    %572 = vmatprep.subr.mxu0 0.0
    %573 = vmatpush1.msra.mxu0 %v551
    %574 = vmatprep.subr.mxu0 0.0
    %575 = vmatpush1.msra.mxu0 %v552
    %576 = vmatprep.subr.mxu0 0.0
    %577 = vmatpush1.msra.mxu0 %v553
    %578 = vmatprep.subr.mxu0 0.0
    %579 = vmatpush1.msra.mxu0 %v554
    %580 = vmatprep.subr.mxu0 0.0
    %581 = vmatpush1.msra.mxu0 %v555
    %582 = vmatprep.subr.mxu0 0.0
    %583 = vmatpush1.msra.mxu0 %v556
    %584 = vmatprep.subr.mxu0 0.0
    %585 = vmatpush1.msra.mxu0 0.0
    %586 = vmatprep.subr.mxu0 0.0
    %587 = vmatpush1.msra.mxu0 0.0
    %588 = vmatprep.subr.mxu0 0.0
    %589 = vmatpush1.msra.mxu0 0.0
    %590 = vmatprep.subr.mxu0 0.0
    %591 = vmatpush1.msra.mxu0 0.0
    %592 = vmatprep.subr.mxu0 0.0
    %593 = vmatpush1.msra.mxu0 0.0
    %594 = vmatprep.subr.mxu0 0.0
    %595 = vmatpush1.msra.mxu0 0.0
    %596 = vmatprep.subr.mxu0 0.0
    %597 = vmatpush1.msra.mxu0 0.0
    %598 = vmatprep.subr.mxu0 0.0
    %599 = vmatpush1.msra.mxu0 0.0
    %600 = vmatprep.subr.mxu0 0.0
    %601 = vmatpush1.msra.mxu0 0.0
    %602 = vmatprep.subr.mxu0 0.0
    %603 = vmatpush1.msra.mxu0 0.0
    %604 = vmatprep.subr.mxu0 0.0
    %605 = vmatpush1.msra.mxu0 0.0
    %606 = vmatprep.subr.mxu0 0.0
    %607 = vmatpush1.msra.mxu0 0.0
    %608 = vmatprep.subr.mxu0 0.0
    %609 = vmatpush1.msra.mxu0 0.0
    %610 = vmatprep.subr.mxu0 0.0
    %611 = vmatpush1.msra.mxu0 0.0
    %612 = vmatprep.subr.mxu0 0.0
    %613 = vmatpush1.msra.mxu0 0.0
    %614 = vmatprep.subr.mxu0 0.0
    %615 = vmatpush1.msra.mxu0 0.0
    %616 = vmatprep.subr.mxu0 0.0
    %617 = vmatpush1.msra.mxu0 0.0
    %618 = vmatprep.subr.mxu0 0.0
    %619 = vmatpush1.msra.mxu0 0.0
    %620 = vmatprep.subr.mxu0 0.0
    %621 = vmatpush1.msra.mxu0 0.0
    %622 = vmatprep.subr.mxu0 0.0
    %623 = vmatpush1.msra.mxu0 0.0
    %624 = vmatprep.subr.mxu0 0.0
    %625 = vmatpush1.msra.mxu0 0.0
    %626 = vmatprep.subr.mxu0 0.0
    %627 = vmatpush1.msra.mxu0 0.0
    %628 = vmatprep.subr.mxu0 0.0
    %629 = vmatpush1.msra.mxu0 0.0
    %630 = vmatprep.subr.mxu0 0.0
    %631 = vmatpush1.msra.mxu0 0.0
    %632 = vmatprep.mubr.f32.mxu0 0.0
    %633 = vmatmul.mubr.f32.gmra.mrb[0].mxu0 %v566
    %v634 = vpop.f32.mrb[0].mxu0
    %v635 = vadd.f32 %v562, %v634
    %v636 = vpop.f32.mrb[0].mxu0
    %637 = vdwg.mxu0
    %v638 = vld [vmem:[%s17] sm:$0xff]
    %v639 = vld [vmem:[%s17 + $0x8] sm:$0xff]
    %v640 = vld [vmem:[%s17 + $0x10] sm:$0xff]
    %v641 = vld [vmem:[%s17 + $0x18] sm:$0xff]
    %v642 = vld [vmem:[%s17 + $0x20] sm:$0xff]
    %v643 = vld [vmem:[%s17 + $0x28] sm:$0xff]
    %v644 = vld [vmem:[%s17 + $0x30] sm:$0xff]
    %v645 = vld [vmem:[%s17 + $0x38] sm:$0xff]
    %v646 = vld [vmem:[%s19] sm:$0x1]
    %v648 = vlaneseq
    %v649 = vshrl.u32 %v648, 7
    %v650 = vsub.s32 0, %v649
    %v651 = vrot.slane %v646, %v650
    %653 = vmatprep.subr.mxu0 0.0
    %654 = vmatpush1.msra.mxu0 %v638
    %655 = vmatprep.subr.mxu0 0.0
    %656 = vmatpush1.msra.mxu0 %v639
    %657 = vmatprep.subr.mxu0 0.0
    %658 = vmatpush1.msra.mxu0 %v640
    %659 = vmatprep.subr.mxu0 0.0
    %660 = vmatpush1.msra.mxu0 %v641
    %661 = vmatprep.subr.mxu0 0.0
    %662 = vmatpush1.msra.mxu0 %v642
    %663 = vmatprep.subr.mxu0 0.0
    %664 = vmatpush1.msra.mxu0 %v643
    %665 = vmatprep.subr.mxu0 0.0
    %666 = vmatpush1.msra.mxu0 %v644
    %667 = vmatprep.subr.mxu0 0.0
    %668 = vmatpush1.msra.mxu0 %v645
    %669 = vmatprep.subr.mxu0 0.0
    %670 = vmatpush1.msra.mxu0 0.0
    %671 = vmatprep.subr.mxu0 0.0
    %672 = vmatpush1.msra.mxu0 0.0
    %673 = vmatprep.subr.mxu0 0.0
    %674 = vmatpush1.msra.mxu0 0.0
    %675 = vmatprep.subr.mxu0 0.0
    %676 = vmatpush1.msra.mxu0 0.0
    %677 = vmatprep.subr.mxu0 0.0
    %678 = vmatpush1.msra.mxu0 0.0
    %679 = vmatprep.subr.mxu0 0.0
    %680 = vmatpush1.msra.mxu0 0.0
    %681 = vmatprep.subr.mxu0 0.0
    %682 = vmatpush1.msra.mxu0 0.0
    %683 = vmatprep.subr.mxu0 0.0
    %684 = vmatpush1.msra.mxu0 0.0
    %685 = vmatprep.subr.mxu0 0.0
    %686 = vmatpush1.msra.mxu0 0.0
    %687 = vmatprep.subr.mxu0 0.0
    %688 = vmatpush1.msra.mxu0 0.0
    %689 = vmatprep.subr.mxu0 0.0
    %690 = vmatpush1.msra.mxu0 0.0
    %691 = vmatprep.subr.mxu0 0.0
    %692 = vmatpush1.msra.mxu0 0.0
    %693 = vmatprep.subr.mxu0 0.0
    %694 = vmatpush1.msra.mxu0 0.0
    %695 = vmatprep.subr.mxu0 0.0
    %696 = vmatpush1.msra.mxu0 0.0
    %697 = vmatprep.subr.mxu0 0.0
    %698 = vmatpush1.msra.mxu0 0.0
    %699 = vmatprep.subr.mxu0 0.0
    %700 = vmatpush1.msra.mxu0 0.0
    %701 = vmatprep.subr.mxu0 0.0
    %702 = vmatpush1.msra.mxu0 0.0
    %703 = vmatprep.subr.mxu0 0.0
    %704 = vmatpush1.msra.mxu0 0.0
    %705 = vmatprep.subr.mxu0 0.0
    %706 = vmatpush1.msra.mxu0 0.0
    %707 = vmatprep.subr.mxu0 0.0
    %708 = vmatpush1.msra.mxu0 0.0
    %709 = vmatprep.subr.mxu0 0.0
    %710 = vmatpush1.msra.mxu0 0.0
    %711 = vmatprep.subr.mxu0 0.0
    %712 = vmatpush1.msra.mxu0 0.0
    %713 = vmatprep.subr.mxu0 0.0
    %714 = vmatpush1.msra.mxu0 0.0
    %715 = vmatprep.subr.mxu0 0.0
    %716 = vmatpush1.msra.mxu0 0.0
    %717 = vmatprep.mubr.f32.mxu0 0.0
    %718 = vmatmul.mubr.f32.gmra.mrb[0].mxu0 %v566
    %v719 = vpop.f32.mrb[0].mxu0
    %v720 = vadd.f32 %v651, %v719
    %v721 = vpop.f32.mrb[0].mxu0
    %722 = vdwg.mxu0
    %v723 = vld [vmem:[%s3] sm:$0xff]
    %v724 = vld [vmem:[%s3 + $0x8] sm:$0xf]
    %v725 = vld [vmem:[%s21] sm:$0xff]
    %v726 = vld [vmem:[%s21 + $0x8] sm:$0xff]
    %v727 = vld [vmem:[%s21 + $0x10] sm:$0xff]
    %v728 = vld [vmem:[%s21 + $0x18] sm:$0xff]
    %v729 = vld [vmem:[%s21 + $0x20] sm:$0xff]
    %v730 = vld [vmem:[%s21 + $0x28] sm:$0xff]
    %v731 = vld [vmem:[%s21 + $0x30] sm:$0xff]
    %v732 = vld [vmem:[%s21 + $0x38] sm:$0xff]
    %v733 = vld [vmem:[%s21 + $0x40] sm:$0xff]
    %v734 = vld [vmem:[%s21 + $0x48] sm:$0xff]
    %v735 = vld [vmem:[%s21 + $0x50] sm:$0xff]
    %v736 = vld [vmem:[%s21 + $0x58] sm:$0xff]
    %v737 = vld [vmem:[%s21 + $0x60] sm:$0xff]
    %v738 = vld [vmem:[%s21 + $0x68] sm:$0xff]
    %v739 = vld [vmem:[%s21 + $0x70] sm:$0xff]
    %v740 = vld [vmem:[%s21 + $0x78] sm:$0xff]
    %v741 = vld [vmem:[%s21 + $0x80] sm:$0xff]
    %v742 = vld [vmem:[%s21 + $0x88] sm:$0xff]
    %v743 = vld [vmem:[%s21 + $0x90] sm:$0xff]
    %v744 = vld [vmem:[%s21 + $0x98] sm:$0xff]
    %v745 = vld [vmem:[%s21 + $0xa0] sm:$0xff]
    %v746 = vld [vmem:[%s21 + $0xa8] sm:$0xff]
    %v747 = vld [vmem:[%s21 + $0xb0] sm:$0xff]
    %v748 = vld [vmem:[%s21 + $0xb8] sm:$0xff]
    %v749 = vld [vmem:[%s21 + $0xc0] sm:$0xff]
    %v750 = vld [vmem:[%s21 + $0xc8] sm:$0xff]
    %v751 = vld [vmem:[%s21 + $0xd0] sm:$0xff]
    %v752 = vld [vmem:[%s21 + $0xd8] sm:$0xff]
    %v753 = vld [vmem:[%s21 + $0xe0] sm:$0xff]
    %v754 = vld [vmem:[%s21 + $0xe8] sm:$0xff]
    %v755 = vld [vmem:[%s21 + $0xf0] sm:$0xff]
    %v756 = vld [vmem:[%s21 + $0xf8] sm:$0xff]
    %v757 = vld [vmem:[%s21 + $0x100] sm:$0xff]
    %v758 = vld [vmem:[%s21 + $0x108] sm:$0xff]
    %v759 = vld [vmem:[%s21 + $0x110] sm:$0xff]
    %v760 = vld [vmem:[%s21 + $0x118] sm:$0xff]
    %v761 = vld [vmem:[%s21 + $0x120] sm:$0xff]
    %v762 = vld [vmem:[%s21 + $0x128] sm:$0xff]
    %v763 = vld [vmem:[%s21 + $0x130] sm:$0xff]
    %v764 = vld [vmem:[%s21 + $0x138] sm:$0xff]
    %v765 = vld [vmem:[%s21 + $0x140] sm:$0xff]
    %v766 = vld [vmem:[%s21 + $0x148] sm:$0xff]
    %v767 = vld [vmem:[%s21 + $0x150] sm:$0xff]
    %v768 = vld [vmem:[%s21 + $0x158] sm:$0xff]
    %v769 = vld [vmem:[%s21 + $0x160] sm:$0xff]
    %v770 = vld [vmem:[%s21 + $0x168] sm:$0xff]
    %v771 = vld [vmem:[%s21 + $0x170] sm:$0xff]
    %v772 = vld [vmem:[%s21 + $0x178] sm:$0xff]
    %v773 = vld [vmem:[%s21 + $0x180] sm:$0xff]
    %v774 = vld [vmem:[%s21 + $0x188] sm:$0xff]
    %v775 = vld [vmem:[%s21 + $0x190] sm:$0xff]
    %v776 = vld [vmem:[%s21 + $0x198] sm:$0xff]
    %v777 = vld [vmem:[%s21 + $0x1a0] sm:$0xff]
    %v778 = vld [vmem:[%s21 + $0x1a8] sm:$0xff]
    %v779 = vld [vmem:[%s21 + $0x1b0] sm:$0xff]
    %v780 = vld [vmem:[%s21 + $0x1b8] sm:$0xff]
    %v781 = vld [vmem:[%s21 + $0x1c0] sm:$0xff]
    %v782 = vld [vmem:[%s21 + $0x1c8] sm:$0xff]
    %v783 = vld [vmem:[%s21 + $0x1d0] sm:$0xff]
    %v784 = vld [vmem:[%s21 + $0x1d8] sm:$0xff]
    %v785 = vld [vmem:[%s21 + $0x1e0] sm:$0xff]
    %v786 = vld [vmem:[%s21 + $0x1e8] sm:$0xff]
    %v787 = vld [vmem:[%s21 + $0x1f0] sm:$0xff]
    %v788 = vld [vmem:[%s21 + $0x1f8] sm:$0xff]
    %v789 = vld [vmem:[%s21 + $0x200] sm:$0xff]
    %v790 = vld [vmem:[%s21 + $0x208] sm:$0xff]
    %v791 = vld [vmem:[%s21 + $0x210] sm:$0xff]
    %v792 = vld [vmem:[%s21 + $0x218] sm:$0xff]
    %v793 = vld [vmem:[%s21 + $0x220] sm:$0xff]
    %v794 = vld [vmem:[%s21 + $0x228] sm:$0xff]
    %v795 = vld [vmem:[%s21 + $0x230] sm:$0xff]
    %v796 = vld [vmem:[%s21 + $0x238] sm:$0xff]
    %v797 = vld [vmem:[%s21 + $0x240] sm:$0xff]
    %v798 = vld [vmem:[%s21 + $0x248] sm:$0xff]
    %v799 = vld [vmem:[%s21 + $0x250] sm:$0xff]
    %v800 = vld [vmem:[%s21 + $0x258] sm:$0xff]
    %v801 = vld [vmem:[%s21 + $0x260] sm:$0xff]
    %v802 = vld [vmem:[%s21 + $0x268] sm:$0xff]
    %v803 = vld [vmem:[%s21 + $0x270] sm:$0xff]
    %v804 = vld [vmem:[%s21 + $0x278] sm:$0xff]
    %v805 = vld [vmem:[%s21 + $0x280] sm:$0xff]
    %v806 = vld [vmem:[%s21 + $0x288] sm:$0xff]
    %v807 = vld [vmem:[%s21 + $0x290] sm:$0xff]
    %v808 = vld [vmem:[%s21 + $0x298] sm:$0xff]
    %v809 = vld [vmem:[%s21 + $0x2a0] sm:$0xff]
    %v810 = vld [vmem:[%s21 + $0x2a8] sm:$0xff]
    %v811 = vld [vmem:[%s21 + $0x2b0] sm:$0xff]
    %v812 = vld [vmem:[%s21 + $0x2b8] sm:$0xff]
    %v813 = vld [vmem:[%s21 + $0x2c0] sm:$0xff]
    %v814 = vld [vmem:[%s21 + $0x2c8] sm:$0xff]
    %v815 = vld [vmem:[%s21 + $0x2d0] sm:$0xff]
    %v816 = vld [vmem:[%s21 + $0x2d8] sm:$0xff]
    %v817 = vld [vmem:[%s21 + $0x2e0] sm:$0xff]
    %v818 = vld [vmem:[%s21 + $0x2e8] sm:$0xff]
    %v819 = vld [vmem:[%s21 + $0x2f0] sm:$0xff]
    %v820 = vld [vmem:[%s21 + $0x2f8] sm:$0xff]
    %v821 = vld [vmem:[%s23] sm:$0x1]
    %v823 = vlaneseq
    %v824 = vshrl.u32 %v823, 7
    %v825 = vsub.s32 0, %v824
    %v826 = vrot.slane %v821, %v825
    %v830 = vcombine.high %v723, %v723
    %v832 = vunpack.c.l.s4 1983009808
    %v833 = vunpack.c.0.s8 %v832
    %v834 = vlaneseq
    %v835 = vshrl.u32 %v834, 7
    %v836 = vsub.s32 %v833, %v835
    %v837 = vrot.slane %v723, %v836
    %v839 = vunpack.c.l.s4 1983009808
    %v840 = vunpack.c.0.s8 %v839
    %v841 = vlaneseq
    %v842 = vshrl.u32 %v841, 7
    %v843 = vsub.s32 %v840, %v842
    %v844 = vrot.slane %v830, %v843
    %v845 = vcombine.high %v837, %v837
    %v846 = vcombine.high %v844, %v844
    %v848 = vunpack.c.l.s4 1983009808
    %v849 = vunpack.c.0.s8 %v848
    %v850 = vlaneseq
    %v851 = vshrl.u32 %v850, 7
    %v852 = vsub.s32 %v849, %v851
    %v853 = vrot.slane %v724, %v852
    %v854 = vcombine.high %v853, %v853
    %861 = vmatprep.subr.mxu0 0.0
    %862 = vmatpush1.msra.mxu0 %v725
    %863 = vmatprep.subr.mxu0 0.0
    %864 = vmatpush1.msra.mxu0 %v726
    %865 = vmatprep.subr.mxu0 0.0
    %866 = vmatpush1.msra.mxu0 %v727
    %867 = vmatprep.subr.mxu0 0.0
    %868 = vmatpush1.msra.mxu0 %v728
    %869 = vmatprep.subr.mxu0 0.0
    %870 = vmatpush1.msra.mxu0 %v729
    %871 = vmatprep.subr.mxu0 0.0
    %872 = vmatpush1.msra.mxu0 %v730
    %873 = vmatprep.subr.mxu0 0.0
    %874 = vmatpush1.msra.mxu0 %v731
    %875 = vmatprep.subr.mxu0 0.0
    %876 = vmatpush1.msra.mxu0 %v732
    %877 = vmatprep.subr.mxu0 0.0
    %878 = vmatpush1.msra.mxu0 %v733
    %879 = vmatprep.subr.mxu0 0.0
    %880 = vmatpush1.msra.mxu0 %v734
    %881 = vmatprep.subr.mxu0 0.0
    %882 = vmatpush1.msra.mxu0 %v735
    %883 = vmatprep.subr.mxu0 0.0
    %884 = vmatpush1.msra.mxu0 %v736
    %885 = vmatprep.subr.mxu0 0.0
    %886 = vmatpush1.msra.mxu0 %v737
    %887 = vmatprep.subr.mxu0 0.0
    %888 = vmatpush1.msra.mxu0 %v738
    %889 = vmatprep.subr.mxu0 0.0
    %890 = vmatpush1.msra.mxu0 %v739
    %891 = vmatprep.subr.mxu0 0.0
    %892 = vmatpush1.msra.mxu0 %v740
    %893 = vmatprep.subr.mxu0 0.0
    %894 = vmatpush1.msra.mxu0 %v741
    %895 = vmatprep.subr.mxu0 0.0
    %896 = vmatpush1.msra.mxu0 %v742
    %897 = vmatprep.subr.mxu0 0.0
    %898 = vmatpush1.msra.mxu0 %v743
    %899 = vmatprep.subr.mxu0 0.0
    %900 = vmatpush1.msra.mxu0 %v744
    %901 = vmatprep.subr.mxu0 0.0
    %902 = vmatpush1.msra.mxu0 %v745
    %903 = vmatprep.subr.mxu0 0.0
    %904 = vmatpush1.msra.mxu0 %v746
    %905 = vmatprep.subr.mxu0 0.0
    %906 = vmatpush1.msra.mxu0 %v747
    %907 = vmatprep.subr.mxu0 0.0
    %908 = vmatpush1.msra.mxu0 %v748
    %909 = vmatprep.subr.mxu0 0.0
    %910 = vmatpush1.msra.mxu0 %v749
    %911 = vmatprep.subr.mxu0 0.0
    %912 = vmatpush1.msra.mxu0 %v750
    %913 = vmatprep.subr.mxu0 0.0
    %914 = vmatpush1.msra.mxu0 %v751
    %915 = vmatprep.subr.mxu0 0.0
    %916 = vmatpush1.msra.mxu0 %v752
    %917 = vmatprep.subr.mxu0 0.0
    %918 = vmatpush1.msra.mxu0 %v753
    %919 = vmatprep.subr.mxu0 0.0
    %920 = vmatpush1.msra.mxu0 %v754
    %921 = vmatprep.subr.mxu0 0.0
    %922 = vmatpush1.msra.mxu0 %v755
    %923 = vmatprep.subr.mxu0 0.0
    %924 = vmatpush1.msra.mxu0 %v756
    %925 = vmatprep.mubr.f32.mxu0 %v845
    %926 = vmatmul.mubr.f32.gmra.mrb[0].mxu0 %v837
    %v927 = vpop.f32.mrb[0].mxu0
    %v928 = vadd.f32 %v826, %v927
    %v929 = vpop.f32.mrb[0].mxu0
    %930 = vdwg.mxu0
    %931 = vmatprep.subr.mxu0 0.0
    %932 = vmatpush1.msra.mxu0 %v757
    %933 = vmatprep.subr.mxu0 0.0
    %934 = vmatpush1.msra.mxu0 %v758
    %935 = vmatprep.subr.mxu0 0.0
    %936 = vmatpush1.msra.mxu0 %v759
    %937 = vmatprep.subr.mxu0 0.0
    %938 = vmatpush1.msra.mxu0 %v760
    %939 = vmatprep.subr.mxu0 0.0
    %940 = vmatpush1.msra.mxu0 %v761
    %941 = vmatprep.subr.mxu0 0.0
    %942 = vmatpush1.msra.mxu0 %v762
    %943 = vmatprep.subr.mxu0 0.0
    %944 = vmatpush1.msra.mxu0 %v763
    %945 = vmatprep.subr.mxu0 0.0
    %946 = vmatpush1.msra.mxu0 %v764
    %947 = vmatprep.subr.mxu0 0.0
    %948 = vmatpush1.msra.mxu0 %v765
    %949 = vmatprep.subr.mxu0 0.0
    %950 = vmatpush1.msra.mxu0 %v766
    %951 = vmatprep.subr.mxu0 0.0
    %952 = vmatpush1.msra.mxu0 %v767
    %953 = vmatprep.subr.mxu0 0.0
    %954 = vmatpush1.msra.mxu0 %v768
    %955 = vmatprep.subr.mxu0 0.0
    %956 = vmatpush1.msra.mxu0 %v769
    %957 = vmatprep.subr.mxu0 0.0
    %958 = vmatpush1.msra.mxu0 %v770
    %959 = vmatprep.subr.mxu0 0.0
    %960 = vmatpush1.msra.mxu0 %v771
    %961 = vmatprep.subr.mxu0 0.0
    %962 = vmatpush1.msra.mxu0 %v772
    %963 = vmatprep.subr.mxu0 0.0
    %964 = vmatpush1.msra.mxu0 %v773
    %965 = vmatprep.subr.mxu0 0.0
    %966 = vmatpush1.msra.mxu0 %v774
    %967 = vmatprep.subr.mxu0 0.0
    %968 = vmatpush1.msra.mxu0 %v775
    %969 = vmatprep.subr.mxu0 0.0
    %970 = vmatpush1.msra.mxu0 %v776
    %971 = vmatprep.subr.mxu0 0.0
    %972 = vmatpush1.msra.mxu0 %v777
    %973 = vmatprep.subr.mxu0 0.0
    %974 = vmatpush1.msra.mxu0 %v778
    %975 = vmatprep.subr.mxu0 0.0
    %976 = vmatpush1.msra.mxu0 %v779
    %977 = vmatprep.subr.mxu0 0.0
    %978 = vmatpush1.msra.mxu0 %v780
    %979 = vmatprep.subr.mxu0 0.0
    %980 = vmatpush1.msra.mxu0 %v781
    %981 = vmatprep.subr.mxu0 0.0
    %982 = vmatpush1.msra.mxu0 %v782
    %983 = vmatprep.subr.mxu0 0.0
    %984 = vmatpush1.msra.mxu0 %v783
    %985 = vmatprep.subr.mxu0 0.0
    %986 = vmatpush1.msra.mxu0 %v784
    %987 = vmatprep.subr.mxu0 0.0
    %988 = vmatpush1.msra.mxu0 %v785
    %989 = vmatprep.subr.mxu0 0.0
    %990 = vmatpush1.msra.mxu0 %v786
    %991 = vmatprep.subr.mxu0 0.0
    %992 = vmatpush1.msra.mxu0 %v787
    %993 = vmatprep.subr.mxu0 0.0
    %994 = vmatpush1.msra.mxu0 %v788
    %995 = vmatprep.mubr.f32.mxu0 %v846
    %996 = vmatmul.mubr.f32.gmra.mrb[0].mxu0 %v844
    %v997 = vpop.f32.mrb[0].mxu0
    %v998 = vadd.f32 %v928, %v997
    %v999 = vpop.f32.mrb[0].mxu0
    %1000 = vdwg.mxu0
    %1001 = vmatprep.subr.mxu0 0.0
    %1002 = vmatpush1.msra.mxu0 %v789
    %1003 = vmatprep.subr.mxu0 0.0
    %1004 = vmatpush1.msra.mxu0 %v790
    %1005 = vmatprep.subr.mxu0 0.0
    %1006 = vmatpush1.msra.mxu0 %v791
    %1007 = vmatprep.subr.mxu0 0.0
    %1008 = vmatpush1.msra.mxu0 %v792
    %1009 = vmatprep.subr.mxu0 0.0
    %1010 = vmatpush1.msra.mxu0 %v793
    %1011 = vmatprep.subr.mxu0 0.0
    %1012 = vmatpush1.msra.mxu0 %v794
    %1013 = vmatprep.subr.mxu0 0.0
    %1014 = vmatpush1.msra.mxu0 %v795
    %1015 = vmatprep.subr.mxu0 0.0
    %1016 = vmatpush1.msra.mxu0 %v796
    %1017 = vmatprep.subr.mxu0 0.0
    %1018 = vmatpush1.msra.mxu0 %v797
    %1019 = vmatprep.subr.mxu0 0.0
    %1020 = vmatpush1.msra.mxu0 %v798
    %1021 = vmatprep.subr.mxu0 0.0
    %1022 = vmatpush1.msra.mxu0 %v799
    %1023 = vmatprep.subr.mxu0 0.0
    %1024 = vmatpush1.msra.mxu0 %v800
    %1025 = vmatprep.subr.mxu0 0.0
    %1026 = vmatpush1.msra.mxu0 %v801
    %1027 = vmatprep.subr.mxu0 0.0
    %1028 = vmatpush1.msra.mxu0 %v802
    %1029 = vmatprep.subr.mxu0 0.0
    %1030 = vmatpush1.msra.mxu0 %v803
    %1031 = vmatprep.subr.mxu0 0.0
    %1032 = vmatpush1.msra.mxu0 %v804
    %1033 = vmatprep.subr.mxu0 0.0
    %1034 = vmatpush1.msra.mxu0 %v805
    %1035 = vmatprep.subr.mxu0 0.0
    %1036 = vmatpush1.msra.mxu0 %v806
    %1037 = vmatprep.subr.mxu0 0.0
    %1038 = vmatpush1.msra.mxu0 %v807
    %1039 = vmatprep.subr.mxu0 0.0
    %1040 = vmatpush1.msra.mxu0 %v808
    %1041 = vmatprep.subr.mxu0 0.0
    %1042 = vmatpush1.msra.mxu0 %v809
    %1043 = vmatprep.subr.mxu0 0.0
    %1044 = vmatpush1.msra.mxu0 %v810
    %1045 = vmatprep.subr.mxu0 0.0
    %1046 = vmatpush1.msra.mxu0 %v811
    %1047 = vmatprep.subr.mxu0 0.0
    %1048 = vmatpush1.msra.mxu0 %v812
    %1049 = vmatprep.subr.mxu0 0.0
    %1050 = vmatpush1.msra.mxu0 %v813
    %1051 = vmatprep.subr.mxu0 0.0
    %1052 = vmatpush1.msra.mxu0 %v814
    %1053 = vmatprep.subr.mxu0 0.0
    %1054 = vmatpush1.msra.mxu0 %v815
    %1055 = vmatprep.subr.mxu0 0.0
    %1056 = vmatpush1.msra.mxu0 %v816
    %1057 = vmatprep.subr.mxu0 0.0
    %1058 = vmatpush1.msra.mxu0 %v817
    %1059 = vmatprep.subr.mxu0 0.0
    %1060 = vmatpush1.msra.mxu0 %v818
    %1061 = vmatprep.subr.mxu0 0.0
    %1062 = vmatpush1.msra.mxu0 %v819
    %1063 = vmatprep.subr.mxu0 0.0
    %1064 = vmatpush1.msra.mxu0 %v820
    %1065 = vmatprep.mubr.f32.mxu0 %v854
    %1066 = vmatmul.mubr.f32.gmra.mrb[0].mxu0 %v853
    %v1067 = vpop.f32.mrb[0].mxu0
    %v1068 = vadd.f32 %v998, %v1067
    %v1069 = vpop.f32.mrb[0].mxu0
    %1070 = vdwg.mxu0
    %v1071 = vmax.f32 %v1068, 0.0
    %v1072 = vld [vmem:[%s25] sm:$0xff]
    %v1073 = vld [vmem:[%s25 + $0x8] sm:$0xff]
    %v1074 = vld [vmem:[%s25 + $0x10] sm:$0xff]
    %v1075 = vld [vmem:[%s25 + $0x18] sm:$0xff]
    %v1076 = vld [vmem:[%s25 + $0x20] sm:$0xff]
    %v1077 = vld [vmem:[%s25 + $0x28] sm:$0xff]
    %v1078 = vld [vmem:[%s25 + $0x30] sm:$0xff]
    %v1079 = vld [vmem:[%s25 + $0x38] sm:$0xff]
    %v1080 = vld [vmem:[%s27] sm:$0x1]
    %v1082 = vlaneseq
    %v1083 = vshrl.u32 %v1082, 7
    %v1084 = vsub.s32 0, %v1083
    %v1085 = vrot.slane %v1080, %v1084
    %v1088 = vsel %vm564, %v1071, 0
    %1090 = vmatprep.subr.mxu0 0.0
    %1091 = vmatpush1.msra.mxu0 %v1072
    %1092 = vmatprep.subr.mxu0 0.0
    %1093 = vmatpush1.msra.mxu0 %v1073
    %1094 = vmatprep.subr.mxu0 0.0
    %1095 = vmatpush1.msra.mxu0 %v1074
    %1096 = vmatprep.subr.mxu0 0.0
    %1097 = vmatpush1.msra.mxu0 %v1075
    %1098 = vmatprep.subr.mxu0 0.0
    %1099 = vmatpush1.msra.mxu0 %v1076
    %1100 = vmatprep.subr.mxu0 0.0
    %1101 = vmatpush1.msra.mxu0 %v1077
    %1102 = vmatprep.subr.mxu0 0.0
    %1103 = vmatpush1.msra.mxu0 %v1078
    %1104 = vmatprep.subr.mxu0 0.0
    %1105 = vmatpush1.msra.mxu0 %v1079
    %1106 = vmatprep.subr.mxu0 0.0
    %1107 = vmatpush1.msra.mxu0 0.0
    %1108 = vmatprep.subr.mxu0 0.0
    %1109 = vmatpush1.msra.mxu0 0.0
    %1110 = vmatprep.subr.mxu0 0.0
    %1111 = vmatpush1.msra.mxu0 0.0
    %1112 = vmatprep.subr.mxu0 0.0
    %1113 = vmatpush1.msra.mxu0 0.0
    %1114 = vmatprep.subr.mxu0 0.0
    %1115 = vmatpush1.msra.mxu0 0.0
    %1116 = vmatprep.subr.mxu0 0.0
    %1117 = vmatpush1.msra.mxu0 0.0
    %1118 = vmatprep.subr.mxu0 0.0
    %1119 = vmatpush1.msra.mxu0 0.0
    %1120 = vmatprep.subr.mxu0 0.0
    %1121 = vmatpush1.msra.mxu0 0.0
    %1122 = vmatprep.subr.mxu0 0.0
    %1123 = vmatpush1.msra.mxu0 0.0
    %1124 = vmatprep.subr.mxu0 0.0
    %1125 = vmatpush1.msra.mxu0 0.0
    %1126 = vmatprep.subr.mxu0 0.0
    %1127 = vmatpush1.msra.mxu0 0.0
    %1128 = vmatprep.subr.mxu0 0.0
    %1129 = vmatpush1.msra.mxu0 0.0
    %1130 = vmatprep.subr.mxu0 0.0
    %1131 = vmatpush1.msra.mxu0 0.0
    %1132 = vmatprep.subr.mxu0 0.0
    %1133 = vmatpush1.msra.mxu0 0.0
    %1134 = vmatprep.subr.mxu0 0.0
    %1135 = vmatpush1.msra.mxu0 0.0
    %1136 = vmatprep.subr.mxu0 0.0
    %1137 = vmatpush1.msra.mxu0 0.0
    %1138 = vmatprep.subr.mxu0 0.0
    %1139 = vmatpush1.msra.mxu0 0.0
    %1140 = vmatprep.subr.mxu0 0.0
    %1141 = vmatpush1.msra.mxu0 0.0
    %1142 = vmatprep.subr.mxu0 0.0
    %1143 = vmatpush1.msra.mxu0 0.0
    %1144 = vmatprep.subr.mxu0 0.0
    %1145 = vmatpush1.msra.mxu0 0.0
    %1146 = vmatprep.subr.mxu0 0.0
    %1147 = vmatpush1.msra.mxu0 0.0
    %1148 = vmatprep.subr.mxu0 0.0
    %1149 = vmatpush1.msra.mxu0 0.0
    %1150 = vmatprep.subr.mxu0 0.0
    %1151 = vmatpush1.msra.mxu0 0.0
    %1152 = vmatprep.subr.mxu0 0.0
    %1153 = vmatpush1.msra.mxu0 0.0
    %1154 = vmatprep.mubr.f32.mxu0 0.0
    %1155 = vmatmul.mubr.f32.gmra.mrb[0].mxu0 %v1088
    %v1156 = vpop.f32.mrb[0].mxu0
    %v1157 = vadd.f32 %v1085, %v1156
    %v1158 = vpop.f32.mrb[0].mxu0
    %1159 = vdwg.mxu0
    %v1160 = vld [vmem:[%s29] sm:$0xff]
    %v1161 = vld [vmem:[%s29 + $0x8] sm:$0xff]
    %v1162 = vld [vmem:[%s29 + $0x10] sm:$0xff]
    %v1163 = vld [vmem:[%s29 + $0x18] sm:$0xff]
    %v1164 = vld [vmem:[%s29 + $0x20] sm:$0xff]
    %v1165 = vld [vmem:[%s29 + $0x28] sm:$0xff]
    %v1166 = vld [vmem:[%s29 + $0x30] sm:$0xff]
    %v1167 = vld [vmem:[%s29 + $0x38] sm:$0xff]
    %v1168 = vld [vmem:[%s31] sm:$0x1]
    %v1170 = vlaneseq
    %v1171 = vshrl.u32 %v1170, 7
    %v1172 = vsub.s32 0, %v1171
    %v1173 = vrot.slane %v1168, %v1172
    %1175 = vmatprep.subr.mxu0 0.0
    %1176 = vmatpush1.msra.mxu0 %v1160
    %1177 = vmatprep.subr.mxu0 0.0
    %1178 = vmatpush1.msra.mxu0 %v1161
    %1179 = vmatprep.subr.mxu0 0.0
    %1180 = vmatpush1.msra.mxu0 %v1162
    %1181 = vmatprep.subr.mxu0 0.0
    %1182 = vmatpush1.msra.mxu0 %v1163
    %1183 = vmatprep.subr.mxu0 0.0
    %1184 = vmatpush1.msra.mxu0 %v1164
    %1185 = vmatprep.subr.mxu0 0.0
    %1186 = vmatpush1.msra.mxu0 %v1165
    %1187 = vmatprep.subr.mxu0 0.0
    %1188 = vmatpush1.msra.mxu0 %v1166
    %1189 = vmatprep.subr.mxu0 0.0
    %1190 = vmatpush1.msra.mxu0 %v1167
    %1191 = vmatprep.subr.mxu0 0.0
    %1192 = vmatpush1.msra.mxu0 0.0
    %1193 = vmatprep.subr.mxu0 0.0
    %1194 = vmatpush1.msra.mxu0 0.0
    %1195 = vmatprep.subr.mxu0 0.0
    %1196 = vmatpush1.msra.mxu0 0.0
    %1197 = vmatprep.subr.mxu0 0.0
    %1198 = vmatpush1.msra.mxu0 0.0
    %1199 = vmatprep.subr.mxu0 0.0
    %1200 = vmatpush1.msra.mxu0 0.0
    %1201 = vmatprep.subr.mxu0 0.0
    %1202 = vmatpush1.msra.mxu0 0.0
    %1203 = vmatprep.subr.mxu0 0.0
    %1204 = vmatpush1.msra.mxu0 0.0
    %1205 = vmatprep.subr.mxu0 0.0
    %1206 = vmatpush1.msra.mxu0 0.0
    %1207 = vmatprep.subr.mxu0 0.0
    %1208 = vmatpush1.msra.mxu0 0.0
    %1209 = vmatprep.subr.mxu0 0.0
    %1210 = vmatpush1.msra.mxu0 0.0
    %1211 = vmatprep.subr.mxu0 0.0
    %1212 = vmatpush1.msra.mxu0 0.0
    %1213 = vmatprep.subr.mxu0 0.0
    %1214 = vmatpush1.msra.mxu0 0.0
    %1215 = vmatprep.subr.mxu0 0.0
    %1216 = vmatpush1.msra.mxu0 0.0
    %1217 = vmatprep.subr.mxu0 0.0
    %1218 = vmatpush1.msra.mxu0 0.0
    %1219 = vmatprep.subr.mxu0 0.0
    %1220 = vmatpush1.msra.mxu0 0.0
    %1221 = vmatprep.subr.mxu0 0.0
    %1222 = vmatpush1.msra.mxu0 0.0
    %1223 = vmatprep.subr.mxu0 0.0
    %1224 = vmatpush1.msra.mxu0 0.0
    %1225 = vmatprep.subr.mxu0 0.0
    %1226 = vmatpush1.msra.mxu0 0.0
    %1227 = vmatprep.subr.mxu0 0.0
    %1228 = vmatpush1.msra.mxu0 0.0
    %1229 = vmatprep.subr.mxu0 0.0
    %1230 = vmatpush1.msra.mxu0 0.0
    %1231 = vmatprep.subr.mxu0 0.0
    %1232 = vmatpush1.msra.mxu0 0.0
    %1233 = vmatprep.subr.mxu0 0.0
    %1234 = vmatpush1.msra.mxu0 0.0
    %1235 = vmatprep.subr.mxu0 0.0
    %1236 = vmatpush1.msra.mxu0 0.0
    %1237 = vmatprep.subr.mxu0 0.0
    %1238 = vmatpush1.msra.mxu0 0.0
    %1239 = vmatprep.mubr.f32.mxu0 0.0
    %1240 = vmatmul.mubr.f32.gmra.mrb[0].mxu0 %v1088
    %v1241 = vpop.f32.mrb[0].mxu0
    %v1242 = vadd.f32 %v1173, %v1241
    %v1243 = vpop.f32.mrb[0].mxu0
    %1244 = vdwg.mxu0
    %v1245 = vld [vmem:[%s5] sm:$0x3]
    %v1246 = vld [vmem:[%s33] sm:$0xff]
    %v1247 = vld [vmem:[%s33 + $0x8] sm:$0xff]
    %v1248 = vld [vmem:[%s35] sm:$0x1]
    %v1250 = vlaneseq
    %v1251 = vshrl.u32 %v1250, 7
    %v1252 = vsub.s32 0, %v1251
    %v1253 = vrot.slane %v1248, %v1252
    %vm1255 = vcmask 130048
    %v1257 = vsel %vm1255, %v1245, 0
    %1259 = vmatprep.subr.mxu0 0.0
    %1260 = vmatpush1.msra.mxu0 %v1246
    %1261 = vmatprep.subr.mxu0 0.0
    %1262 = vmatpush1.msra.mxu0 %v1247
    %1263 = vmatprep.subr.mxu0 0.0
    %1264 = vmatpush1.msra.mxu0 0.0
    %1265 = vmatprep.subr.mxu0 0.0
    %1266 = vmatpush1.msra.mxu0 0.0
    %1267 = vmatprep.subr.mxu0 0.0
    %1268 = vmatpush1.msra.mxu0 0.0
    %1269 = vmatprep.subr.mxu0 0.0
    %1270 = vmatpush1.msra.mxu0 0.0
    %1271 = vmatprep.subr.mxu0 0.0
    %1272 = vmatpush1.msra.mxu0 0.0
    %1273 = vmatprep.subr.mxu0 0.0
    %1274 = vmatpush1.msra.mxu0 0.0
    %1275 = vmatprep.subr.mxu0 0.0
    %1276 = vmatpush1.msra.mxu0 0.0
    %1277 = vmatprep.subr.mxu0 0.0
    %1278 = vmatpush1.msra.mxu0 0.0
    %1279 = vmatprep.subr.mxu0 0.0
    %1280 = vmatpush1.msra.mxu0 0.0
    %1281 = vmatprep.subr.mxu0 0.0
    %1282 = vmatpush1.msra.mxu0 0.0
    %1283 = vmatprep.subr.mxu0 0.0
    %1284 = vmatpush1.msra.mxu0 0.0
    %1285 = vmatprep.subr.mxu0 0.0
    %1286 = vmatpush1.msra.mxu0 0.0
    %1287 = vmatprep.subr.mxu0 0.0
    %1288 = vmatpush1.msra.mxu0 0.0
    %1289 = vmatprep.subr.mxu0 0.0
    %1290 = vmatpush1.msra.mxu0 0.0
    %1291 = vmatprep.subr.mxu0 0.0
    %1292 = vmatpush1.msra.mxu0 0.0
    %1293 = vmatprep.subr.mxu0 0.0
    %1294 = vmatpush1.msra.mxu0 0.0
    %1295 = vmatprep.subr.mxu0 0.0
    %1296 = vmatpush1.msra.mxu0 0.0
    %1297 = vmatprep.subr.mxu0 0.0
    %1298 = vmatpush1.msra.mxu0 0.0
    %1299 = vmatprep.subr.mxu0 0.0
    %1300 = vmatpush1.msra.mxu0 0.0
    %1301 = vmatprep.subr.mxu0 0.0
    %1302 = vmatpush1.msra.mxu0 0.0
    %1303 = vmatprep.subr.mxu0 0.0
    %1304 = vmatpush1.msra.mxu0 0.0
    %1305 = vmatprep.subr.mxu0 0.0
    %1306 = vmatpush1.msra.mxu0 0.0
    %1307 = vmatprep.subr.mxu0 0.0
    %1308 = vmatpush1.msra.mxu0 0.0
    %1309 = vmatprep.subr.mxu0 0.0
    %1310 = vmatpush1.msra.mxu0 0.0
    %1311 = vmatprep.subr.mxu0 0.0
    %1312 = vmatpush1.msra.mxu0 0.0
    %1313 = vmatprep.subr.mxu0 0.0
    %1314 = vmatpush1.msra.mxu0 0.0
    %1315 = vmatprep.subr.mxu0 0.0
    %1316 = vmatpush1.msra.mxu0 0.0
    %1317 = vmatprep.subr.mxu0 0.0
    %1318 = vmatpush1.msra.mxu0 0.0
    %1319 = vmatprep.subr.mxu0 0.0
    %1320 = vmatpush1.msra.mxu0 0.0
    %1321 = vmatprep.subr.mxu0 0.0
    %1322 = vmatpush1.msra.mxu0 0.0
    %1323 = vmatprep.mubr.f32.mxu0 0.0
    %1324 = vmatmul.mubr.f32.gmra.mrb[0].mxu0 %v1257
    %v1325 = vpop.f32.mrb[0].mxu0
    %v1326 = vadd.f32 %v1253, %v1325
    %v1327 = vpop.f32.mrb[0].mxu0
    %1328 = vdwg.mxu0
    %v1329 = vmax.f32 %v1326, 0.0
    %v1330 = vld [vmem:[%s37] sm:$0xff]
    %v1331 = vld [vmem:[%s37 + $0x8] sm:$0xff]
    %v1332 = vld [vmem:[%s37 + $0x10] sm:$0xff]
    %v1333 = vld [vmem:[%s37 + $0x18] sm:$0xff]
    %v1334 = vld [vmem:[%s37 + $0x20] sm:$0xff]
    %v1335 = vld [vmem:[%s37 + $0x28] sm:$0xff]
    %v1336 = vld [vmem:[%s37 + $0x30] sm:$0xff]
    %v1337 = vld [vmem:[%s37 + $0x38] sm:$0xff]
    %v1338 = vld [vmem:[%s39] sm:$0x1]
    %v1340 = vlaneseq
    %v1341 = vshrl.u32 %v1340, 7
    %v1342 = vsub.s32 0, %v1341
    %v1343 = vrot.slane %v1338, %v1342
    %v1346 = vsel %vm564, %v1329, 0
    %1348 = vmatprep.subr.mxu0 0.0
    %1349 = vmatpush1.msra.mxu0 %v1330
    %1350 = vmatprep.subr.mxu0 0.0
    %1351 = vmatpush1.msra.mxu0 %v1331
    %1352 = vmatprep.subr.mxu0 0.0
    %1353 = vmatpush1.msra.mxu0 %v1332
    %1354 = vmatprep.subr.mxu0 0.0
    %1355 = vmatpush1.msra.mxu0 %v1333
    %1356 = vmatprep.subr.mxu0 0.0
    %1357 = vmatpush1.msra.mxu0 %v1334
    %1358 = vmatprep.subr.mxu0 0.0
    %1359 = vmatpush1.msra.mxu0 %v1335
    %1360 = vmatprep.subr.mxu0 0.0
    %1361 = vmatpush1.msra.mxu0 %v1336
    %1362 = vmatprep.subr.mxu0 0.0
    %1363 = vmatpush1.msra.mxu0 %v1337
    %1364 = vmatprep.subr.mxu0 0.0
    %1365 = vmatpush1.msra.mxu0 0.0
    %1366 = vmatprep.subr.mxu0 0.0
    %1367 = vmatpush1.msra.mxu0 0.0
    %1368 = vmatprep.subr.mxu0 0.0
    %1369 = vmatpush1.msra.mxu0 0.0
    %1370 = vmatprep.subr.mxu0 0.0
    %1371 = vmatpush1.msra.mxu0 0.0
    %1372 = vmatprep.subr.mxu0 0.0
    %1373 = vmatpush1.msra.mxu0 0.0
    %1374 = vmatprep.subr.mxu0 0.0
    %1375 = vmatpush1.msra.mxu0 0.0
    %1376 = vmatprep.subr.mxu0 0.0
    %1377 = vmatpush1.msra.mxu0 0.0
    %1378 = vmatprep.subr.mxu0 0.0
    %1379 = vmatpush1.msra.mxu0 0.0
    %1380 = vmatprep.subr.mxu0 0.0
    %1381 = vmatpush1.msra.mxu0 0.0
    %1382 = vmatprep.subr.mxu0 0.0
    %1383 = vmatpush1.msra.mxu0 0.0
    %1384 = vmatprep.subr.mxu0 0.0
    %1385 = vmatpush1.msra.mxu0 0.0
    %1386 = vmatprep.subr.mxu0 0.0
    %1387 = vmatpush1.msra.mxu0 0.0
    %1388 = vmatprep.subr.mxu0 0.0
    %1389 = vmatpush1.msra.mxu0 0.0
    %1390 = vmatprep.subr.mxu0 0.0
    %1391 = vmatpush1.msra.mxu0 0.0
    %1392 = vmatprep.subr.mxu0 0.0
    %1393 = vmatpush1.msra.mxu0 0.0
    %1394 = vmatprep.subr.mxu0 0.0
    %1395 = vmatpush1.msra.mxu0 0.0
    %1396 = vmatprep.subr.mxu0 0.0
    %1397 = vmatpush1.msra.mxu0 0.0
    %1398 = vmatprep.subr.mxu0 0.0
    %1399 = vmatpush1.msra.mxu0 0.0
    %1400 = vmatprep.subr.mxu0 0.0
    %1401 = vmatpush1.msra.mxu0 0.0
    %1402 = vmatprep.subr.mxu0 0.0
    %1403 = vmatpush1.msra.mxu0 0.0
    %1404 = vmatprep.subr.mxu0 0.0
    %1405 = vmatpush1.msra.mxu0 0.0
    %1406 = vmatprep.subr.mxu0 0.0
    %1407 = vmatpush1.msra.mxu0 0.0
    %1408 = vmatprep.subr.mxu0 0.0
    %1409 = vmatpush1.msra.mxu0 0.0
    %1410 = vmatprep.subr.mxu0 0.0
    %1411 = vmatpush1.msra.mxu0 0.0
    %1412 = vmatprep.mubr.f32.mxu0 0.0
    %1413 = vmatmul.mubr.f32.gmra.mrb[0].mxu0 %v1346
    %v1414 = vpop.f32.mrb[0].mxu0
    %v1415 = vadd.f32 %v1343, %v1414
    %v1416 = vpop.f32.mrb[0].mxu0
    %1417 = vdwg.mxu0
    %v1418 = vld [vmem:[%s41] sm:$0xff]
    %v1419 = vld [vmem:[%s41 + $0x8] sm:$0xff]
    %v1420 = vld [vmem:[%s41 + $0x10] sm:$0xff]
    %v1421 = vld [vmem:[%s41 + $0x18] sm:$0xff]
    %v1422 = vld [vmem:[%s41 + $0x20] sm:$0xff]
    %v1423 = vld [vmem:[%s41 + $0x28] sm:$0xff]
    %v1424 = vld [vmem:[%s41 + $0x30] sm:$0xff]
    %v1425 = vld [vmem:[%s41 + $0x38] sm:$0xff]
    %v1426 = vld [vmem:[%s43] sm:$0x1]
    %v1428 = vlaneseq
    %v1429 = vshrl.u32 %v1428, 7
    %v1430 = vsub.s32 0, %v1429
    %v1431 = vrot.slane %v1426, %v1430
    %1433 = vmatprep.subr.mxu0 0.0
    %1434 = vmatpush1.msra.mxu0 %v1418
    %1435 = vmatprep.subr.mxu0 0.0
    %1436 = vmatpush1.msra.mxu0 %v1419
    %1437 = vmatprep.subr.mxu0 0.0
    %1438 = vmatpush1.msra.mxu0 %v1420
    %1439 = vmatprep.subr.mxu0 0.0
    %1440 = vmatpush1.msra.mxu0 %v1421
    %1441 = vmatprep.subr.mxu0 0.0
    %1442 = vmatpush1.msra.mxu0 %v1422
    %1443 = vmatprep.subr.mxu0 0.0
    %1444 = vmatpush1.msra.mxu0 %v1423
    %1445 = vmatprep.subr.mxu0 0.0
    %1446 = vmatpush1.msra.mxu0 %v1424
    %1447 = vmatprep.subr.mxu0 0.0
    %1448 = vmatpush1.msra.mxu0 %v1425
    %1449 = vmatprep.subr.mxu0 0.0
    %1450 = vmatpush1.msra.mxu0 0.0
    %1451 = vmatprep.subr.mxu0 0.0
    %1452 = vmatpush1.msra.mxu0 0.0
    %1453 = vmatprep.subr.mxu0 0.0
    %1454 = vmatpush1.msra.mxu0 0.0
    %1455 = vmatprep.subr.mxu0 0.0
    %1456 = vmatpush1.msra.mxu0 0.0
    %1457 = vmatprep.subr.mxu0 0.0
    %1458 = vmatpush1.msra.mxu0 0.0
    %1459 = vmatprep.subr.mxu0 0.0
    %1460 = vmatpush1.msra.mxu0 0.0
    %1461 = vmatprep.subr.mxu0 0.0
    %1462 = vmatpush1.msra.mxu0 0.0
    %1463 = vmatprep.subr.mxu0 0.0
    %1464 = vmatpush1.msra.mxu0 0.0
    %1465 = vmatprep.subr.mxu0 0.0
    %1466 = vmatpush1.msra.mxu0 0.0
    %1467 = vmatprep.subr.mxu0 0.0
    %1468 = vmatpush1.msra.mxu0 0.0
    %1469 = vmatprep.subr.mxu0 0.0
    %1470 = vmatpush1.msra.mxu0 0.0
    %1471 = vmatprep.subr.mxu0 0.0
    %1472 = vmatpush1.msra.mxu0 0.0
    %1473 = vmatprep.subr.mxu0 0.0
    %1474 = vmatpush1.msra.mxu0 0.0
    %1475 = vmatprep.subr.mxu0 0.0
    %1476 = vmatpush1.msra.mxu0 0.0
    %1477 = vmatprep.subr.mxu0 0.0
    %1478 = vmatpush1.msra.mxu0 0.0
    %1479 = vmatprep.subr.mxu0 0.0
    %1480 = vmatpush1.msra.mxu0 0.0
    %1481 = vmatprep.subr.mxu0 0.0
    %1482 = vmatpush1.msra.mxu0 0.0
    %1483 = vmatprep.subr.mxu0 0.0
    %1484 = vmatpush1.msra.mxu0 0.0
    %1485 = vmatprep.subr.mxu0 0.0
    %1486 = vmatpush1.msra.mxu0 0.0
    %1487 = vmatprep.subr.mxu0 0.0
    %1488 = vmatpush1.msra.mxu0 0.0
    %1489 = vmatprep.subr.mxu0 0.0
    %1490 = vmatpush1.msra.mxu0 0.0
    %1491 = vmatprep.subr.mxu0 0.0
    %1492 = vmatpush1.msra.mxu0 0.0
    %1493 = vmatprep.subr.mxu0 0.0
    %1494 = vmatpush1.msra.mxu0 0.0
    %1495 = vmatprep.subr.mxu0 0.0
    %1496 = vmatpush1.msra.mxu0 0.0
    %1497 = vmatprep.mubr.f32.mxu0 0.0
    %1498 = vmatmul.mubr.f32.gmra.mrb[0].mxu0 %v1346
    %v1499 = vpop.f32.mrb[0].mxu0
    %v1500 = vadd.f32 %v1431, %v1499
    %v1501 = vpop.f32.mrb[0].mxu0
    %1502 = vdwg.mxu0
    %v1503 = vld [vmem:[%s45] sm:$0xff]
    %v1504 = vld [vmem:[%s45 + $0x8] sm:$0xff]
    %v1505 = vld [vmem:[%s47] sm:$0xff]
    %v1506 = vld [vmem:[%s47 + $0x8] sm:$0xff]
    %v1508 = vsel %vm1255, %v1157, 0
    %1510 = vmatprep.subr.mxu0 0.0
    %1511 = vmatpush1.msra.mxu0 %v1505
    %1512 = vmatprep.subr.mxu0 0.0
    %1513 = vmatpush1.msra.mxu0 %v1506
    %1514 = vmatprep.subr.mxu0 0.0
    %1515 = vmatpush1.msra.mxu0 0.0
    %1516 = vmatprep.subr.mxu0 0.0
    %1517 = vmatpush1.msra.mxu0 0.0
    %1518 = vmatprep.subr.mxu0 0.0
    %1519 = vmatpush1.msra.mxu0 0.0
    %1520 = vmatprep.subr.mxu0 0.0
    %1521 = vmatpush1.msra.mxu0 0.0
    %1522 = vmatprep.subr.mxu0 0.0
    %1523 = vmatpush1.msra.mxu0 0.0
    %1524 = vmatprep.subr.mxu0 0.0
    %1525 = vmatpush1.msra.mxu0 0.0
    %1526 = vmatprep.subr.mxu0 0.0
    %1527 = vmatpush1.msra.mxu0 0.0
    %1528 = vmatprep.subr.mxu0 0.0
    %1529 = vmatpush1.msra.mxu0 0.0
    %1530 = vmatprep.subr.mxu0 0.0
    %1531 = vmatpush1.msra.mxu0 0.0
    %1532 = vmatprep.subr.mxu0 0.0
    %1533 = vmatpush1.msra.mxu0 0.0
    %1534 = vmatprep.subr.mxu0 0.0
    %1535 = vmatpush1.msra.mxu0 0.0
    %1536 = vmatprep.subr.mxu0 0.0
    %1537 = vmatpush1.msra.mxu0 0.0
    %1538 = vmatprep.subr.mxu0 0.0
    %1539 = vmatpush1.msra.mxu0 0.0
    %1540 = vmatprep.subr.mxu0 0.0
    %1541 = vmatpush1.msra.mxu0 0.0
    %1542 = vmatprep.subr.mxu0 0.0
    %1543 = vmatpush1.msra.mxu0 0.0
    %1544 = vmatprep.subr.mxu0 0.0
    %1545 = vmatpush1.msra.mxu0 0.0
    %1546 = vmatprep.subr.mxu0 0.0
    %1547 = vmatpush1.msra.mxu0 0.0
    %1548 = vmatprep.subr.mxu0 0.0
    %1549 = vmatpush1.msra.mxu0 0.0
    %1550 = vmatprep.subr.mxu0 0.0
    %1551 = vmatpush1.msra.mxu0 0.0
    %1552 = vmatprep.subr.mxu0 0.0
    %1553 = vmatpush1.msra.mxu0 0.0
    %1554 = vmatprep.subr.mxu0 0.0
    %1555 = vmatpush1.msra.mxu0 0.0
    %1556 = vmatprep.subr.mxu0 0.0
    %1557 = vmatpush1.msra.mxu0 0.0
    %1558 = vmatprep.subr.mxu0 0.0
    %1559 = vmatpush1.msra.mxu0 0.0
    %1560 = vmatprep.subr.mxu0 0.0
    %1561 = vmatpush1.msra.mxu0 0.0
    %1562 = vmatprep.subr.mxu0 0.0
    %1563 = vmatpush1.msra.mxu0 0.0
    %1564 = vmatprep.subr.mxu0 0.0
    %1565 = vmatpush1.msra.mxu0 0.0
    %1566 = vmatprep.subr.mxu0 0.0
    %1567 = vmatpush1.msra.mxu0 0.0
    %1568 = vmatprep.subr.mxu0 0.0
    %1569 = vmatpush1.msra.mxu0 0.0
    %1570 = vmatprep.subr.mxu0 0.0
    %1571 = vmatpush1.msra.mxu0 0.0
    %1572 = vmatprep.subr.mxu0 0.0
    %1573 = vmatpush1.msra.mxu0 0.0
    %1574 = vmatprep.mubr.f32.mxu0 0.0
    %1575 = vmatmul.mubr.f32.gmra.mrb[0].mxu0 %v1508
    %v1576 = vpop.f32.mrb[0].mxu0
    %v1577 = vadd.f32 0.0, %v1576
    %v1578 = vpop.f32.mrb[0].mxu0
    %1579 = vdwg.mxu0
    %v1581 = vsel %vm1255, %v635, 0
    %1583 = vmatprep.subr.mxu0 0.0
    %1584 = vmatpush1.msra.mxu0 %v1503
    %1585 = vmatprep.subr.mxu0 0.0
    %1586 = vmatpush1.msra.mxu0 %v1504
    %1587 = vmatprep.subr.mxu0 0.0
    %1588 = vmatpush1.msra.mxu0 0.0
    %1589 = vmatprep.subr.mxu0 0.0
    %1590 = vmatpush1.msra.mxu0 0.0
    %1591 = vmatprep.subr.mxu0 0.0
    %1592 = vmatpush1.msra.mxu0 0.0
    %1593 = vmatprep.subr.mxu0 0.0
    %1594 = vmatpush1.msra.mxu0 0.0
    %1595 = vmatprep.subr.mxu0 0.0
    %1596 = vmatpush1.msra.mxu0 0.0
    %1597 = vmatprep.subr.mxu0 0.0
    %1598 = vmatpush1.msra.mxu0 0.0
    %1599 = vmatprep.subr.mxu0 0.0
    %1600 = vmatpush1.msra.mxu0 0.0
    %1601 = vmatprep.subr.mxu0 0.0
    %1602 = vmatpush1.msra.mxu0 0.0
    %1603 = vmatprep.subr.mxu0 0.0
    %1604 = vmatpush1.msra.mxu0 0.0
    %1605 = vmatprep.subr.mxu0 0.0
    %1606 = vmatpush1.msra.mxu0 0.0
    %1607 = vmatprep.subr.mxu0 0.0
    %1608 = vmatpush1.msra.mxu0 0.0
    %1609 = vmatprep.subr.mxu0 0.0
    %1610 = vmatpush1.msra.mxu0 0.0
    %1611 = vmatprep.subr.mxu0 0.0
    %1612 = vmatpush1.msra.mxu0 0.0
    %1613 = vmatprep.subr.mxu0 0.0
    %1614 = vmatpush1.msra.mxu0 0.0
    %1615 = vmatprep.subr.mxu0 0.0
    %1616 = vmatpush1.msra.mxu0 0.0
    %1617 = vmatprep.subr.mxu0 0.0
    %1618 = vmatpush1.msra.mxu0 0.0
    %1619 = vmatprep.subr.mxu0 0.0
    %1620 = vmatpush1.msra.mxu0 0.0
    %1621 = vmatprep.subr.mxu0 0.0
    %1622 = vmatpush1.msra.mxu0 0.0
    %1623 = vmatprep.subr.mxu0 0.0
    %1624 = vmatpush1.msra.mxu0 0.0
    %1625 = vmatprep.subr.mxu0 0.0
    %1626 = vmatpush1.msra.mxu0 0.0
    %1627 = vmatprep.subr.mxu0 0.0
    %1628 = vmatpush1.msra.mxu0 0.0
    %1629 = vmatprep.subr.mxu0 0.0
    %1630 = vmatpush1.msra.mxu0 0.0
    %1631 = vmatprep.subr.mxu0 0.0
    %1632 = vmatpush1.msra.mxu0 0.0
    %1633 = vmatprep.subr.mxu0 0.0
    %1634 = vmatpush1.msra.mxu0 0.0
    %1635 = vmatprep.subr.mxu0 0.0
    %1636 = vmatpush1.msra.mxu0 0.0
    %1637 = vmatprep.subr.mxu0 0.0
    %1638 = vmatpush1.msra.mxu0 0.0
    %1639 = vmatprep.subr.mxu0 0.0
    %1640 = vmatpush1.msra.mxu0 0.0
    %1641 = vmatprep.subr.mxu0 0.0
    %1642 = vmatpush1.msra.mxu0 0.0
    %1643 = vmatprep.subr.mxu0 0.0
    %1644 = vmatpush1.msra.mxu0 0.0
    %1645 = vmatprep.subr.mxu0 0.0
    %1646 = vmatpush1.msra.mxu0 0.0
    %1647 = vmatprep.mubr.f32.mxu0 0.0
    %1648 = vmatmul.mubr.f32.gmra.mrb[0].mxu0 %v1581
    %v1649 = vpop.f32.mrb[0].mxu0
    %v1650 = vadd.f32 %v1577, %v1649
    %v1651 = vpop.f32.mrb[0].mxu0
    %1652 = vdwg.mxu0
    %v1653 = vld [vmem:[%s49] sm:$0xff]
    %v1654 = vld [vmem:[%s49 + $0x8] sm:$0xff]
    %v1656 = vsel %vm1255, %v1415, 0
    %1658 = vmatprep.subr.mxu0 0.0
    %1659 = vmatpush1.msra.mxu0 %v1653
    %1660 = vmatprep.subr.mxu0 0.0
    %1661 = vmatpush1.msra.mxu0 %v1654
    %1662 = vmatprep.subr.mxu0 0.0
    %1663 = vmatpush1.msra.mxu0 0.0
    %1664 = vmatprep.subr.mxu0 0.0
    %1665 = vmatpush1.msra.mxu0 0.0
    %1666 = vmatprep.subr.mxu0 0.0
    %1667 = vmatpush1.msra.mxu0 0.0
    %1668 = vmatprep.subr.mxu0 0.0
    %1669 = vmatpush1.msra.mxu0 0.0
    %1670 = vmatprep.subr.mxu0 0.0
    %1671 = vmatpush1.msra.mxu0 0.0
    %1672 = vmatprep.subr.mxu0 0.0
    %1673 = vmatpush1.msra.mxu0 0.0
    %1674 = vmatprep.subr.mxu0 0.0
    %1675 = vmatpush1.msra.mxu0 0.0
    %1676 = vmatprep.subr.mxu0 0.0
    %1677 = vmatpush1.msra.mxu0 0.0
    %1678 = vmatprep.subr.mxu0 0.0
    %1679 = vmatpush1.msra.mxu0 0.0
    %1680 = vmatprep.subr.mxu0 0.0
    %1681 = vmatpush1.msra.mxu0 0.0
    %1682 = vmatprep.subr.mxu0 0.0
    %1683 = vmatpush1.msra.mxu0 0.0
    %1684 = vmatprep.subr.mxu0 0.0
    %1685 = vmatpush1.msra.mxu0 0.0
    %1686 = vmatprep.subr.mxu0 0.0
    %1687 = vmatpush1.msra.mxu0 0.0
    %1688 = vmatprep.subr.mxu0 0.0
    %1689 = vmatpush1.msra.mxu0 0.0
    %1690 = vmatprep.subr.mxu0 0.0
    %1691 = vmatpush1.msra.mxu0 0.0
    %1692 = vmatprep.subr.mxu0 0.0
    %1693 = vmatpush1.msra.mxu0 0.0
    %1694 = vmatprep.subr.mxu0 0.0
    %1695 = vmatpush1.msra.mxu0 0.0
    %1696 = vmatprep.subr.mxu0 0.0
    %1697 = vmatpush1.msra.mxu0 0.0
    %1698 = vmatprep.subr.mxu0 0.0
    %1699 = vmatpush1.msra.mxu0 0.0
    %1700 = vmatprep.subr.mxu0 0.0
    %1701 = vmatpush1.msra.mxu0 0.0
    %1702 = vmatprep.subr.mxu0 0.0
    %1703 = vmatpush1.msra.mxu0 0.0
    %1704 = vmatprep.subr.mxu0 0.0
    %1705 = vmatpush1.msra.mxu0 0.0
    %1706 = vmatprep.subr.mxu0 0.0
    %1707 = vmatpush1.msra.mxu0 0.0
    %1708 = vmatprep.subr.mxu0 0.0
    %1709 = vmatpush1.msra.mxu0 0.0
    %1710 = vmatprep.subr.mxu0 0.0
    %1711 = vmatpush1.msra.mxu0 0.0
    %1712 = vmatprep.subr.mxu0 0.0
    %1713 = vmatpush1.msra.mxu0 0.0
    %1714 = vmatprep.subr.mxu0 0.0
    %1715 = vmatpush1.msra.mxu0 0.0
    %1716 = vmatprep.subr.mxu0 0.0
    %1717 = vmatpush1.msra.mxu0 0.0
    %1718 = vmatprep.subr.mxu0 0.0
    %1719 = vmatpush1.msra.mxu0 0.0
    %1720 = vmatprep.subr.mxu0 0.0
    %1721 = vmatpush1.msra.mxu0 0.0
    %1722 = vmatprep.mubr.f32.mxu0 0.0
    %1723 = vmatmul.mubr.f32.gmra.mrb[0].mxu0 %v1656
    %v1724 = vpop.f32.mrb[0].mxu0
    %v1725 = vadd.f32 0.0, %v1724
    %v1726 = vpop.f32.mrb[0].mxu0
    %1727 = vdwg.mxu0
    %v1728 = vadd.f32 %v1650, %v1725
    %v1729 = vld [vmem:[%s51] sm:$0x1]
    %v1731 = vlaneseq
    %v1732 = vshrl.u32 %v1731, 7
    %v1733 = vsub.s32 0, %v1732
    %v1734 = vrot.slane %v1729, %v1733
    %v1736 = vadd.f32 %v1728, %v1734
    %v1737 = vmax.f32 %v1736, 0.0
    %v1738 = vld [vmem:[%s53] sm:$0xff]
    %v1739 = vld [vmem:[%s53 + $0x8] sm:$0xff]
    %v1740 = vld [vmem:[%s53 + $0x10] sm:$0xff]
    %v1741 = vld [vmem:[%s53 + $0x18] sm:$0xff]
    %v1742 = vld [vmem:[%s55] sm:$0x1]
    %v1744 = vlaneseq
    %v1745 = vshrl.u32 %v1744, 7
    %v1746 = vsub.s32 0, %v1745
    %v1747 = vrot.slane %v1742, %v1746
    %vm1749 = vcmask 261120
    %v1751 = vsel %vm1749, %v1737, 0
    %1753 = vmatprep.subr.mxu0 0.0
    %1754 = vmatpush1.msra.mxu0 %v1738
    %1755 = vmatprep.subr.mxu0 0.0
    %1756 = vmatpush1.msra.mxu0 %v1739
    %1757 = vmatprep.subr.mxu0 0.0
    %1758 = vmatpush1.msra.mxu0 %v1740
    %1759 = vmatprep.subr.mxu0 0.0
    %1760 = vmatpush1.msra.mxu0 %v1741
    %1761 = vmatprep.subr.mxu0 0.0
    %1762 = vmatpush1.msra.mxu0 0.0
    %1763 = vmatprep.subr.mxu0 0.0
    %1764 = vmatpush1.msra.mxu0 0.0
    %1765 = vmatprep.subr.mxu0 0.0
    %1766 = vmatpush1.msra.mxu0 0.0
    %1767 = vmatprep.subr.mxu0 0.0
    %1768 = vmatpush1.msra.mxu0 0.0
    %1769 = vmatprep.subr.mxu0 0.0
    %1770 = vmatpush1.msra.mxu0 0.0
    %1771 = vmatprep.subr.mxu0 0.0
    %1772 = vmatpush1.msra.mxu0 0.0
    %1773 = vmatprep.subr.mxu0 0.0
    %1774 = vmatpush1.msra.mxu0 0.0
    %1775 = vmatprep.subr.mxu0 0.0
    %1776 = vmatpush1.msra.mxu0 0.0
    %1777 = vmatprep.subr.mxu0 0.0
    %1778 = vmatpush1.msra.mxu0 0.0
    %1779 = vmatprep.subr.mxu0 0.0
    %1780 = vmatpush1.msra.mxu0 0.0
    %1781 = vmatprep.subr.mxu0 0.0
    %1782 = vmatpush1.msra.mxu0 0.0
    %1783 = vmatprep.subr.mxu0 0.0
    %1784 = vmatpush1.msra.mxu0 0.0
    %1785 = vmatprep.subr.mxu0 0.0
    %1786 = vmatpush1.msra.mxu0 0.0
    %1787 = vmatprep.subr.mxu0 0.0
    %1788 = vmatpush1.msra.mxu0 0.0
    %1789 = vmatprep.subr.mxu0 0.0
    %1790 = vmatpush1.msra.mxu0 0.0
    %1791 = vmatprep.subr.mxu0 0.0
    %1792 = vmatpush1.msra.mxu0 0.0
    %1793 = vmatprep.subr.mxu0 0.0
    %1794 = vmatpush1.msra.mxu0 0.0
    %1795 = vmatprep.subr.mxu0 0.0
    %1796 = vmatpush1.msra.mxu0 0.0
    %1797 = vmatprep.subr.mxu0 0.0
    %1798 = vmatpush1.msra.mxu0 0.0
    %1799 = vmatprep.subr.mxu0 0.0
    %1800 = vmatpush1.msra.mxu0 0.0
    %1801 = vmatprep.subr.mxu0 0.0
    %1802 = vmatpush1.msra.mxu0 0.0
    %1803 = vmatprep.subr.mxu0 0.0
    %1804 = vmatpush1.msra.mxu0 0.0
    %1805 = vmatprep.subr.mxu0 0.0
    %1806 = vmatpush1.msra.mxu0 0.0
    %1807 = vmatprep.subr.mxu0 0.0
    %1808 = vmatpush1.msra.mxu0 0.0
    %1809 = vmatprep.subr.mxu0 0.0
    %1810 = vmatpush1.msra.mxu0 0.0
    %1811 = vmatprep.subr.mxu0 0.0
    %1812 = vmatpush1.msra.mxu0 0.0
    %1813 = vmatprep.subr.mxu0 0.0
    %1814 = vmatpush1.msra.mxu0 0.0
    %1815 = vmatprep.subr.mxu0 0.0
    %1816 = vmatpush1.msra.mxu0 0.0
    %1817 = vmatprep.mubr.f32.mxu0 0.0
    %1818 = vmatmul.mubr.f32.gmra.mrb[0].mxu0 %v1751
    %v1819 = vpop.f32.mrb[0].mxu0
    %v1820 = vadd.f32 %v1747, %v1819
    %v1821 = vpop.f32.mrb[0].mxu0
    %1822 = vdwg.mxu0
    %v1823 = vld [vmem:[%s57] sm:$0xff]
    %v1824 = vld [vmem:[%s59] sm:$0x1]
    %v1826 = vlaneseq
    %v1827 = vshrl.u32 %v1826, 7
    %v1828 = vsub.s32 0, %v1827
    %v1829 = vrot.slane %v1824, %v1828
    %vm1831 = vcmask 64512
    %v1833 = vsel %vm1831, %v720, 0
    %1835 = vmatprep.subr.mxu0 0.0
    %1836 = vmatpush1.msra.mxu0 %v1823
    %1837 = vmatprep.subr.mxu0 0.0
    %1838 = vmatpush1.msra.mxu0 0.0
    %1839 = vmatprep.subr.mxu0 0.0
    %1840 = vmatpush1.msra.mxu0 0.0
    %1841 = vmatprep.subr.mxu0 0.0
    %1842 = vmatpush1.msra.mxu0 0.0
    %1843 = vmatprep.subr.mxu0 0.0
    %1844 = vmatpush1.msra.mxu0 0.0
    %1845 = vmatprep.subr.mxu0 0.0
    %1846 = vmatpush1.msra.mxu0 0.0
    %1847 = vmatprep.subr.mxu0 0.0
    %1848 = vmatpush1.msra.mxu0 0.0
    %1849 = vmatprep.subr.mxu0 0.0
    %1850 = vmatpush1.msra.mxu0 0.0
    %1851 = vmatprep.subr.mxu0 0.0
    %1852 = vmatpush1.msra.mxu0 0.0
    %1853 = vmatprep.subr.mxu0 0.0
    %1854 = vmatpush1.msra.mxu0 0.0
    %1855 = vmatprep.subr.mxu0 0.0
    %1856 = vmatpush1.msra.mxu0 0.0
    %1857 = vmatprep.subr.mxu0 0.0
    %1858 = vmatpush1.msra.mxu0 0.0
    %1859 = vmatprep.subr.mxu0 0.0
    %1860 = vmatpush1.msra.mxu0 0.0
    %1861 = vmatprep.subr.mxu0 0.0
    %1862 = vmatpush1.msra.mxu0 0.0
    %1863 = vmatprep.subr.mxu0 0.0
    %1864 = vmatpush1.msra.mxu0 0.0
    %1865 = vmatprep.subr.mxu0 0.0
    %1866 = vmatpush1.msra.mxu0 0.0
    %1867 = vmatprep.subr.mxu0 0.0
    %1868 = vmatpush1.msra.mxu0 0.0
    %1869 = vmatprep.subr.mxu0 0.0
    %1870 = vmatpush1.msra.mxu0 0.0
    %1871 = vmatprep.subr.mxu0 0.0
    %1872 = vmatpush1.msra.mxu0 0.0
    %1873 = vmatprep.subr.mxu0 0.0
    %1874 = vmatpush1.msra.mxu0 0.0
    %1875 = vmatprep.subr.mxu0 0.0
    %1876 = vmatpush1.msra.mxu0 0.0
    %1877 = vmatprep.subr.mxu0 0.0
    %1878 = vmatpush1.msra.mxu0 0.0
    %1879 = vmatprep.subr.mxu0 0.0
    %1880 = vmatpush1.msra.mxu0 0.0
    %1881 = vmatprep.subr.mxu0 0.0
    %1882 = vmatpush1.msra.mxu0 0.0
    %1883 = vmatprep.subr.mxu0 0.0
    %1884 = vmatpush1.msra.mxu0 0.0
    %1885 = vmatprep.subr.mxu0 0.0
    %1886 = vmatpush1.msra.mxu0 0.0
    %1887 = vmatprep.subr.mxu0 0.0
    %1888 = vmatpush1.msra.mxu0 0.0
    %1889 = vmatprep.subr.mxu0 0.0
    %1890 = vmatpush1.msra.mxu0 0.0
    %1891 = vmatprep.subr.mxu0 0.0
    %1892 = vmatpush1.msra.mxu0 0.0
    %1893 = vmatprep.subr.mxu0 0.0
    %1894 = vmatpush1.msra.mxu0 0.0
    %1895 = vmatprep.subr.mxu0 0.0
    %1896 = vmatpush1.msra.mxu0 0.0
    %1897 = vmatprep.subr.mxu0 0.0
    %1898 = vmatpush1.msra.mxu0 0.0
    %1899 = vmatprep.mubr.f32.mxu0 0.0
    %1900 = vmatmul.mubr.f32.gmra.mrb[0].mxu0 %v1833
    %v1901 = vpop.f32.mrb[0].mxu0
    %v1902 = vadd.f32 %v1829, %v1901
    %v1903 = vpop.f32.mrb[0].mxu0
    %1904 = vdwg.mxu0
    %v1905 = vmax.f32 %v1902, 0.0
    %v1906 = vld [vmem:[%s61] sm:$0xff]
    %v1907 = vld [vmem:[%s63] sm:$0x1]
    %v1909 = vlaneseq
    %v1910 = vshrl.u32 %v1909, 7
    %v1911 = vsub.s32 0, %v1910
    %v1912 = vrot.slane %v1907, %v1911
    %v1915 = vsel %vm1831, %v1242, 0
    %1917 = vmatprep.subr.mxu0 0.0
    %1918 = vmatpush1.msra.mxu0 %v1906
    %1919 = vmatprep.subr.mxu0 0.0
    %1920 = vmatpush1.msra.mxu0 0.0
    %1921 = vmatprep.subr.mxu0 0.0
    %1922 = vmatpush1.msra.mxu0 0.0
    %1923 = vmatprep.subr.mxu0 0.0
    %1924 = vmatpush1.msra.mxu0 0.0
    %1925 = vmatprep.subr.mxu0 0.0
    %1926 = vmatpush1.msra.mxu0 0.0
    %1927 = vmatprep.subr.mxu0 0.0
    %1928 = vmatpush1.msra.mxu0 0.0
    %1929 = vmatprep.subr.mxu0 0.0
    %1930 = vmatpush1.msra.mxu0 0.0
    %1931 = vmatprep.subr.mxu0 0.0
    %1932 = vmatpush1.msra.mxu0 0.0
    %1933 = vmatprep.subr.mxu0 0.0
    %1934 = vmatpush1.msra.mxu0 0.0
    %1935 = vmatprep.subr.mxu0 0.0
    %1936 = vmatpush1.msra.mxu0 0.0
    %1937 = vmatprep.subr.mxu0 0.0
    %1938 = vmatpush1.msra.mxu0 0.0
    %1939 = vmatprep.subr.mxu0 0.0
    %1940 = vmatpush1.msra.mxu0 0.0
    %1941 = vmatprep.subr.mxu0 0.0
    %1942 = vmatpush1.msra.mxu0 0.0
    %1943 = vmatprep.subr.mxu0 0.0
    %1944 = vmatpush1.msra.mxu0 0.0
    %1945 = vmatprep.subr.mxu0 0.0
    %1946 = vmatpush1.msra.mxu0 0.0
    %1947 = vmatprep.subr.mxu0 0.0
    %1948 = vmatpush1.msra.mxu0 0.0
    %1949 = vmatprep.subr.mxu0 0.0
    %1950 = vmatpush1.msra.mxu0 0.0
    %1951 = vmatprep.subr.mxu0 0.0
    %1952 = vmatpush1.msra.mxu0 0.0
    %1953 = vmatprep.subr.mxu0 0.0
    %1954 = vmatpush1.msra.mxu0 0.0
    %1955 = vmatprep.subr.mxu0 0.0
    %1956 = vmatpush1.msra.mxu0 0.0
    %1957 = vmatprep.subr.mxu0 0.0
    %1958 = vmatpush1.msra.mxu0 0.0
    %1959 = vmatprep.subr.mxu0 0.0
    %1960 = vmatpush1.msra.mxu0 0.0
    %1961 = vmatprep.subr.mxu0 0.0
    %1962 = vmatpush1.msra.mxu0 0.0
    %1963 = vmatprep.subr.mxu0 0.0
    %1964 = vmatpush1.msra.mxu0 0.0
    %1965 = vmatprep.subr.mxu0 0.0
    %1966 = vmatpush1.msra.mxu0 0.0
    %1967 = vmatprep.subr.mxu0 0.0
    %1968 = vmatpush1.msra.mxu0 0.0
    %1969 = vmatprep.subr.mxu0 0.0
    %1970 = vmatpush1.msra.mxu0 0.0
    %1971 = vmatprep.subr.mxu0 0.0
    %1972 = vmatpush1.msra.mxu0 0.0
    %1973 = vmatprep.subr.mxu0 0.0
    %1974 = vmatpush1.msra.mxu0 0.0
    %1975 = vmatprep.subr.mxu0 0.0
    %1976 = vmatpush1.msra.mxu0 0.0
    %1977 = vmatprep.subr.mxu0 0.0
    %1978 = vmatpush1.msra.mxu0 0.0
    %1979 = vmatprep.subr.mxu0 0.0
    %1980 = vmatpush1.msra.mxu0 0.0
    %1981 = vmatprep.mubr.f32.mxu0 0.0
    %1982 = vmatmul.mubr.f32.gmra.mrb[0].mxu0 %v1915
    %v1983 = vpop.f32.mrb[0].mxu0
    %v1984 = vadd.f32 %v1912, %v1983
    %v1985 = vpop.f32.mrb[0].mxu0
    %1986 = vdwg.mxu0
    %v1987 = vmax.f32 %v1984, 0.0
    %v1988 = vld [vmem:[%s65] sm:$0xff]
    %v1989 = vld [vmem:[%s67] sm:$0x1]
    %v1991 = vlaneseq
    %v1992 = vshrl.u32 %v1991, 7
    %v1993 = vsub.s32 0, %v1992
    %v1994 = vrot.slane %v1989, %v1993
    %v1997 = vsel %vm1831, %v1500, 0
    %1999 = vmatprep.subr.mxu0 0.0
    %2000 = vmatpush1.msra.mxu0 %v1988
    %2001 = vmatprep.subr.mxu0 0.0
    %2002 = vmatpush1.msra.mxu0 0.0
    %2003 = vmatprep.subr.mxu0 0.0
    %2004 = vmatpush1.msra.mxu0 0.0
    %2005 = vmatprep.subr.mxu0 0.0
    %2006 = vmatpush1.msra.mxu0 0.0
    %2007 = vmatprep.subr.mxu0 0.0
    %2008 = vmatpush1.msra.mxu0 0.0
    %2009 = vmatprep.subr.mxu0 0.0
    %2010 = vmatpush1.msra.mxu0 0.0
    %2011 = vmatprep.subr.mxu0 0.0
    %2012 = vmatpush1.msra.mxu0 0.0
    %2013 = vmatprep.subr.mxu0 0.0
    %2014 = vmatpush1.msra.mxu0 0.0
    %2015 = vmatprep.subr.mxu0 0.0
    %2016 = vmatpush1.msra.mxu0 0.0
    %2017 = vmatprep.subr.mxu0 0.0
    %2018 = vmatpush1.msra.mxu0 0.0
    %2019 = vmatprep.subr.mxu0 0.0
    %2020 = vmatpush1.msra.mxu0 0.0
    %2021 = vmatprep.subr.mxu0 0.0
    %2022 = vmatpush1.msra.mxu0 0.0
    %2023 = vmatprep.subr.mxu0 0.0
    %2024 = vmatpush1.msra.mxu0 0.0
    %2025 = vmatprep.subr.mxu0 0.0
    %2026 = vmatpush1.msra.mxu0 0.0
    %2027 = vmatprep.subr.mxu0 0.0
    %2028 = vmatpush1.msra.mxu0 0.0
    %2029 = vmatprep.subr.mxu0 0.0
    %2030 = vmatpush1.msra.mxu0 0.0
    %2031 = vmatprep.subr.mxu0 0.0
    %2032 = vmatpush1.msra.mxu0 0.0
    %2033 = vmatprep.subr.mxu0 0.0
    %2034 = vmatpush1.msra.mxu0 0.0
    %2035 = vmatprep.subr.mxu0 0.0
    %2036 = vmatpush1.msra.mxu0 0.0
    %2037 = vmatprep.subr.mxu0 0.0
    %2038 = vmatpush1.msra.mxu0 0.0
    %2039 = vmatprep.subr.mxu0 0.0
    %2040 = vmatpush1.msra.mxu0 0.0
    %2041 = vmatprep.subr.mxu0 0.0
    %2042 = vmatpush1.msra.mxu0 0.0
    %2043 = vmatprep.subr.mxu0 0.0
    %2044 = vmatpush1.msra.mxu0 0.0
    %2045 = vmatprep.subr.mxu0 0.0
    %2046 = vmatpush1.msra.mxu0 0.0
    %2047 = vmatprep.subr.mxu0 0.0
    %2048 = vmatpush1.msra.mxu0 0.0
    %2049 = vmatprep.subr.mxu0 0.0
    %2050 = vmatpush1.msra.mxu0 0.0
    %2051 = vmatprep.subr.mxu0 0.0
    %2052 = vmatpush1.msra.mxu0 0.0
    %2053 = vmatprep.subr.mxu0 0.0
    %2054 = vmatpush1.msra.mxu0 0.0
    %2055 = vmatprep.subr.mxu0 0.0
    %2056 = vmatpush1.msra.mxu0 0.0
    %2057 = vmatprep.subr.mxu0 0.0
    %2058 = vmatpush1.msra.mxu0 0.0
    %2059 = vmatprep.subr.mxu0 0.0
    %2060 = vmatpush1.msra.mxu0 0.0
    %2061 = vmatprep.subr.mxu0 0.0
    %2062 = vmatpush1.msra.mxu0 0.0
    %2063 = vmatprep.mubr.f32.mxu0 0.0
    %2064 = vmatmul.mubr.f32.gmra.mrb[0].mxu0 %v1997
    %v2065 = vpop.f32.mrb[0].mxu0
    %v2066 = vadd.f32 %v1994, %v2065
    %v2067 = vpop.f32.mrb[0].mxu0
    %2068 = vdwg.mxu0
    %v2069 = vmax.f32 %v2066, 0.0
    %v2070 = vld [vmem:[%s69] sm:$0xff]
    %v2071 = vld [vmem:[%s69 + $0x8] sm:$0xff]
    %v2072 = vld [vmem:[%s71] sm:$0xff]
    %v2074 = vsel %vm1831, %v1905, 0
    %2076 = vmatprep.subr.mxu0 0.0
    %2077 = vmatpush1.msra.mxu0 %v2072
    %2078 = vmatprep.subr.mxu0 0.0
    %2079 = vmatpush1.msra.mxu0 0.0
    %2080 = vmatprep.subr.mxu0 0.0
    %2081 = vmatpush1.msra.mxu0 0.0
    %2082 = vmatprep.subr.mxu0 0.0
    %2083 = vmatpush1.msra.mxu0 0.0
    %2084 = vmatprep.subr.mxu0 0.0
    %2085 = vmatpush1.msra.mxu0 0.0
    %2086 = vmatprep.subr.mxu0 0.0
    %2087 = vmatpush1.msra.mxu0 0.0
    %2088 = vmatprep.subr.mxu0 0.0
    %2089 = vmatpush1.msra.mxu0 0.0
    %2090 = vmatprep.subr.mxu0 0.0
    %2091 = vmatpush1.msra.mxu0 0.0
    %2092 = vmatprep.subr.mxu0 0.0
    %2093 = vmatpush1.msra.mxu0 0.0
    %2094 = vmatprep.subr.mxu0 0.0
    %2095 = vmatpush1.msra.mxu0 0.0
    %2096 = vmatprep.subr.mxu0 0.0
    %2097 = vmatpush1.msra.mxu0 0.0
    %2098 = vmatprep.subr.mxu0 0.0
    %2099 = vmatpush1.msra.mxu0 0.0
    %2100 = vmatprep.subr.mxu0 0.0
    %2101 = vmatpush1.msra.mxu0 0.0
    %2102 = vmatprep.subr.mxu0 0.0
    %2103 = vmatpush1.msra.mxu0 0.0
    %2104 = vmatprep.subr.mxu0 0.0
    %2105 = vmatpush1.msra.mxu0 0.0
    %2106 = vmatprep.subr.mxu0 0.0
    %2107 = vmatpush1.msra.mxu0 0.0
    %2108 = vmatprep.subr.mxu0 0.0
    %2109 = vmatpush1.msra.mxu0 0.0
    %2110 = vmatprep.subr.mxu0 0.0
    %2111 = vmatpush1.msra.mxu0 0.0
    %2112 = vmatprep.subr.mxu0 0.0
    %2113 = vmatpush1.msra.mxu0 0.0
    %2114 = vmatprep.subr.mxu0 0.0
    %2115 = vmatpush1.msra.mxu0 0.0
    %2116 = vmatprep.subr.mxu0 0.0
    %2117 = vmatpush1.msra.mxu0 0.0
    %2118 = vmatprep.subr.mxu0 0.0
    %2119 = vmatpush1.msra.mxu0 0.0
    %2120 = vmatprep.subr.mxu0 0.0
    %2121 = vmatpush1.msra.mxu0 0.0
    %2122 = vmatprep.subr.mxu0 0.0
    %2123 = vmatpush1.msra.mxu0 0.0
    %2124 = vmatprep.subr.mxu0 0.0
    %2125 = vmatpush1.msra.mxu0 0.0
    %2126 = vmatprep.subr.mxu0 0.0
    %2127 = vmatpush1.msra.mxu0 0.0
    %2128 = vmatprep.subr.mxu0 0.0
    %2129 = vmatpush1.msra.mxu0 0.0
    %2130 = vmatprep.subr.mxu0 0.0
    %2131 = vmatpush1.msra.mxu0 0.0
    %2132 = vmatprep.subr.mxu0 0.0
    %2133 = vmatpush1.msra.mxu0 0.0
    %2134 = vmatprep.subr.mxu0 0.0
    %2135 = vmatpush1.msra.mxu0 0.0
    %2136 = vmatprep.subr.mxu0 0.0
    %2137 = vmatpush1.msra.mxu0 0.0
    %2138 = vmatprep.subr.mxu0 0.0
    %2139 = vmatpush1.msra.mxu0 0.0
    %2140 = vmatprep.mubr.f32.mxu0 0.0
    %2141 = vmatmul.mubr.f32.gmra.mrb[0].mxu0 %v2074
    %v2142 = vpop.f32.mrb[0].mxu0
    %v2143 = vadd.f32 0.0, %v2142
    %v2144 = vpop.f32.mrb[0].mxu0
    %2145 = vdwg.mxu0
    %v2147 = vsel %vm1255, %v1820, 0
    %2149 = vmatprep.subr.mxu0 0.0
    %2150 = vmatpush1.msra.mxu0 %v2070
    %2151 = vmatprep.subr.mxu0 0.0
    %2152 = vmatpush1.msra.mxu0 %v2071
    %2153 = vmatprep.subr.mxu0 0.0
    %2154 = vmatpush1.msra.mxu0 0.0
    %2155 = vmatprep.subr.mxu0 0.0
    %2156 = vmatpush1.msra.mxu0 0.0
    %2157 = vmatprep.subr.mxu0 0.0
    %2158 = vmatpush1.msra.mxu0 0.0
    %2159 = vmatprep.subr.mxu0 0.0
    %2160 = vmatpush1.msra.mxu0 0.0
    %2161 = vmatprep.subr.mxu0 0.0
    %2162 = vmatpush1.msra.mxu0 0.0
    %2163 = vmatprep.subr.mxu0 0.0
    %2164 = vmatpush1.msra.mxu0 0.0
    %2165 = vmatprep.subr.mxu0 0.0
    %2166 = vmatpush1.msra.mxu0 0.0
    %2167 = vmatprep.subr.mxu0 0.0
    %2168 = vmatpush1.msra.mxu0 0.0
    %2169 = vmatprep.subr.mxu0 0.0
    %2170 = vmatpush1.msra.mxu0 0.0
    %2171 = vmatprep.subr.mxu0 0.0
    %2172 = vmatpush1.msra.mxu0 0.0
    %2173 = vmatprep.subr.mxu0 0.0
    %2174 = vmatpush1.msra.mxu0 0.0
    %2175 = vmatprep.subr.mxu0 0.0
    %2176 = vmatpush1.msra.mxu0 0.0
    %2177 = vmatprep.subr.mxu0 0.0
    %2178 = vmatpush1.msra.mxu0 0.0
    %2179 = vmatprep.subr.mxu0 0.0
    %2180 = vmatpush1.msra.mxu0 0.0
    %2181 = vmatprep.subr.mxu0 0.0
    %2182 = vmatpush1.msra.mxu0 0.0
    %2183 = vmatprep.subr.mxu0 0.0
    %2184 = vmatpush1.msra.mxu0 0.0
    %2185 = vmatprep.subr.mxu0 0.0
    %2186 = vmatpush1.msra.mxu0 0.0
    %2187 = vmatprep.subr.mxu0 0.0
    %2188 = vmatpush1.msra.mxu0 0.0
    %2189 = vmatprep.subr.mxu0 0.0
    %2190 = vmatpush1.msra.mxu0 0.0
    %2191 = vmatprep.subr.mxu0 0.0
    %2192 = vmatpush1.msra.mxu0 0.0
    %2193 = vmatprep.subr.mxu0 0.0
    %2194 = vmatpush1.msra.mxu0 0.0
    %2195 = vmatprep.subr.mxu0 0.0
    %2196 = vmatpush1.msra.mxu0 0.0
    %2197 = vmatprep.subr.mxu0 0.0
    %2198 = vmatpush1.msra.mxu0 0.0
    %2199 = vmatprep.subr.mxu0 0.0
    %2200 = vmatpush1.msra.mxu0 0.0
    %2201 = vmatprep.subr.mxu0 0.0
    %2202 = vmatpush1.msra.mxu0 0.0
    %2203 = vmatprep.subr.mxu0 0.0
    %2204 = vmatpush1.msra.mxu0 0.0
    %2205 = vmatprep.subr.mxu0 0.0
    %2206 = vmatpush1.msra.mxu0 0.0
    %2207 = vmatprep.subr.mxu0 0.0
    %2208 = vmatpush1.msra.mxu0 0.0
    %2209 = vmatprep.subr.mxu0 0.0
    %2210 = vmatpush1.msra.mxu0 0.0
    %2211 = vmatprep.subr.mxu0 0.0
    %2212 = vmatpush1.msra.mxu0 0.0
    %2213 = vmatprep.mubr.f32.mxu0 0.0
    %2214 = vmatmul.mubr.f32.gmra.mrb[0].mxu0 %v2147
    %v2215 = vpop.f32.mrb[0].mxu0
    %v2216 = vadd.f32 %v2143, %v2215
    %v2217 = vpop.f32.mrb[0].mxu0
    %2218 = vdwg.mxu0
    %v2219 = vld [vmem:[%s73] sm:$0xff]
    %v2221 = vsel %vm1831, %v1987, 0
    %2223 = vmatprep.subr.mxu0 0.0
    %2224 = vmatpush1.msra.mxu0 %v2219
    %2225 = vmatprep.subr.mxu0 0.0
    %2226 = vmatpush1.msra.mxu0 0.0
    %2227 = vmatprep.subr.mxu0 0.0
    %2228 = vmatpush1.msra.mxu0 0.0
    %2229 = vmatprep.subr.mxu0 0.0
    %2230 = vmatpush1.msra.mxu0 0.0
    %2231 = vmatprep.subr.mxu0 0.0
    %2232 = vmatpush1.msra.mxu0 0.0
    %2233 = vmatprep.subr.mxu0 0.0
    %2234 = vmatpush1.msra.mxu0 0.0
    %2235 = vmatprep.subr.mxu0 0.0
    %2236 = vmatpush1.msra.mxu0 0.0
    %2237 = vmatprep.subr.mxu0 0.0
    %2238 = vmatpush1.msra.mxu0 0.0
    %2239 = vmatprep.subr.mxu0 0.0
    %2240 = vmatpush1.msra.mxu0 0.0
    %2241 = vmatprep.subr.mxu0 0.0
    %2242 = vmatpush1.msra.mxu0 0.0
    %2243 = vmatprep.subr.mxu0 0.0
    %2244 = vmatpush1.msra.mxu0 0.0
    %2245 = vmatprep.subr.mxu0 0.0
    %2246 = vmatpush1.msra.mxu0 0.0
    %2247 = vmatprep.subr.mxu0 0.0
    %2248 = vmatpush1.msra.mxu0 0.0
    %2249 = vmatprep.subr.mxu0 0.0
    %2250 = vmatpush1.msra.mxu0 0.0
    %2251 = vmatprep.subr.mxu0 0.0
    %2252 = vmatpush1.msra.mxu0 0.0
    %2253 = vmatprep.subr.mxu0 0.0
    %2254 = vmatpush1.msra.mxu0 0.0
    %2255 = vmatprep.subr.mxu0 0.0
    %2256 = vmatpush1.msra.mxu0 0.0
    %2257 = vmatprep.subr.mxu0 0.0
    %2258 = vmatpush1.msra.mxu0 0.0
    %2259 = vmatprep.subr.mxu0 0.0
    %2260 = vmatpush1.msra.mxu0 0.0
    %2261 = vmatprep.subr.mxu0 0.0
    %2262 = vmatpush1.msra.mxu0 0.0
    %2263 = vmatprep.subr.mxu0 0.0
    %2264 = vmatpush1.msra.mxu0 0.0
    %2265 = vmatprep.subr.mxu0 0.0
    %2266 = vmatpush1.msra.mxu0 0.0
    %2267 = vmatprep.subr.mxu0 0.0
    %2268 = vmatpush1.msra.mxu0 0.0
    %2269 = vmatprep.subr.mxu0 0.0
    %2270 = vmatpush1.msra.mxu0 0.0
    %2271 = vmatprep.subr.mxu0 0.0
    %2272 = vmatpush1.msra.mxu0 0.0
    %2273 = vmatprep.subr.mxu0 0.0
    %2274 = vmatpush1.msra.mxu0 0.0
    %2275 = vmatprep.subr.mxu0 0.0
    %2276 = vmatpush1.msra.mxu0 0.0
    %2277 = vmatprep.subr.mxu0 0.0
    %2278 = vmatpush1.msra.mxu0 0.0
    %2279 = vmatprep.subr.mxu0 0.0
    %2280 = vmatpush1.msra.mxu0 0.0
    %2281 = vmatprep.subr.mxu0 0.0
    %2282 = vmatpush1.msra.mxu0 0.0
    %2283 = vmatprep.subr.mxu0 0.0
    %2284 = vmatpush1.msra.mxu0 0.0
    %2285 = vmatprep.subr.mxu0 0.0
    %2286 = vmatpush1.msra.mxu0 0.0
    %2287 = vmatprep.mubr.f32.mxu0 0.0
    %2288 = vmatmul.mubr.f32.gmra.mrb[0].mxu0 %v2221
    %v2289 = vpop.f32.mrb[0].mxu0
    %v2290 = vadd.f32 0.0, %v2289
    %v2291 = vpop.f32.mrb[0].mxu0
    %2292 = vdwg.mxu0
    %v2293 = vadd.f32 %v2216, %v2290
    %v2294 = vld [vmem:[%s75] sm:$0xff]
    %v2296 = vsel %vm1831, %v2069, 0
    %2298 = vmatprep.subr.mxu0 0.0
    %2299 = vmatpush1.msra.mxu0 %v2294
    %2300 = vmatprep.subr.mxu0 0.0
    %2301 = vmatpush1.msra.mxu0 0.0
    %2302 = vmatprep.subr.mxu0 0.0
    %2303 = vmatpush1.msra.mxu0 0.0
    %2304 = vmatprep.subr.mxu0 0.0
    %2305 = vmatpush1.msra.mxu0 0.0
    %2306 = vmatprep.subr.mxu0 0.0
    %2307 = vmatpush1.msra.mxu0 0.0
    %2308 = vmatprep.subr.mxu0 0.0
    %2309 = vmatpush1.msra.mxu0 0.0
    %2310 = vmatprep.subr.mxu0 0.0
    %2311 = vmatpush1.msra.mxu0 0.0
    %2312 = vmatprep.subr.mxu0 0.0
    %2313 = vmatpush1.msra.mxu0 0.0
    %2314 = vmatprep.subr.mxu0 0.0
    %2315 = vmatpush1.msra.mxu0 0.0
    %2316 = vmatprep.subr.mxu0 0.0
    %2317 = vmatpush1.msra.mxu0 0.0
    %2318 = vmatprep.subr.mxu0 0.0
    %2319 = vmatpush1.msra.mxu0 0.0
    %2320 = vmatprep.subr.mxu0 0.0
    %2321 = vmatpush1.msra.mxu0 0.0
    %2322 = vmatprep.subr.mxu0 0.0
    %2323 = vmatpush1.msra.mxu0 0.0
    %2324 = vmatprep.subr.mxu0 0.0
    %2325 = vmatpush1.msra.mxu0 0.0
    %2326 = vmatprep.subr.mxu0 0.0
    %2327 = vmatpush1.msra.mxu0 0.0
    %2328 = vmatprep.subr.mxu0 0.0
    %2329 = vmatpush1.msra.mxu0 0.0
    %2330 = vmatprep.subr.mxu0 0.0
    %2331 = vmatpush1.msra.mxu0 0.0
    %2332 = vmatprep.subr.mxu0 0.0
    %2333 = vmatpush1.msra.mxu0 0.0
    %2334 = vmatprep.subr.mxu0 0.0
    %2335 = vmatpush1.msra.mxu0 0.0
    %2336 = vmatprep.subr.mxu0 0.0
    %2337 = vmatpush1.msra.mxu0 0.0
    %2338 = vmatprep.subr.mxu0 0.0
    %2339 = vmatpush1.msra.mxu0 0.0
    %2340 = vmatprep.subr.mxu0 0.0
    %2341 = vmatpush1.msra.mxu0 0.0
    %2342 = vmatprep.subr.mxu0 0.0
    %2343 = vmatpush1.msra.mxu0 0.0
    %2344 = vmatprep.subr.mxu0 0.0
    %2345 = vmatpush1.msra.mxu0 0.0
    %2346 = vmatprep.subr.mxu0 0.0
    %2347 = vmatpush1.msra.mxu0 0.0
    %2348 = vmatprep.subr.mxu0 0.0
    %2349 = vmatpush1.msra.mxu0 0.0
    %2350 = vmatprep.subr.mxu0 0.0
    %2351 = vmatpush1.msra.mxu0 0.0
    %2352 = vmatprep.subr.mxu0 0.0
    %2353 = vmatpush1.msra.mxu0 0.0
    %2354 = vmatprep.subr.mxu0 0.0
    %2355 = vmatpush1.msra.mxu0 0.0
    %2356 = vmatprep.subr.mxu0 0.0
    %2357 = vmatpush1.msra.mxu0 0.0
    %2358 = vmatprep.subr.mxu0 0.0
    %2359 = vmatpush1.msra.mxu0 0.0
    %2360 = vmatprep.subr.mxu0 0.0
    %2361 = vmatpush1.msra.mxu0 0.0
    %2362 = vmatprep.mubr.f32.mxu0 0.0
    %2363 = vmatmul.mubr.f32.gmra.mrb[0].mxu0 %v2296
    %v2364 = vpop.f32.mrb[0].mxu0
    %v2365 = vadd.f32 0.0, %v2364
    %v2366 = vpop.f32.mrb[0].mxu0
    %2367 = vdwg.mxu0
    %v2368 = vadd.f32 %v2293, %v2365
    %v2369 = vld [vmem:[#allocation2] sm:$0x1]
    %v2371 = vlaneseq
    %v2372 = vshrl.u32 %v2371, 7
    %v2373 = vsub.s32 0, %v2372
    %v2374 = vrot.slane %v2369, %v2373
    %v2376 = vadd.f32 %v2368, %v2374
    %v2377 = vld [vmem:[%s79] sm:$0xff]
    %v2378 = vld [vmem:[%s79 + $0x8] sm:$0xff]
    %v2379 = vld [vmem:[%s81] sm:$0xff]
    %2380 = vmatprep.subr.mxu0 0.0
    %2381 = vmatpush1.msra.mxu0 %v2379
    %2382 = vmatprep.subr.mxu0 0.0
    %2383 = vmatpush1.msra.mxu0 0.0
    %2384 = vmatprep.subr.mxu0 0.0
    %2385 = vmatpush1.msra.mxu0 0.0
    %2386 = vmatprep.subr.mxu0 0.0
    %2387 = vmatpush1.msra.mxu0 0.0
    %2388 = vmatprep.subr.mxu0 0.0
    %2389 = vmatpush1.msra.mxu0 0.0
    %2390 = vmatprep.subr.mxu0 0.0
    %2391 = vmatpush1.msra.mxu0 0.0
    %2392 = vmatprep.subr.mxu0 0.0
    %2393 = vmatpush1.msra.mxu0 0.0
    %2394 = vmatprep.subr.mxu0 0.0
    %2395 = vmatpush1.msra.mxu0 0.0
    %2396 = vmatprep.subr.mxu0 0.0
    %2397 = vmatpush1.msra.mxu0 0.0
    %2398 = vmatprep.subr.mxu0 0.0
    %2399 = vmatpush1.msra.mxu0 0.0
    %2400 = vmatprep.subr.mxu0 0.0
    %2401 = vmatpush1.msra.mxu0 0.0
    %2402 = vmatprep.subr.mxu0 0.0
    %2403 = vmatpush1.msra.mxu0 0.0
    %2404 = vmatprep.subr.mxu0 0.0
    %2405 = vmatpush1.msra.mxu0 0.0
    %2406 = vmatprep.subr.mxu0 0.0
    %2407 = vmatpush1.msra.mxu0 0.0
    %2408 = vmatprep.subr.mxu0 0.0
    %2409 = vmatpush1.msra.mxu0 0.0
    %2410 = vmatprep.subr.mxu0 0.0
    %2411 = vmatpush1.msra.mxu0 0.0
    %2412 = vmatprep.subr.mxu0 0.0
    %2413 = vmatpush1.msra.mxu0 0.0
    %2414 = vmatprep.subr.mxu0 0.0
    %2415 = vmatpush1.msra.mxu0 0.0
    %2416 = vmatprep.subr.mxu0 0.0
    %2417 = vmatpush1.msra.mxu0 0.0
    %2418 = vmatprep.subr.mxu0 0.0
    %2419 = vmatpush1.msra.mxu0 0.0
    %2420 = vmatprep.subr.mxu0 0.0
    %2421 = vmatpush1.msra.mxu0 0.0
    %2422 = vmatprep.subr.mxu0 0.0
    %2423 = vmatpush1.msra.mxu0 0.0
    %2424 = vmatprep.subr.mxu0 0.0
    %2425 = vmatpush1.msra.mxu0 0.0
    %2426 = vmatprep.subr.mxu0 0.0
    %2427 = vmatpush1.msra.mxu0 0.0
    %2428 = vmatprep.subr.mxu0 0.0
    %2429 = vmatpush1.msra.mxu0 0.0
    %2430 = vmatprep.subr.mxu0 0.0
    %2431 = vmatpush1.msra.mxu0 0.0
    %2432 = vmatprep.subr.mxu0 0.0
    %2433 = vmatpush1.msra.mxu0 0.0
    %2434 = vmatprep.subr.mxu0 0.0
    %2435 = vmatpush1.msra.mxu0 0.0
    %2436 = vmatprep.subr.mxu0 0.0
    %2437 = vmatpush1.msra.mxu0 0.0
    %2438 = vmatprep.subr.mxu0 0.0
    %2439 = vmatpush1.msra.mxu0 0.0
    %2440 = vmatprep.subr.mxu0 0.0
    %2441 = vmatpush1.msra.mxu0 0.0
    %2442 = vmatprep.subr.mxu0 0.0
    %2443 = vmatpush1.msra.mxu0 0.0
    %2444 = vmatprep.mubr.f32.mxu0 0.0
    %2445 = vmatmul.mubr.f32.gmra.mrb[0].mxu0 %v2074
    %v2446 = vpop.f32.mrb[0].mxu0
    %v2447 = vadd.f32 0.0, %v2446
    %v2448 = vpop.f32.mrb[0].mxu0
    %2449 = vdwg.mxu0
    %2450 = vmatprep.subr.mxu0 0.0
    %2451 = vmatpush1.msra.mxu0 %v2377
    %2452 = vmatprep.subr.mxu0 0.0
    %2453 = vmatpush1.msra.mxu0 %v2378
    %2454 = vmatprep.subr.mxu0 0.0
    %2455 = vmatpush1.msra.mxu0 0.0
    %2456 = vmatprep.subr.mxu0 0.0
    %2457 = vmatpush1.msra.mxu0 0.0
    %2458 = vmatprep.subr.mxu0 0.0
    %2459 = vmatpush1.msra.mxu0 0.0
    %2460 = vmatprep.subr.mxu0 0.0
    %2461 = vmatpush1.msra.mxu0 0.0
    %2462 = vmatprep.subr.mxu0 0.0
    %2463 = vmatpush1.msra.mxu0 0.0
    %2464 = vmatprep.subr.mxu0 0.0
    %2465 = vmatpush1.msra.mxu0 0.0
    %2466 = vmatprep.subr.mxu0 0.0
    %2467 = vmatpush1.msra.mxu0 0.0
    %2468 = vmatprep.subr.mxu0 0.0
    %2469 = vmatpush1.msra.mxu0 0.0
    %2470 = vmatprep.subr.mxu0 0.0
    %2471 = vmatpush1.msra.mxu0 0.0
    %2472 = vmatprep.subr.mxu0 0.0
    %2473 = vmatpush1.msra.mxu0 0.0
    %2474 = vmatprep.subr.mxu0 0.0
    %2475 = vmatpush1.msra.mxu0 0.0
    %2476 = vmatprep.subr.mxu0 0.0
    %2477 = vmatpush1.msra.mxu0 0.0
    %2478 = vmatprep.subr.mxu0 0.0
    %2479 = vmatpush1.msra.mxu0 0.0
    %2480 = vmatprep.subr.mxu0 0.0
    %2481 = vmatpush1.msra.mxu0 0.0
    %2482 = vmatprep.subr.mxu0 0.0
    %2483 = vmatpush1.msra.mxu0 0.0
    %2484 = vmatprep.subr.mxu0 0.0
    %2485 = vmatpush1.msra.mxu0 0.0
    %2486 = vmatprep.subr.mxu0 0.0
    %2487 = vmatpush1.msra.mxu0 0.0
    %2488 = vmatprep.subr.mxu0 0.0
    %2489 = vmatpush1.msra.mxu0 0.0
    %2490 = vmatprep.subr.mxu0 0.0
    %2491 = vmatpush1.msra.mxu0 0.0
    %2492 = vmatprep.subr.mxu0 0.0
    %2493 = vmatpush1.msra.mxu0 0.0
    %2494 = vmatprep.subr.mxu0 0.0
    %2495 = vmatpush1.msra.mxu0 0.0
    %2496 = vmatprep.subr.mxu0 0.0
    %2497 = vmatpush1.msra.mxu0 0.0
    %2498 = vmatprep.subr.mxu0 0.0
    %2499 = vmatpush1.msra.mxu0 0.0
    %2500 = vmatprep.subr.mxu0 0.0
    %2501 = vmatpush1.msra.mxu0 0.0
    %2502 = vmatprep.subr.mxu0 0.0
    %2503 = vmatpush1.msra.mxu0 0.0
    %2504 = vmatprep.subr.mxu0 0.0
    %2505 = vmatpush1.msra.mxu0 0.0
    %2506 = vmatprep.subr.mxu0 0.0
    %2507 = vmatpush1.msra.mxu0 0.0
    %2508 = vmatprep.subr.mxu0 0.0
    %2509 = vmatpush1.msra.mxu0 0.0
    %2510 = vmatprep.subr.mxu0 0.0
    %2511 = vmatpush1.msra.mxu0 0.0
    %2512 = vmatprep.subr.mxu0 0.0
    %2513 = vmatpush1.msra.mxu0 0.0
    %2514 = vmatprep.mubr.f32.mxu0 0.0
    %2515 = vmatmul.mubr.f32.gmra.mrb[0].mxu0 %v2147
    %v2516 = vpop.f32.mrb[0].mxu0
    %v2517 = vadd.f32 %v2447, %v2516
    %v2518 = vpop.f32.mrb[0].mxu0
    %2519 = vdwg.mxu0
    %v2520 = vld [vmem:[%s83] sm:$0xff]
    %2521 = vmatprep.subr.mxu0 0.0
    %2522 = vmatpush1.msra.mxu0 %v2520
    %2523 = vmatprep.subr.mxu0 0.0
    %2524 = vmatpush1.msra.mxu0 0.0
    %2525 = vmatprep.subr.mxu0 0.0
    %2526 = vmatpush1.msra.mxu0 0.0
    %2527 = vmatprep.subr.mxu0 0.0
    %2528 = vmatpush1.msra.mxu0 0.0
    %2529 = vmatprep.subr.mxu0 0.0
    %2530 = vmatpush1.msra.mxu0 0.0
    %2531 = vmatprep.subr.mxu0 0.0
    %2532 = vmatpush1.msra.mxu0 0.0
    %2533 = vmatprep.subr.mxu0 0.0
    %2534 = vmatpush1.msra.mxu0 0.0
    %2535 = vmatprep.subr.mxu0 0.0
    %2536 = vmatpush1.msra.mxu0 0.0
    %2537 = vmatprep.subr.mxu0 0.0
    %2538 = vmatpush1.msra.mxu0 0.0
    %2539 = vmatprep.subr.mxu0 0.0
    %2540 = vmatpush1.msra.mxu0 0.0
    %2541 = vmatprep.subr.mxu0 0.0
    %2542 = vmatpush1.msra.mxu0 0.0
    %2543 = vmatprep.subr.mxu0 0.0
    %2544 = vmatpush1.msra.mxu0 0.0
    %2545 = vmatprep.subr.mxu0 0.0
    %2546 = vmatpush1.msra.mxu0 0.0
    %2547 = vmatprep.subr.mxu0 0.0
    %2548 = vmatpush1.msra.mxu0 0.0
    %2549 = vmatprep.subr.mxu0 0.0
    %2550 = vmatpush1.msra.mxu0 0.0
    %2551 = vmatprep.subr.mxu0 0.0
    %2552 = vmatpush1.msra.mxu0 0.0
    %2553 = vmatprep.subr.mxu0 0.0
    %2554 = vmatpush1.msra.mxu0 0.0
    %2555 = vmatprep.subr.mxu0 0.0
    %2556 = vmatpush1.msra.mxu0 0.0
    %2557 = vmatprep.subr.mxu0 0.0
    %2558 = vmatpush1.msra.mxu0 0.0
    %2559 = vmatprep.subr.mxu0 0.0
    %2560 = vmatpush1.msra.mxu0 0.0
    %2561 = vmatprep.subr.mxu0 0.0
    %2562 = vmatpush1.msra.mxu0 0.0
    %2563 = vmatprep.subr.mxu0 0.0
    %2564 = vmatpush1.msra.mxu0 0.0
    %2565 = vmatprep.subr.mxu0 0.0
    %2566 = vmatpush1.msra.mxu0 0.0
    %2567 = vmatprep.subr.mxu0 0.0
    %2568 = vmatpush1.msra.mxu0 0.0
    %2569 = vmatprep.subr.mxu0 0.0
    %2570 = vmatpush1.msra.mxu0 0.0
    %2571 = vmatprep.subr.mxu0 0.0
    %2572 = vmatpush1.msra.mxu0 0.0
    %2573 = vmatprep.subr.mxu0 0.0
    %2574 = vmatpush1.msra.mxu0 0.0
    %2575 = vmatprep.subr.mxu0 0.0
    %2576 = vmatpush1.msra.mxu0 0.0
    %2577 = vmatprep.subr.mxu0 0.0
    %2578 = vmatpush1.msra.mxu0 0.0
    %2579 = vmatprep.subr.mxu0 0.0
    %2580 = vmatpush1.msra.mxu0 0.0
    %2581 = vmatprep.subr.mxu0 0.0
    %2582 = vmatpush1.msra.mxu0 0.0
    %2583 = vmatprep.subr.mxu0 0.0
    %2584 = vmatpush1.msra.mxu0 0.0
    %2585 = vmatprep.mubr.f32.mxu0 0.0
    %2586 = vmatmul.mubr.f32.gmra.mrb[0].mxu0 %v2221
    %v2587 = vpop.f32.mrb[0].mxu0
    %v2588 = vadd.f32 0.0, %v2587
    %v2589 = vpop.f32.mrb[0].mxu0
    %2590 = vdwg.mxu0
    %v2591 = vadd.f32 %v2517, %v2588
    %v2592 = vld [vmem:[%s85] sm:$0xff]
    %2593 = vmatprep.subr.mxu0 0.0
    %2594 = vmatpush1.msra.mxu0 %v2592
    %2595 = vmatprep.subr.mxu0 0.0
    %2596 = vmatpush1.msra.mxu0 0.0
    %2597 = vmatprep.subr.mxu0 0.0
    %2598 = vmatpush1.msra.mxu0 0.0
    %2599 = vmatprep.subr.mxu0 0.0
    %2600 = vmatpush1.msra.mxu0 0.0
    %2601 = vmatprep.subr.mxu0 0.0
    %2602 = vmatpush1.msra.mxu0 0.0
    %2603 = vmatprep.subr.mxu0 0.0
    %2604 = vmatpush1.msra.mxu0 0.0
    %2605 = vmatprep.subr.mxu0 0.0
    %2606 = vmatpush1.msra.mxu0 0.0
    %2607 = vmatprep.subr.mxu0 0.0
    %2608 = vmatpush1.msra.mxu0 0.0
    %2609 = vmatprep.subr.mxu0 0.0
    %2610 = vmatpush1.msra.mxu0 0.0
    %2611 = vmatprep.subr.mxu0 0.0
    %2612 = vmatpush1.msra.mxu0 0.0
    %2613 = vmatprep.subr.mxu0 0.0
    %2614 = vmatpush1.msra.mxu0 0.0
    %2615 = vmatprep.subr.mxu0 0.0
    %2616 = vmatpush1.msra.mxu0 0.0
    %2617 = vmatprep.subr.mxu0 0.0
    %2618 = vmatpush1.msra.mxu0 0.0
    %2619 = vmatprep.subr.mxu0 0.0
    %2620 = vmatpush1.msra.mxu0 0.0
    %2621 = vmatprep.subr.mxu0 0.0
    %2622 = vmatpush1.msra.mxu0 0.0
    %2623 = vmatprep.subr.mxu0 0.0
    %2624 = vmatpush1.msra.mxu0 0.0
    %2625 = vmatprep.subr.mxu0 0.0
    %2626 = vmatpush1.msra.mxu0 0.0
    %2627 = vmatprep.subr.mxu0 0.0
    %2628 = vmatpush1.msra.mxu0 0.0
    %2629 = vmatprep.subr.mxu0 0.0
    %2630 = vmatpush1.msra.mxu0 0.0
    %2631 = vmatprep.subr.mxu0 0.0
    %2632 = vmatpush1.msra.mxu0 0.0
    %2633 = vmatprep.subr.mxu0 0.0
    %2634 = vmatpush1.msra.mxu0 0.0
    %2635 = vmatprep.subr.mxu0 0.0
    %2636 = vmatpush1.msra.mxu0 0.0
    %2637 = vmatprep.subr.mxu0 0.0
    %2638 = vmatpush1.msra.mxu0 0.0
    %2639 = vmatprep.subr.mxu0 0.0
    %2640 = vmatpush1.msra.mxu0 0.0
    %2641 = vmatprep.subr.mxu0 0.0
    %2642 = vmatpush1.msra.mxu0 0.0
    %2643 = vmatprep.subr.mxu0 0.0
    %2644 = vmatpush1.msra.mxu0 0.0
    %2645 = vmatprep.subr.mxu0 0.0
    %2646 = vmatpush1.msra.mxu0 0.0
    %2647 = vmatprep.subr.mxu0 0.0
    %2648 = vmatpush1.msra.mxu0 0.0
    %2649 = vmatprep.subr.mxu0 0.0
    %2650 = vmatpush1.msra.mxu0 0.0
    %2651 = vmatprep.subr.mxu0 0.0
    %2652 = vmatpush1.msra.mxu0 0.0
    %2653 = vmatprep.subr.mxu0 0.0
    %2654 = vmatpush1.msra.mxu0 0.0
    %2655 = vmatprep.subr.mxu0 0.0
    %2656 = vmatpush1.msra.mxu0 0.0
    %2657 = vmatprep.mubr.f32.mxu0 0.0
    %2658 = vmatmul.mubr.f32.gmra.mrb[0].mxu0 %v2296
    %v2659 = vpop.f32.mrb[0].mxu0
    %v2660 = vadd.f32 0.0, %v2659
    %v2661 = vpop.f32.mrb[0].mxu0
    %2662 = vdwg.mxu0
    %v2663 = vadd.f32 %v2591, %v2660
    %v2664 = vld [vmem:[#allocation5] sm:$0x1]
    %v2666 = vlaneseq
    %v2667 = vshrl.u32 %v2666, 7
    %v2668 = vsub.s32 0, %v2667
    %v2669 = vrot.slane %v2664, %v2668
    %v2671 = vadd.f32 %v2663, %v2669
    %v2672 = vld [vmem:[%s7] sm:$0x3]
    %v2673 = vmul.f32 %v2671, 0.5
    %v2674 = vmul.f32 %v2673, 1.442695
    %v2675 = vpow.pop %v2674
    %v2676 = vmul.f32 %v2672, %v2675
    %v2677 = vadd.f32 %v2376, %v2676
    %vm2678 = vcmask 254976
    %2679 = vst.msk [vmem:[#allocation14] sm:$0x3] %vm2678, %v2376
    %2680 = vst.msk [vmem:[#allocation16] sm:$0x3] %vm2678, %v2671
    %2681 = vst.msk [vmem:[#allocation17] sm:$0x3] %vm2678, %v2677
    %v2682 = vld [vmem:[%s89] sm:$0xff]
    %v2683 = vld [vmem:[%s89 + $0x8] sm:$0xff]
    %v2684 = vld [vmem:[%s89 + $0x10] sm:$0xff]
    %v2685 = vld [vmem:[%s89 + $0x18] sm:$0xff]
    %v2686 = vld [vmem:[#allocation7] sm:$0x1]
    %v2688 = vlaneseq
    %v2689 = vshrl.u32 %v2688, 7
    %v2690 = vsub.s32 0, %v2689
    %v2691 = vrot.slane %v2686, %v2690
    %v2694 = vsel %vm1749, %v2677, 0
    %2696 = vmatprep.subr.mxu0 0.0
    %2697 = vmatpush1.msra.mxu0 %v2682
    %2698 = vmatprep.subr.mxu0 0.0
    %2699 = vmatpush1.msra.mxu0 %v2683
    %2700 = vmatprep.subr.mxu0 0.0
    %2701 = vmatpush1.msra.mxu0 %v2684
    %2702 = vmatprep.subr.mxu0 0.0
    %2703 = vmatpush1.msra.mxu0 %v2685
    %2704 = vmatprep.subr.mxu0 0.0
    %2705 = vmatpush1.msra.mxu0 0.0
    %2706 = vmatprep.subr.mxu0 0.0
    %2707 = vmatpush1.msra.mxu0 0.0
    %2708 = vmatprep.subr.mxu0 0.0
    %2709 = vmatpush1.msra.mxu0 0.0
    %2710 = vmatprep.subr.mxu0 0.0
    %2711 = vmatpush1.msra.mxu0 0.0
    %2712 = vmatprep.subr.mxu0 0.0
    %2713 = vmatpush1.msra.mxu0 0.0
    %2714 = vmatprep.subr.mxu0 0.0
    %2715 = vmatpush1.msra.mxu0 0.0
    %2716 = vmatprep.subr.mxu0 0.0
    %2717 = vmatpush1.msra.mxu0 0.0
    %2718 = vmatprep.subr.mxu0 0.0
    %2719 = vmatpush1.msra.mxu0 0.0
    %2720 = vmatprep.subr.mxu0 0.0
    %2721 = vmatpush1.msra.mxu0 0.0
    %2722 = vmatprep.subr.mxu0 0.0
    %2723 = vmatpush1.msra.mxu0 0.0
    %2724 = vmatprep.subr.mxu0 0.0
    %2725 = vmatpush1.msra.mxu0 0.0
    %2726 = vmatprep.subr.mxu0 0.0
    %2727 = vmatpush1.msra.mxu0 0.0
    %2728 = vmatprep.subr.mxu0 0.0
    %2729 = vmatpush1.msra.mxu0 0.0
    %2730 = vmatprep.subr.mxu0 0.0
    %2731 = vmatpush1.msra.mxu0 0.0
    %2732 = vmatprep.subr.mxu0 0.0
    %2733 = vmatpush1.msra.mxu0 0.0
    %2734 = vmatprep.subr.mxu0 0.0
    %2735 = vmatpush1.msra.mxu0 0.0
    %2736 = vmatprep.subr.mxu0 0.0
    %2737 = vmatpush1.msra.mxu0 0.0
    %2738 = vmatprep.subr.mxu0 0.0
    %2739 = vmatpush1.msra.mxu0 0.0
    %2740 = vmatprep.subr.mxu0 0.0
    %2741 = vmatpush1.msra.mxu0 0.0
    %2742 = vmatprep.subr.mxu0 0.0
    %2743 = vmatpush1.msra.mxu0 0.0
    %2744 = vmatprep.subr.mxu0 0.0
    %2745 = vmatpush1.msra.mxu0 0.0
    %2746 = vmatprep.subr.mxu0 0.0
    %2747 = vmatpush1.msra.mxu0 0.0
    %2748 = vmatprep.subr.mxu0 0.0
    %2749 = vmatpush1.msra.mxu0 0.0
    %2750 = vmatprep.subr.mxu0 0.0
    %2751 = vmatpush1.msra.mxu0 0.0
    %2752 = vmatprep.subr.mxu0 0.0
    %2753 = vmatpush1.msra.mxu0 0.0
    %2754 = vmatprep.subr.mxu0 0.0
    %2755 = vmatpush1.msra.mxu0 0.0
    %2756 = vmatprep.subr.mxu0 0.0
    %2757 = vmatpush1.msra.mxu0 0.0
    %2758 = vmatprep.subr.mxu0 0.0
    %2759 = vmatpush1.msra.mxu0 0.0
    %2760 = vmatprep.mubr.f32.mxu0 0.0
    %2761 = vmatmul.mubr.f32.gmra.mrb[0].mxu0 %v2694
    %v2762 = vpop.f32.mrb[0].mxu0
    %v2763 = vadd.f32 %v2691, %v2762
    %v2764 = vpop.f32.mrb[0].mxu0
    %2765 = vdwg.mxu0
    %v2766 = vmax.f32 %v2763, 0.0
    %v2767 = vld [vmem:[%s93] sm:$0xff]
    %v2768 = vld [vmem:[%s93 + $0x8] sm:$0xff]
    %v2769 = vld [vmem:[%s93 + $0x10] sm:$0xff]
    %v2770 = vld [vmem:[%s93 + $0x18] sm:$0xff]
    %v2771 = vld [vmem:[%s93 + $0x20] sm:$0xff]
    %v2772 = vld [vmem:[%s93 + $0x28] sm:$0xff]
    %v2773 = vld [vmem:[%s93 + $0x30] sm:$0xff]
    %v2774 = vld [vmem:[%s93 + $0x38] sm:$0xff]
    %v2775 = vld [vmem:[%s93 + $0x40] sm:$0xff]
    %v2776 = vld [vmem:[%s93 + $0x48] sm:$0xff]
    %v2777 = vld [vmem:[%s93 + $0x50] sm:$0xff]
    %v2778 = vld [vmem:[%s93 + $0x58] sm:$0xff]
    %v2779 = vld [vmem:[%s93 + $0x60] sm:$0xff]
    %v2780 = vld [vmem:[%s93 + $0x68] sm:$0xff]
    %v2781 = vld [vmem:[%s93 + $0x70] sm:$0xff]
    %v2782 = vld [vmem:[%s93 + $0x78] sm:$0xff]
    %v2783 = vld [vmem:[%s93 + $0x80] sm:$0xff]
    %v2784 = vld [vmem:[%s93 + $0x88] sm:$0xff]
    %v2785 = vld [vmem:[%s93 + $0x90] sm:$0xff]
    %v2786 = vld [vmem:[%s93 + $0x98] sm:$0xff]
    %v2787 = vld [vmem:[%s93 + $0xa0] sm:$0xff]
    %v2788 = vld [vmem:[%s93 + $0xa8] sm:$0xff]
    %v2789 = vld [vmem:[%s93 + $0xb0] sm:$0xff]
    %v2790 = vld [vmem:[%s93 + $0xb8] sm:$0xff]
    %v2791 = vld [vmem:[%s93 + $0xc0] sm:$0xff]
    %v2792 = vld [vmem:[%s93 + $0xc8] sm:$0xff]
    %v2793 = vld [vmem:[%s93 + $0xd0] sm:$0xff]
    %v2794 = vld [vmem:[%s93 + $0xd8] sm:$0xff]
    %v2795 = vld [vmem:[%s93 + $0xe0] sm:$0xff]
    %v2796 = vld [vmem:[%s93 + $0xe8] sm:$0xff]
    %v2797 = vld [vmem:[%s93 + $0xf0] sm:$0xff]
    %v2798 = vld [vmem:[%s93 + $0xf8] sm:$0xff]
    %v2799 = vld [vmem:[%s95] sm:$0xf]
    %v2801 = vlaneseq
    %v2802 = vshrl.u32 %v2801, 7
    %v2803 = vsub.s32 0, %v2802
    %v2804 = vrot.slane %v2799, %v2803
    %v2805 = vlaneseq
    %v2806 = vshrl.u32 %v2805, 7
    %v2807 = vsub.s32 1, %v2806
    %v2808 = vrot.slane %v2799, %v2807
    %v2809 = vlaneseq
    %v2810 = vshrl.u32 %v2809, 7
    %v2811 = vsub.s32 2, %v2810
    %v2812 = vrot.slane %v2799, %v2811
    %v2813 = vlaneseq
    %v2814 = vshrl.u32 %v2813, 7
    %v2815 = vsub.s32 3, %v2814
    %v2816 = vrot.slane %v2799, %v2815
    %v2822 = vsel %vm564, %v2766, 0
    %2824 = vmatprep.subr.mxu0 %v2768
    %2825 = vmatpush1.msra.mxu0 %v2767
    %2826 = vmatprep.subr.mxu0 %v2772
    %2827 = vmatpush1.msra.mxu0 %v2771
    %2828 = vmatprep.subr.mxu0 %v2776
    %2829 = vmatpush1.msra.mxu0 %v2775
    %2830 = vmatprep.subr.mxu0 %v2780
    %2831 = vmatpush1.msra.mxu0 %v2779
    %2832 = vmatprep.subr.mxu0 %v2784
    %2833 = vmatpush1.msra.mxu0 %v2783
    %2834 = vmatprep.subr.mxu0 %v2788
    %2835 = vmatpush1.msra.mxu0 %v2787
    %2836 = vmatprep.subr.mxu0 %v2792
    %2837 = vmatpush1.msra.mxu0 %v2791
    %2838 = vmatprep.subr.mxu0 %v2796
    %2839 = vmatpush1.msra.mxu0 %v2795
    %2840 = vmatprep.subr.mxu0 0.0
    %2841 = vmatpush1.msra.mxu0 0.0
    %2842 = vmatprep.subr.mxu0 0.0
    %2843 = vmatpush1.msra.mxu0 0.0
    %2844 = vmatprep.subr.mxu0 0.0
    %2845 = vmatpush1.msra.mxu0 0.0
    %2846 = vmatprep.subr.mxu0 0.0
    %2847 = vmatpush1.msra.mxu0 0.0
    %2848 = vmatprep.subr.mxu0 0.0
    %2849 = vmatpush1.msra.mxu0 0.0
    %2850 = vmatprep.subr.mxu0 0.0
    %2851 = vmatpush1.msra.mxu0 0.0
    %2852 = vmatprep.subr.mxu0 0.0
    %2853 = vmatpush1.msra.mxu0 0.0
    %2854 = vmatprep.subr.mxu0 0.0
    %2855 = vmatpush1.msra.mxu0 0.0
    %2856 = vmatprep.subr.mxu0 0.0
    %2857 = vmatpush1.msra.mxu0 0.0
    %2858 = vmatprep.subr.mxu0 0.0
    %2859 = vmatpush1.msra.mxu0 0.0
    %2860 = vmatprep.subr.mxu0 0.0
    %2861 = vmatpush1.msra.mxu0 0.0
    %2862 = vmatprep.subr.mxu0 0.0
    %2863 = vmatpush1.msra.mxu0 0.0
    %2864 = vmatprep.subr.mxu0 0.0
    %2865 = vmatpush1.msra.mxu0 0.0
    %2866 = vmatprep.subr.mxu0 0.0
    %2867 = vmatpush1.msra.mxu0 0.0
    %2868 = vmatprep.subr.mxu0 0.0
    %2869 = vmatpush1.msra.mxu0 0.0
    %2870 = vmatprep.subr.mxu0 0.0
    %2871 = vmatpush1.msra.mxu0 0.0
    %2872 = vmatprep.subr.mxu0 0.0
    %2873 = vmatpush1.msra.mxu0 0.0
    %2874 = vmatprep.subr.mxu0 0.0
    %2875 = vmatpush1.msra.mxu0 0.0
    %2876 = vmatprep.subr.mxu0 0.0
    %2877 = vmatpush1.msra.mxu0 0.0
    %2878 = vmatprep.subr.mxu0 0.0
    %2879 = vmatpush1.msra.mxu0 0.0
    %2880 = vmatprep.subr.mxu0 0.0
    %2881 = vmatpush1.msra.mxu0 0.0
    %2882 = vmatprep.subr.mxu0 0.0
    %2883 = vmatpush1.msra.mxu0 0.0
    %2884 = vmatprep.subr.mxu0 0.0
    %2885 = vmatpush1.msra.mxu0 0.0
    %2886 = vmatprep.subr.mxu0 0.0
    %2887 = vmatpush1.msra.mxu0 0.0
    %2888 = vmatprep.mubr.f32.mxu0 0.0
    %2889 = vmatmul.mubr.f32.gmra.mrb[0].mxu0 %v2822
    %v2890 = vpop.f32.mrb[0].mxu0
    %v2891 = vadd.f32 %v2804, %v2890
    %v2892 = vpop.f32.mrb[0].mxu0
    %v2893 = vadd.f32 %v2808, %v2892
    %2894 = vdwg.mxu0
    %2895 = vmatprep.subr.mxu0 %v2770
    %2896 = vmatpush1.msra.mxu0 %v2769
    %2897 = vmatprep.subr.mxu0 %v2774
    %2898 = vmatpush1.msra.mxu0 %v2773
    %2899 = vmatprep.subr.mxu0 %v2778
    %2900 = vmatpush1.msra.mxu0 %v2777
    %2901 = vmatprep.subr.mxu0 %v2782
    %2902 = vmatpush1.msra.mxu0 %v2781
    %2903 = vmatprep.subr.mxu0 %v2786
    %2904 = vmatpush1.msra.mxu0 %v2785
    %2905 = vmatprep.subr.mxu0 %v2790
    %2906 = vmatpush1.msra.mxu0 %v2789
    %2907 = vmatprep.subr.mxu0 %v2794
    %2908 = vmatpush1.msra.mxu0 %v2793
    %2909 = vmatprep.subr.mxu0 %v2798
    %2910 = vmatpush1.msra.mxu0 %v2797
    %2911 = vmatprep.subr.mxu0 0.0
    %2912 = vmatpush1.msra.mxu0 0.0
    %2913 = vmatprep.subr.mxu0 0.0
    %2914 = vmatpush1.msra.mxu0 0.0
    %2915 = vmatprep.subr.mxu0 0.0
    %2916 = vmatpush1.msra.mxu0 0.0
    %2917 = vmatprep.subr.mxu0 0.0
    %2918 = vmatpush1.msra.mxu0 0.0
    %2919 = vmatprep.subr.mxu0 0.0
    %2920 = vmatpush1.msra.mxu0 0.0
    %2921 = vmatprep.subr.mxu0 0.0
    %2922 = vmatpush1.msra.mxu0 0.0
    %2923 = vmatprep.subr.mxu0 0.0
    %2924 = vmatpush1.msra.mxu0 0.0
    %2925 = vmatprep.subr.mxu0 0.0
    %2926 = vmatpush1.msra.mxu0 0.0
    %2927 = vmatprep.subr.mxu0 0.0
    %2928 = vmatpush1.msra.mxu0 0.0
    %2929 = vmatprep.subr.mxu0 0.0
    %2930 = vmatpush1.msra.mxu0 0.0
    %2931 = vmatprep.subr.mxu0 0.0
    %2932 = vmatpush1.msra.mxu0 0.0
    %2933 = vmatprep.subr.mxu0 0.0
    %2934 = vmatpush1.msra.mxu0 0.0
    %2935 = vmatprep.subr.mxu0 0.0
    %2936 = vmatpush1.msra.mxu0 0.0
    %2937 = vmatprep.subr.mxu0 0.0
    %2938 = vmatpush1.msra.mxu0 0.0
    %2939 = vmatprep.subr.mxu0 0.0
    %2940 = vmatpush1.msra.mxu0 0.0
    %2941 = vmatprep.subr.mxu0 0.0
    %2942 = vmatpush1.msra.mxu0 0.0
    %2943 = vmatprep.subr.mxu0 0.0
    %2944 = vmatpush1.msra.mxu0 0.0
    %2945 = vmatprep.subr.mxu0 0.0
    %2946 = vmatpush1.msra.mxu0 0.0
    %2947 = vmatprep.subr.mxu0 0.0
    %2948 = vmatpush1.msra.mxu0 0.0
    %2949 = vmatprep.subr.mxu0 0.0
    %2950 = vmatpush1.msra.mxu0 0.0
    %2951 = vmatprep.subr.mxu0 0.0
    %2952 = vmatpush1.msra.mxu0 0.0
    %2953 = vmatprep.subr.mxu0 0.0
    %2954 = vmatpush1.msra.mxu0 0.0
    %2955 = vmatprep.subr.mxu0 0.0
    %2956 = vmatpush1.msra.mxu0 0.0
    %2957 = vmatprep.subr.mxu0 0.0
    %2958 = vmatpush1.msra.mxu0 0.0
    %2959 = vmatprep.mubr.f32.mxu0 0.0
    %2960 = vmatmul.mubr.f32.gmra.mrb[0].mxu0 %v2822
    %v2961 = vpop.f32.mrb[0].mxu0
    %v2962 = vadd.f32 %v2812, %v2961
    %v2963 = vpop.f32.mrb[0].mxu0
    %v2964 = vadd.f32 %v2816, %v2963
    %2965 = vdwg.mxu0
    %v2970 = vcombine.low %v2891, %v2893
    %v2971 = vcombine.low %v2962, %v2964
    %v2973 = vunpack.c.l.s4 1983009808
    %v2974 = vunpack.c.0.s8 %v2973
    %v2975 = vlaneseq
    %v2976 = vshrl.u32 %v2975, 7
    %v2977 = vsub.s32 %v2974, %v2976
    %v2978 = vrot.slane %v2970, %v2977
    %v2980 = vunpack.c.l.s4 1983009808
    %v2981 = vunpack.c.0.s8 %v2980
    %v2982 = vlaneseq
    %v2983 = vshrl.u32 %v2982, 7
    %v2984 = vsub.s32 %v2981, %v2983
    %v2985 = vrot.slane %v2971, %v2984
    %v2986 = vcombine.low %v2978, %v2985
    %2988 = vst [vmem:[%s113] sm:$0xff] %v2986
    %v2989 = vld [vmem:[%s97] sm:$0xff]
    %v2990 = vld [vmem:[%s97 + $0x8] sm:$0xff]
    %v2991 = vld [vmem:[%s97 + $0x10] sm:$0xff]
    %v2992 = vld [vmem:[%s97 + $0x18] sm:$0xff]
    %v2993 = vld [vmem:[#allocation8] sm:$0x1]
    %v2995 = vlaneseq
    %v2996 = vshrl.u32 %v2995, 7
    %v2997 = vsub.s32 0, %v2996
    %v2998 = vrot.slane %v2993, %v2997
    %3000 = vmatprep.subr.mxu0 0.0
    %3001 = vmatpush1.msra.mxu0 %v2989
    %3002 = vmatprep.subr.mxu0 0.0
    %3003 = vmatpush1.msra.mxu0 %v2990
    %3004 = vmatprep.subr.mxu0 0.0
    %3005 = vmatpush1.msra.mxu0 %v2991
    %3006 = vmatprep.subr.mxu0 0.0
    %3007 = vmatpush1.msra.mxu0 %v2992
    %3008 = vmatprep.subr.mxu0 0.0
    %3009 = vmatpush1.msra.mxu0 0.0
    %3010 = vmatprep.subr.mxu0 0.0
    %3011 = vmatpush1.msra.mxu0 0.0
    %3012 = vmatprep.subr.mxu0 0.0
    %3013 = vmatpush1.msra.mxu0 0.0
    %3014 = vmatprep.subr.mxu0 0.0
    %3015 = vmatpush1.msra.mxu0 0.0
    %3016 = vmatprep.subr.mxu0 0.0
    %3017 = vmatpush1.msra.mxu0 0.0
    %3018 = vmatprep.subr.mxu0 0.0
    %3019 = vmatpush1.msra.mxu0 0.0
    %3020 = vmatprep.subr.mxu0 0.0
    %3021 = vmatpush1.msra.mxu0 0.0
    %3022 = vmatprep.subr.mxu0 0.0
    %3023 = vmatpush1.msra.mxu0 0.0
    %3024 = vmatprep.subr.mxu0 0.0
    %3025 = vmatpush1.msra.mxu0 0.0
    %3026 = vmatprep.subr.mxu0 0.0
    %3027 = vmatpush1.msra.mxu0 0.0
    %3028 = vmatprep.subr.mxu0 0.0
    %3029 = vmatpush1.msra.mxu0 0.0
    %3030 = vmatprep.subr.mxu0 0.0
    %3031 = vmatpush1.msra.mxu0 0.0
    %3032 = vmatprep.subr.mxu0 0.0
    %3033 = vmatpush1.msra.mxu0 0.0
    %3034 = vmatprep.subr.mxu0 0.0
    %3035 = vmatpush1.msra.mxu0 0.0
    %3036 = vmatprep.subr.mxu0 0.0
    %3037 = vmatpush1.msra.mxu0 0.0
    %3038 = vmatprep.subr.mxu0 0.0
    %3039 = vmatpush1.msra.mxu0 0.0
    %3040 = vmatprep.subr.mxu0 0.0
    %3041 = vmatpush1.msra.mxu0 0.0
    %3042 = vmatprep.subr.mxu0 0.0
    %3043 = vmatpush1.msra.mxu0 0.0
    %3044 = vmatprep.subr.mxu0 0.0
    %3045 = vmatpush1.msra.mxu0 0.0
    %3046 = vmatprep.subr.mxu0 0.0
    %3047 = vmatpush1.msra.mxu0 0.0
    %3048 = vmatprep.subr.mxu0 0.0
    %3049 = vmatpush1.msra.mxu0 0.0
    %3050 = vmatprep.subr.mxu0 0.0
    %3051 = vmatpush1.msra.mxu0 0.0
    %3052 = vmatprep.subr.mxu0 0.0
    %3053 = vmatpush1.msra.mxu0 0.0
    %3054 = vmatprep.subr.mxu0 0.0
    %3055 = vmatpush1.msra.mxu0 0.0
    %3056 = vmatprep.subr.mxu0 0.0
    %3057 = vmatpush1.msra.mxu0 0.0
    %3058 = vmatprep.subr.mxu0 0.0
    %3059 = vmatpush1.msra.mxu0 0.0
    %3060 = vmatprep.subr.mxu0 0.0
    %3061 = vmatpush1.msra.mxu0 0.0
    %3062 = vmatprep.subr.mxu0 0.0
    %3063 = vmatpush1.msra.mxu0 0.0
    %3064 = vmatprep.mubr.f32.mxu0 0.0
    %3065 = vmatmul.mubr.f32.gmra.mrb[0].mxu0 %v2694
    %v3066 = vpop.f32.mrb[0].mxu0
    %v3067 = vadd.f32 %v2998, %v3066
    %v3068 = vpop.f32.mrb[0].mxu0
    %3069 = vdwg.mxu0
    %v3070 = vmax.f32 %v3067, 0.0
    %v3071 = vld [vmem:[%s101] sm:$0xff]
    %v3072 = vld [vmem:[%s101 + $0x8] sm:$0xff]
    %v3073 = vld [vmem:[%s101 + $0x10] sm:$0xff]
    %v3074 = vld [vmem:[%s101 + $0x18] sm:$0xff]
    %v3075 = vld [vmem:[%s101 + $0x20] sm:$0xff]
    %v3076 = vld [vmem:[%s101 + $0x28] sm:$0xff]
    %v3077 = vld [vmem:[%s101 + $0x30] sm:$0xff]
    %v3078 = vld [vmem:[%s101 + $0x38] sm:$0xff]
    %v3079 = vld [vmem:[%s101 + $0x40] sm:$0xff]
    %v3080 = vld [vmem:[%s101 + $0x48] sm:$0xff]
    %v3081 = vld [vmem:[%s101 + $0x50] sm:$0xff]
    %v3082 = vld [vmem:[%s101 + $0x58] sm:$0xff]
    %v3083 = vld [vmem:[%s101 + $0x60] sm:$0xff]
    %v3084 = vld [vmem:[%s101 + $0x68] sm:$0xff]
    %v3085 = vld [vmem:[%s101 + $0x70] sm:$0xff]
    %v3086 = vld [vmem:[%s101 + $0x78] sm:$0xff]
    %v3087 = vld [vmem:[%s101 + $0x80] sm:$0xff]
    %v3088 = vld [vmem:[%s101 + $0x88] sm:$0xff]
    %v3089 = vld [vmem:[%s101 + $0x90] sm:$0xff]
    %v3090 = vld [vmem:[%s101 + $0x98] sm:$0xff]
    %v3091 = vld [vmem:[%s101 + $0xa0] sm:$0xff]
    %v3092 = vld [vmem:[%s101 + $0xa8] sm:$0xff]
    %v3093 = vld [vmem:[%s101 + $0xb0] sm:$0xff]
    %v3094 = vld [vmem:[%s101 + $0xb8] sm:$0xff]
    %v3095 = vld [vmem:[%s101 + $0xc0] sm:$0xff]
    %v3096 = vld [vmem:[%s101 + $0xc8] sm:$0xff]
    %v3097 = vld [vmem:[%s101 + $0xd0] sm:$0xff]
    %v3098 = vld [vmem:[%s101 + $0xd8] sm:$0xff]
    %v3099 = vld [vmem:[%s101 + $0xe0] sm:$0xff]
    %v3100 = vld [vmem:[%s101 + $0xe8] sm:$0xff]
    %v3101 = vld [vmem:[%s101 + $0xf0] sm:$0xff]
    %v3102 = vld [vmem:[%s101 + $0xf8] sm:$0xff]
    %v3103 = vld [vmem:[%s101 + $0x100] sm:$0xff]
    %v3104 = vld [vmem:[%s101 + $0x108] sm:$0xff]
    %v3105 = vld [vmem:[%s101 + $0x110] sm:$0xff]
    %v3106 = vld [vmem:[%s101 + $0x118] sm:$0xff]
    %v3107 = vld [vmem:[%s101 + $0x120] sm:$0xff]
    %v3108 = vld [vmem:[%s101 + $0x128] sm:$0xff]
    %v3109 = vld [vmem:[%s101 + $0x130] sm:$0xff]
    %v3110 = vld [vmem:[%s101 + $0x138] sm:$0xff]
    %v3111 = vld [vmem:[%s101 + $0x140] sm:$0xff]
    %v3112 = vld [vmem:[%s101 + $0x148] sm:$0xff]
    %v3113 = vld [vmem:[%s101 + $0x150] sm:$0xff]
    %v3114 = vld [vmem:[%s101 + $0x158] sm:$0xff]
    %v3115 = vld [vmem:[%s101 + $0x160] sm:$0xff]
    %v3116 = vld [vmem:[%s101 + $0x168] sm:$0xff]
    %v3117 = vld [vmem:[%s101 + $0x170] sm:$0xff]
    %v3118 = vld [vmem:[%s101 + $0x178] sm:$0xff]
    %v3119 = vld [vmem:[%s103] sm:$0x3f]
    %v3121 = vlaneseq
    %v3122 = vshrl.u32 %v3121, 7
    %v3123 = vsub.s32 0, %v3122
    %v3124 = vrot.slane %v3119, %v3123
    %v3125 = vlaneseq
    %v3126 = vshrl.u32 %v3125, 7
    %v3127 = vsub.s32 1, %v3126
    %v3128 = vrot.slane %v3119, %v3127
    %v3129 = vlaneseq
    %v3130 = vshrl.u32 %v3129, 7
    %v3131 = vsub.s32 2, %v3130
    %v3132 = vrot.slane %v3119, %v3131
    %v3133 = vlaneseq
    %v3134 = vshrl.u32 %v3133, 7
    %v3135 = vsub.s32 3, %v3134
    %v3136 = vrot.slane %v3119, %v3135
    %v3137 = vlaneseq
    %v3138 = vshrl.u32 %v3137, 7
    %v3139 = vsub.s32 4, %v3138
    %v3140 = vrot.slane %v3119, %v3139
    %v3141 = vlaneseq
    %v3142 = vshrl.u32 %v3141, 7
    %v3143 = vsub.s32 5, %v3142
    %v3144 = vrot.slane %v3119, %v3143
    %v3152 = vsel %vm564, %v3070, 0
    %3154 = vmatprep.subr.mxu0 %v3072
    %3155 = vmatpush1.msra.mxu0 %v3071
    %3156 = vmatprep.subr.mxu0 %v3078
    %3157 = vmatpush1.msra.mxu0 %v3077
    %3158 = vmatprep.subr.mxu0 %v3084
    %3159 = vmatpush1.msra.mxu0 %v3083
    %3160 = vmatprep.subr.mxu0 %v3090
    %3161 = vmatpush1.msra.mxu0 %v3089
    %3162 = vmatprep.subr.mxu0 %v3096
    %3163 = vmatpush1.msra.mxu0 %v3095
    %3164 = vmatprep.subr.mxu0 %v3102
    %3165 = vmatpush1.msra.mxu0 %v3101
    %3166 = vmatprep.subr.mxu0 %v3108
    %3167 = vmatpush1.msra.mxu0 %v3107
    %3168 = vmatprep.subr.mxu0 %v3114
    %3169 = vmatpush1.msra.mxu0 %v3113
    %3170 = vmatprep.subr.mxu0 0.0
    %3171 = vmatpush1.msra.mxu0 0.0
    %3172 = vmatprep.subr.mxu0 0.0
    %3173 = vmatpush1.msra.mxu0 0.0
    %3174 = vmatprep.subr.mxu0 0.0
    %3175 = vmatpush1.msra.mxu0 0.0
    %3176 = vmatprep.subr.mxu0 0.0
    %3177 = vmatpush1.msra.mxu0 0.0
    %3178 = vmatprep.subr.mxu0 0.0
    %3179 = vmatpush1.msra.mxu0 0.0
    %3180 = vmatprep.subr.mxu0 0.0
    %3181 = vmatpush1.msra.mxu0 0.0
    %3182 = vmatprep.subr.mxu0 0.0
    %3183 = vmatpush1.msra.mxu0 0.0
    %3184 = vmatprep.subr.mxu0 0.0
    %3185 = vmatpush1.msra.mxu0 0.0
    %3186 = vmatprep.subr.mxu0 0.0
    %3187 = vmatpush1.msra.mxu0 0.0
    %3188 = vmatprep.subr.mxu0 0.0
    %3189 = vmatpush1.msra.mxu0 0.0
    %3190 = vmatprep.subr.mxu0 0.0
    %3191 = vmatpush1.msra.mxu0 0.0
    %3192 = vmatprep.subr.mxu0 0.0
    %3193 = vmatpush1.msra.mxu0 0.0
    %3194 = vmatprep.subr.mxu0 0.0
    %3195 = vmatpush1.msra.mxu0 0.0
    %3196 = vmatprep.subr.mxu0 0.0
    %3197 = vmatpush1.msra.mxu0 0.0
    %3198 = vmatprep.subr.mxu0 0.0
    %3199 = vmatpush1.msra.mxu0 0.0
    %3200 = vmatprep.subr.mxu0 0.0
    %3201 = vmatpush1.msra.mxu0 0.0
    %3202 = vmatprep.subr.mxu0 0.0
    %3203 = vmatpush1.msra.mxu0 0.0
    %3204 = vmatprep.subr.mxu0 0.0
    %3205 = vmatpush1.msra.mxu0 0.0
    %3206 = vmatprep.subr.mxu0 0.0
    %3207 = vmatpush1.msra.mxu0 0.0
    %3208 = vmatprep.subr.mxu0 0.0
    %3209 = vmatpush1.msra.mxu0 0.0
    %3210 = vmatprep.subr.mxu0 0.0
    %3211 = vmatpush1.msra.mxu0 0.0
    %3212 = vmatprep.subr.mxu0 0.0
    %3213 = vmatpush1.msra.mxu0 0.0
    %3214 = vmatprep.subr.mxu0 0.0
    %3215 = vmatpush1.msra.mxu0 0.0
    %3216 = vmatprep.subr.mxu0 0.0
    %3217 = vmatpush1.msra.mxu0 0.0
    %3218 = vmatprep.mubr.f32.mxu0 0.0
    %3219 = vmatmul.mubr.f32.gmra.mrb[0].mxu0 %v3152
    %v3220 = vpop.f32.mrb[0].mxu0
    %v3221 = vadd.f32 %v3124, %v3220
    %v3222 = vpop.f32.mrb[0].mxu0
    %v3223 = vadd.f32 %v3128, %v3222
    %3224 = vdwg.mxu0
    %3225 = vmatprep.subr.mxu0 %v3074
    %3226 = vmatpush1.msra.mxu0 %v3073
    %3227 = vmatprep.subr.mxu0 %v3080
    %3228 = vmatpush1.msra.mxu0 %v3079
    %3229 = vmatprep.subr.mxu0 %v3086
    %3230 = vmatpush1.msra.mxu0 %v3085
    %3231 = vmatprep.subr.mxu0 %v3092
    %3232 = vmatpush1.msra.mxu0 %v3091
    %3233 = vmatprep.subr.mxu0 %v3098
    %3234 = vmatpush1.msra.mxu0 %v3097
    %3235 = vmatprep.subr.mxu0 %v3104
    %3236 = vmatpush1.msra.mxu0 %v3103
    %3237 = vmatprep.subr.mxu0 %v3110
    %3238 = vmatpush1.msra.mxu0 %v3109
    %3239 = vmatprep.subr.mxu0 %v3116
    %3240 = vmatpush1.msra.mxu0 %v3115
    %3241 = vmatprep.subr.mxu0 0.0
    %3242 = vmatpush1.msra.mxu0 0.0
    %3243 = vmatprep.subr.mxu0 0.0
    %3244 = vmatpush1.msra.mxu0 0.0
    %3245 = vmatprep.subr.mxu0 0.0
    %3246 = vmatpush1.msra.mxu0 0.0
    %3247 = vmatprep.subr.mxu0 0.0
    %3248 = vmatpush1.msra.mxu0 0.0
    %3249 = vmatprep.subr.mxu0 0.0
    %3250 = vmatpush1.msra.mxu0 0.0
    %3251 = vmatprep.subr.mxu0 0.0
    %3252 = vmatpush1.msra.mxu0 0.0
    %3253 = vmatprep.subr.mxu0 0.0
    %3254 = vmatpush1.msra.mxu0 0.0
    %3255 = vmatprep.subr.mxu0 0.0
    %3256 = vmatpush1.msra.mxu0 0.0
    %3257 = vmatprep.subr.mxu0 0.0
    %3258 = vmatpush1.msra.mxu0 0.0
    %3259 = vmatprep.subr.mxu0 0.0
    %3260 = vmatpush1.msra.mxu0 0.0
    %3261 = vmatprep.subr.mxu0 0.0
    %3262 = vmatpush1.msra.mxu0 0.0
    %3263 = vmatprep.subr.mxu0 0.0
    %3264 = vmatpush1.msra.mxu0 0.0
    %3265 = vmatprep.subr.mxu0 0.0
    %3266 = vmatpush1.msra.mxu0 0.0
    %3267 = vmatprep.subr.mxu0 0.0
    %3268 = vmatpush1.msra.mxu0 0.0
    %3269 = vmatprep.subr.mxu0 0.0
    %3270 = vmatpush1.msra.mxu0 0.0
    %3271 = vmatprep.subr.mxu0 0.0
    %3272 = vmatpush1.msra.mxu0 0.0
    %3273 = vmatprep.subr.mxu0 0.0
    %3274 = vmatpush1.msra.mxu0 0.0
    %3275 = vmatprep.subr.mxu0 0.0
    %3276 = vmatpush1.msra.mxu0 0.0
    %3277 = vmatprep.subr.mxu0 0.0
    %3278 = vmatpush1.msra.mxu0 0.0
    %3279 = vmatprep.subr.mxu0 0.0
    %3280 = vmatpush1.msra.mxu0 0.0
    %3281 = vmatprep.subr.mxu0 0.0
    %3282 = vmatpush1.msra.mxu0 0.0
    %3283 = vmatprep.subr.mxu0 0.0
    %3284 = vmatpush1.msra.mxu0 0.0
    %3285 = vmatprep.subr.mxu0 0.0
    %3286 = vmatpush1.msra.mxu0 0.0
    %3287 = vmatprep.subr.mxu0 0.0
    %3288 = vmatpush1.msra.mxu0 0.0
    %3289 = vmatprep.mubr.f32.mxu0 0.0
    %3290 = vmatmul.mubr.f32.gmra.mrb[0].mxu0 %v3152
    %v3291 = vpop.f32.mrb[0].mxu0
    %v3292 = vadd.f32 %v3132, %v3291
    %v3293 = vpop.f32.mrb[0].mxu0
    %v3294 = vadd.f32 %v3136, %v3293
    %3295 = vdwg.mxu0
    %3296 = vmatprep.subr.mxu0 %v3076
    %3297 = vmatpush1.msra.mxu0 %v3075
    %3298 = vmatprep.subr.mxu0 %v3082
    %3299 = vmatpush1.msra.mxu0 %v3081
    %3300 = vmatprep.subr.mxu0 %v3088
    %3301 = vmatpush1.msra.mxu0 %v3087
    %3302 = vmatprep.subr.mxu0 %v3094
    %3303 = vmatpush1.msra.mxu0 %v3093
    %3304 = vmatprep.subr.mxu0 %v3100
    %3305 = vmatpush1.msra.mxu0 %v3099
    %3306 = vmatprep.subr.mxu0 %v3106
    %3307 = vmatpush1.msra.mxu0 %v3105
    %3308 = vmatprep.subr.mxu0 %v3112
    %3309 = vmatpush1.msra.mxu0 %v3111
    %3310 = vmatprep.subr.mxu0 %v3118
    %3311 = vmatpush1.msra.mxu0 %v3117
    %3312 = vmatprep.subr.mxu0 0.0
    %3313 = vmatpush1.msra.mxu0 0.0
    %3314 = vmatprep.subr.mxu0 0.0
    %3315 = vmatpush1.msra.mxu0 0.0
    %3316 = vmatprep.subr.mxu0 0.0
    %3317 = vmatpush1.msra.mxu0 0.0
    %3318 = vmatprep.subr.mxu0 0.0
    %3319 = vmatpush1.msra.mxu0 0.0
    %3320 = vmatprep.subr.mxu0 0.0
    %3321 = vmatpush1.msra.mxu0 0.0
    %3322 = vmatprep.subr.mxu0 0.0
    %3323 = vmatpush1.msra.mxu0 0.0
    %3324 = vmatprep.subr.mxu0 0.0
    %3325 = vmatpush1.msra.mxu0 0.0
    %3326 = vmatprep.subr.mxu0 0.0
    %3327 = vmatpush1.msra.mxu0 0.0
    %3328 = vmatprep.subr.mxu0 0.0
    %3329 = vmatpush1.msra.mxu0 0.0
    %3330 = vmatprep.subr.mxu0 0.0
    %3331 = vmatpush1.msra.mxu0 0.0
    %3332 = vmatprep.subr.mxu0 0.0
    %3333 = vmatpush1.msra.mxu0 0.0
    %3334 = vmatprep.subr.mxu0 0.0
    %3335 = vmatpush1.msra.mxu0 0.0
    %3336 = vmatprep.subr.mxu0 0.0
    %3337 = vmatpush1.msra.mxu0 0.0
    %3338 = vmatprep.subr.mxu0 0.0
    %3339 = vmatpush1.msra.mxu0 0.0
    %3340 = vmatprep.subr.mxu0 0.0
    %3341 = vmatpush1.msra.mxu0 0.0
    %3342 = vmatprep.subr.mxu0 0.0
    %3343 = vmatpush1.msra.mxu0 0.0
    %3344 = vmatprep.subr.mxu0 0.0
    %3345 = vmatpush1.msra.mxu0 0.0
    %3346 = vmatprep.subr.mxu0 0.0
    %3347 = vmatpush1.msra.mxu0 0.0
    %3348 = vmatprep.subr.mxu0 0.0
    %3349 = vmatpush1.msra.mxu0 0.0
    %3350 = vmatprep.subr.mxu0 0.0
    %3351 = vmatpush1.msra.mxu0 0.0
    %3352 = vmatprep.subr.mxu0 0.0
    %3353 = vmatpush1.msra.mxu0 0.0
    %3354 = vmatprep.subr.mxu0 0.0
    %3355 = vmatpush1.msra.mxu0 0.0
    %3356 = vmatprep.subr.mxu0 0.0
    %3357 = vmatpush1.msra.mxu0 0.0
    %3358 = vmatprep.subr.mxu0 0.0
    %3359 = vmatpush1.msra.mxu0 0.0
    %3360 = vmatprep.mubr.f32.mxu0 0.0
    %3361 = vmatmul.mubr.f32.gmra.mrb[0].mxu0 %v3152
    %v3362 = vpop.f32.mrb[0].mxu0
    %v3363 = vadd.f32 %v3140, %v3362
    %v3364 = vpop.f32.mrb[0].mxu0
    %v3365 = vadd.f32 %v3144, %v3364
    %3366 = vdwg.mxu0
    %v3373 = vcombine.low %v3221, %v3223
    %v3374 = vcombine.low %v3292, %v3294
    %v3376 = vunpack.c.l.s4 1983009808
    %v3377 = vunpack.c.0.s8 %v3376
    %v3378 = vlaneseq
    %v3379 = vshrl.u32 %v3378, 7
    %v3380 = vsub.s32 %v3377, %v3379
    %v3381 = vrot.slane %v3373, %v3380
    %v3383 = vunpack.c.l.s4 1983009808
    %v3384 = vunpack.c.0.s8 %v3383
    %v3385 = vlaneseq
    %v3386 = vshrl.u32 %v3385, 7
    %v3387 = vsub.s32 %v3384, %v3386
    %v3388 = vrot.slane %v3374, %v3387
    %v3389 = vcombine.low %v3381, %v3388
    %v3390 = vcombine.low %v3363, %v3365
    %v3392 = vunpack.c.l.s4 1983009808
    %v3393 = vunpack.c.0.s8 %v3392
    %v3394 = vlaneseq
    %v3395 = vshrl.u32 %v3394, 7
    %v3396 = vsub.s32 %v3393, %v3395
    %v3397 = vrot.slane %v3390, %v3396
    %3400 = vst [vmem:[%s115] sm:$0xff] %v3389
    %3401 = vst [vmem:[%s115 + $0x8] sm:$0xf] %v3397
    %v3402 = vld [vmem:[%s105] sm:$0xff]
    %v3403 = vld [vmem:[%s105 + $0x8] sm:$0xff]
    %v3404 = vld [vmem:[%s105 + $0x10] sm:$0xff]
    %v3405 = vld [vmem:[%s105 + $0x18] sm:$0xff]
    %v3406 = vld [vmem:[#allocation10] sm:$0x1]
    %v3408 = vlaneseq
    %v3409 = vshrl.u32 %v3408, 7
    %v3410 = vsub.s32 0, %v3409
    %v3411 = vrot.slane %v3406, %v3410
    %3413 = vmatprep.subr.mxu0 0.0
    %3414 = vmatpush1.msra.mxu0 %v3402
    %3415 = vmatprep.subr.mxu0 0.0
    %3416 = vmatpush1.msra.mxu0 %v3403
    %3417 = vmatprep.subr.mxu0 0.0
    %3418 = vmatpush1.msra.mxu0 %v3404
    %3419 = vmatprep.subr.mxu0 0.0
    %3420 = vmatpush1.msra.mxu0 %v3405
    %3421 = vmatprep.subr.mxu0 0.0
    %3422 = vmatpush1.msra.mxu0 0.0
    %3423 = vmatprep.subr.mxu0 0.0
    %3424 = vmatpush1.msra.mxu0 0.0
    %3425 = vmatprep.subr.mxu0 0.0
    %3426 = vmatpush1.msra.mxu0 0.0
    %3427 = vmatprep.subr.mxu0 0.0
    %3428 = vmatpush1.msra.mxu0 0.0
    %3429 = vmatprep.subr.mxu0 0.0
    %3430 = vmatpush1.msra.mxu0 0.0
    %3431 = vmatprep.subr.mxu0 0.0
    %3432 = vmatpush1.msra.mxu0 0.0
    %3433 = vmatprep.subr.mxu0 0.0
    %3434 = vmatpush1.msra.mxu0 0.0
    %3435 = vmatprep.subr.mxu0 0.0
    %3436 = vmatpush1.msra.mxu0 0.0
    %3437 = vmatprep.subr.mxu0 0.0
    %3438 = vmatpush1.msra.mxu0 0.0
    %3439 = vmatprep.subr.mxu0 0.0
    %3440 = vmatpush1.msra.mxu0 0.0
    %3441 = vmatprep.subr.mxu0 0.0
    %3442 = vmatpush1.msra.mxu0 0.0
    %3443 = vmatprep.subr.mxu0 0.0
    %3444 = vmatpush1.msra.mxu0 0.0
    %3445 = vmatprep.subr.mxu0 0.0
    %3446 = vmatpush1.msra.mxu0 0.0
    %3447 = vmatprep.subr.mxu0 0.0
    %3448 = vmatpush1.msra.mxu0 0.0
    %3449 = vmatprep.subr.mxu0 0.0
    %3450 = vmatpush1.msra.mxu0 0.0
    %3451 = vmatprep.subr.mxu0 0.0
    %3452 = vmatpush1.msra.mxu0 0.0
    %3453 = vmatprep.subr.mxu0 0.0
    %3454 = vmatpush1.msra.mxu0 0.0
    %3455 = vmatprep.subr.mxu0 0.0
    %3456 = vmatpush1.msra.mxu0 0.0
    %3457 = vmatprep.subr.mxu0 0.0
    %3458 = vmatpush1.msra.mxu0 0.0
    %3459 = vmatprep.subr.mxu0 0.0
    %3460 = vmatpush1.msra.mxu0 0.0
    %3461 = vmatprep.subr.mxu0 0.0
    %3462 = vmatpush1.msra.mxu0 0.0
    %3463 = vmatprep.subr.mxu0 0.0
    %3464 = vmatpush1.msra.mxu0 0.0
    %3465 = vmatprep.subr.mxu0 0.0
    %3466 = vmatpush1.msra.mxu0 0.0
    %3467 = vmatprep.subr.mxu0 0.0
    %3468 = vmatpush1.msra.mxu0 0.0
    %3469 = vmatprep.subr.mxu0 0.0
    %3470 = vmatpush1.msra.mxu0 0.0
    %3471 = vmatprep.subr.mxu0 0.0
    %3472 = vmatpush1.msra.mxu0 0.0
    %3473 = vmatprep.subr.mxu0 0.0
    %3474 = vmatpush1.msra.mxu0 0.0
    %3475 = vmatprep.subr.mxu0 0.0
    %3476 = vmatpush1.msra.mxu0 0.0
    %3477 = vmatprep.mubr.f32.mxu0 0.0
    %3478 = vmatmul.mubr.f32.gmra.mrb[0].mxu0 %v2694
    %v3479 = vpop.f32.mrb[0].mxu0
    %v3480 = vadd.f32 %v3411, %v3479
    %v3481 = vpop.f32.mrb[0].mxu0
    %3482 = vdwg.mxu0
    %v3483 = vmax.f32 %v3480, 0.0
    %v3484 = vld [vmem:[%s109] sm:$0xff]
    %v3485 = vld [vmem:[%s109 + $0x8] sm:$0xff]
    %v3486 = vld [vmem:[%s109 + $0x10] sm:$0xff]
    %v3487 = vld [vmem:[%s109 + $0x18] sm:$0xff]
    %v3488 = vld [vmem:[%s109 + $0x20] sm:$0xff]
    %v3489 = vld [vmem:[%s109 + $0x28] sm:$0xff]
    %v3490 = vld [vmem:[%s109 + $0x30] sm:$0xff]
    %v3491 = vld [vmem:[%s109 + $0x38] sm:$0xff]
    %v3492 = vld [vmem:[#allocation11] sm:$0x1]
    %v3494 = vlaneseq
    %v3495 = vshrl.u32 %v3494, 7
    %v3496 = vsub.s32 0, %v3495
    %v3497 = vrot.slane %v3492, %v3496
    %v3500 = vsel %vm564, %v3483, 0
    %3502 = vmatprep.subr.mxu0 0.0
    %3503 = vmatpush1.msra.mxu0 %v3484
    %3504 = vmatprep.subr.mxu0 0.0
    %3505 = vmatpush1.msra.mxu0 %v3485
    %3506 = vmatprep.subr.mxu0 0.0
    %3507 = vmatpush1.msra.mxu0 %v3486
    %3508 = vmatprep.subr.mxu0 0.0
    %3509 = vmatpush1.msra.mxu0 %v3487
    %3510 = vmatprep.subr.mxu0 0.0
    %3511 = vmatpush1.msra.mxu0 %v3488
    %3512 = vmatprep.subr.mxu0 0.0
    %3513 = vmatpush1.msra.mxu0 %v3489
    %3514 = vmatprep.subr.mxu0 0.0
    %3515 = vmatpush1.msra.mxu0 %v3490
    %3516 = vmatprep.subr.mxu0 0.0
    %3517 = vmatpush1.msra.mxu0 %v3491
    %3518 = vmatprep.subr.mxu0 0.0
    %3519 = vmatpush1.msra.mxu0 0.0
    %3520 = vmatprep.subr.mxu0 0.0
    %3521 = vmatpush1.msra.mxu0 0.0
    %3522 = vmatprep.subr.mxu0 0.0
    %3523 = vmatpush1.msra.mxu0 0.0
    %3524 = vmatprep.subr.mxu0 0.0
    %3525 = vmatpush1.msra.mxu0 0.0
    %3526 = vmatprep.subr.mxu0 0.0
    %3527 = vmatpush1.msra.mxu0 0.0
    %3528 = vmatprep.subr.mxu0 0.0
    %3529 = vmatpush1.msra.mxu0 0.0
    %3530 = vmatprep.subr.mxu0 0.0
    %3531 = vmatpush1.msra.mxu0 0.0
    %3532 = vmatprep.subr.mxu0 0.0
    %3533 = vmatpush1.msra.mxu0 0.0
    %3534 = vmatprep.subr.mxu0 0.0
    %3535 = vmatpush1.msra.mxu0 0.0
    %3536 = vmatprep.subr.mxu0 0.0
    %3537 = vmatpush1.msra.mxu0 0.0
    %3538 = vmatprep.subr.mxu0 0.0
    %3539 = vmatpush1.msra.mxu0 0.0
    %3540 = vmatprep.subr.mxu0 0.0
    %3541 = vmatpush1.msra.mxu0 0.0
    %3542 = vmatprep.subr.mxu0 0.0
    %3543 = vmatpush1.msra.mxu0 0.0
    %3544 = vmatprep.subr.mxu0 0.0
    %3545 = vmatpush1.msra.mxu0 0.0
    %3546 = vmatprep.subr.mxu0 0.0
    %3547 = vmatpush1.msra.mxu0 0.0
    %3548 = vmatprep.subr.mxu0 0.0
    %3549 = vmatpush1.msra.mxu0 0.0
    %3550 = vmatprep.subr.mxu0 0.0
    %3551 = vmatpush1.msra.mxu0 0.0
    %3552 = vmatprep.subr.mxu0 0.0
    %3553 = vmatpush1.msra.mxu0 0.0
    %3554 = vmatprep.subr.mxu0 0.0
    %3555 = vmatpush1.msra.mxu0 0.0
    %3556 = vmatprep.subr.mxu0 0.0
    %3557 = vmatpush1.msra.mxu0 0.0
    %3558 = vmatprep.subr.mxu0 0.0
    %3559 = vmatpush1.msra.mxu0 0.0
    %3560 = vmatprep.subr.mxu0 0.0
    %3561 = vmatpush1.msra.mxu0 0.0
    %3562 = vmatprep.subr.mxu0 0.0
    %3563 = vmatpush1.msra.mxu0 0.0
    %3564 = vmatprep.subr.mxu0 0.0
    %3565 = vmatpush1.msra.mxu0 0.0
    %3566 = vmatprep.mubr.f32.mxu0 0.0
    %3567 = vmatmul.mubr.f32.gmra.mrb[0].mxu0 %v3500
    %v3568 = vpop.f32.mrb[0].mxu0
    %v3569 = vadd.f32 %v3497, %v3568
    %v3570 = vpop.f32.mrb[0].mxu0
    %3571 = vdwg.mxu0
    %vm3572 = vcmask 123904
    %3573 = vst.msk [vmem:[#allocation13] sm:$0x3] %vm3572, %v3569
    // Predicated region
    $region250: #{multimodal_vae_forward.1} parent=1 // pred_check
      _
    $region251: #{multimodal_vae_forward.1} parent=1 // pred_check_branch
      %3575 = sbr.rel (0) target = $region253
    $region252: #{multimodal_vae_forward.1} parent=1 // pred_region
      _
    $region253: #{multimodal_vae_forward.1} parent=1 // pred_fallthru
      _
    // Predicated region
    $region254: #{multimodal_vae_forward.1} parent=1 // pred_check
      _
    $region255: #{multimodal_vae_forward.1} parent=1 // pred_check_branch
      %3577 = sbr.rel (0) target = $region257
    $region256: #{multimodal_vae_forward.1} parent=1 // pred_region
      _
    $region257: #{multimodal_vae_forward.1} parent=1 // pred_fallthru
      _
    // Predicated region
    $region258: #{multimodal_vae_forward.1} parent=1 // pred_check
      _
    $region259: #{multimodal_vae_forward.1} parent=1 // pred_check_branch
      %3579 = sbr.rel (0) target = $region261
    $region260: #{multimodal_vae_forward.1} parent=1 // pred_region
      %s3581 = ssub.s32 32, 32
      %3582 = vsyncadd [#allocation4], %s3581
      %s3584 = sshll.u32 [#allocation13], 4
      %s3585 = int_to_ptr.vmem [resolvable:$true] %s3584
      %3587 = dma.vmem_to_hbm [thread:$0]  %s3585, 32, %s117, [#allocation4]
    $region261: #{multimodal_vae_forward.1} parent=1 // pred_fallthru
      _
    // Predicated region
    $region262: #{multimodal_vae_forward.1} parent=1 // pred_check
      _
    $region263: #{multimodal_vae_forward.1} parent=1 // pred_check_branch
      %3589 = sbr.rel (0) target = $region265
    $region264: #{multimodal_vae_forward.1} parent=1 // pred_region
      %s3591 = ssub.s32 32, 32
      %3592 = vsyncadd [#allocation15], %s3591
      %s3594 = sshll.u32 [#allocation14], 4
      %s3595 = int_to_ptr.vmem [resolvable:$true] %s3594
      %3597 = dma.vmem_to_hbm [thread:$0]  %s3595, 32, %s119, [#allocation15]
    $region265: #{multimodal_vae_forward.1} parent=1 // pred_fallthru
      _
    // Predicated region
    $region266: #{multimodal_vae_forward.1} parent=1 // pred_check
      _
    $region267: #{multimodal_vae_forward.1} parent=1 // pred_check_branch
      %3599 = sbr.rel (0) target = $region269
    $region268: #{multimodal_vae_forward.1} parent=1 // pred_region
      %s3601 = ssub.s32 32, 32
      %3602 = vsyncadd [#allocation15], %s3601
      %s3604 = sshll.u32 [#allocation16], 4
      %s3605 = int_to_ptr.vmem [resolvable:$true] %s3604
      %3607 = dma.vmem_to_hbm [thread:$0]  %s3605, 32, %s121, [#allocation15]
    $region269: #{multimodal_vae_forward.1} parent=1 // pred_fallthru
      _
    // Predicated region
    $region270: #{multimodal_vae_forward.1} parent=1 // pred_check
      _
    $region271: #{multimodal_vae_forward.1} parent=1 // pred_check_branch
      %3609 = sbr.rel (0) target = $region273
    $region272: #{multimodal_vae_forward.1} parent=1 // pred_region
      %s3611 = ssub.s32 32, 32
      %3612 = vsyncadd [#allocation18], %s3611
      %s3614 = sshll.u32 [#allocation17], 4
      %s3615 = int_to_ptr.vmem [resolvable:$true] %s3614
      %3617 = dma.vmem_to_hbm [thread:$0]  %s3615, 32, %s123, [#allocation18]
    $region273: #{multimodal_vae_forward.1} parent=1 // pred_fallthru
      _
    // Predicated region
    $region274: #{multimodal_vae_forward.1} parent=1 // pred_check
      _
    $region275: #{multimodal_vae_forward.1} parent=1 // pred_check_branch
      %3619 = sbr.rel (0) target = $region277
    $region276: #{multimodal_vae_forward.1} parent=1 // pred_region
      _
    $region277: #{multimodal_vae_forward.1} parent=1 // pred_fallthru
      _
    // Predicated region
    $region278: #{multimodal_vae_forward.1} parent=1 // pred_check
      _
    $region279: #{multimodal_vae_forward.1} parent=1 // pred_check_branch
      %3621 = sbr.rel (0) target = $region281
    $region280: #{multimodal_vae_forward.1} parent=1 // pred_region
      _
    $region281: #{multimodal_vae_forward.1} parent=1 // pred_fallthru
      _
    // Predicated region
    $region282: #{multimodal_vae_forward.1} parent=1 // pred_check
      _
    $region283: #{multimodal_vae_forward.1} parent=1 // pred_check_branch
      %3623 = sbr.rel (0) target = $region285
    $region284: #{multimodal_vae_forward.1} parent=1 // pred_region
      %3624 = dma.done [#allocation4], 32
    $region285: #{multimodal_vae_forward.1} parent=1 // pred_fallthru
      _
    // Predicated region
    $region286: #{multimodal_vae_forward.1} parent=1 // pred_check
      _
    $region287: #{multimodal_vae_forward.1} parent=1 // pred_check_branch
      %3626 = sbr.rel (0) target = $region289
    $region288: #{multimodal_vae_forward.1} parent=1 // pred_region
      %3627 = dma.done [#allocation15], 32
    $region289: #{multimodal_vae_forward.1} parent=1 // pred_fallthru
      _
    // Predicated region
    $region290: #{multimodal_vae_forward.1} parent=1 // pred_check
      _
    $region291: #{multimodal_vae_forward.1} parent=1 // pred_check_branch
      %3629 = sbr.rel (0) target = $region293
    $region292: #{multimodal_vae_forward.1} parent=1 // pred_region
      %3630 = dma.done [#allocation15], 32
    $region293: #{multimodal_vae_forward.1} parent=1 // pred_fallthru
      _
    // Predicated region
    $region294: #{multimodal_vae_forward.1} parent=1 // pred_check
      _
    $region295: #{multimodal_vae_forward.1} parent=1 // pred_check_branch
      %3632 = sbr.rel (0) target = $region297
    $region296: #{multimodal_vae_forward.1} parent=1 // pred_region
      %3633 = dma.done [#allocation18], 32
    $region297: #{multimodal_vae_forward.1} parent=1 // pred_fallthru
      _
    %3634 = vsyncpa [#allocation3], 1
    %3635 = vsyncpa [#allocation6], 1
    %3636 = vsyncpa [#allocation9], 1
    %3637 = vsyncpa [#allocation12], 1
    %3638 = vsyncpa [#allocation4], 1
    %3639 = vsyncpa [#allocation15], 1
    %3640 = vsyncpa [#allocation18], 1

</llo_original>
